<compile_context>
chip_gen: v6e
topology: v6e:2x2x1
jax: 0.10.0
libtpu: 0.0.40
codegen_flags: <defaults>
</compile_context>

<pallas_src>
import math
import jax
import jax.numpy as jnp
from jax import lax
from jax.experimental import pallas as pl
from jax.experimental.pallas import tpu as pltpu

MATMUL_DTYPE = jnp.bfloat16   # MXU operand dtype; accumulation stays f32


# ---------------------------------------------------------------------------
# helpers
# ---------------------------------------------------------------------------
def _round_up(x, m):
    return (x + m - 1) // m * m


def _pick_time_chunk(T, max_steps):
    """Largest divisor of T that is <= max_steps."""
    tc = max(1, min(T, max_steps))
    while T % tc:
        tc -= 1
    return tc


# ---------------------------------------------------------------------------
# Pallas kernels
# ---------------------------------------------------------------------------
def proj1_kernel(x_ref, wf_ref, wb_ref, bf_ref, bb_ref, gf_ref, gb_ref):
    """Input gates for both directions from a single input: one big matmul each."""
    x = x_ref[...].astype(wf_ref.dtype)
    gf_ref[...] = (jnp.dot(x, wf_ref[...], preferred_element_type=jnp.float32)
                   + bf_ref[...])
    gb_ref[...] = (jnp.dot(x, wb_ref[...], preferred_element_type=jnp.float32)
                   + bb_ref[...])


def proj2_kernel(xf_ref, xb_ref, wff_ref, wfb_ref, wbf_ref, wbb_ref,
                 bf_ref, bb_ref, gf_ref, gb_ref):
    """Same, but the layer input is the previous layer's (fwd, bwd) outputs kept as
    two separate arrays (avoids materializing a [T*B, 2H] concat in HBM)."""
    xf = xf_ref[...].astype(wff_ref.dtype)
    xb = xb_ref[...].astype(wff_ref.dtype)
    gf_ref[...] = (jnp.dot(xf, wff_ref[...], preferred_element_type=jnp.float32)
                   + jnp.dot(xb, wfb_ref[...], preferred_element_type=jnp.float32)
                   + bf_ref[...])
    gb_ref[...] = (jnp.dot(xf, wbf_ref[...], preferred_element_type=jnp.float32)
                   + jnp.dot(xb, wbb_ref[...], preferred_element_type=jnp.float32)
                   + bb_ref[...])


def bidir_lstm_kernel(gf_ref, gb_ref, whf_ref, whb_ref, of_ref, ob_ref,
                      hf_sc, cf_sc, hb_sc, cb_sc):
    """Fused bidirectional recurrence over one time chunk.

    gf_ref: [Tc*B, 4H] precomputed input gates, forward chunk c (forward order)
    gb_ref: [Tc*B, 4H] precomputed input gates, backward chunk nc-1-c
    whf/whb: [H, 4H] pre-transposed recurrent weights (bf16)
    of/ob:  [Tc*B, H] hidden outputs (original time order, f32)
    """
    c = pl.program_id(0)

    @pl.when(c == 0)
    def _():
        hf_sc[...] = jnp.zeros_like(hf_sc)
        cf_sc[...] = jnp.zeros_like(cf_sc)
        hb_sc[...] = jnp.zeros_like(hb_sc)
        cb_sc[...] = jnp.zeros_like(cb_sc)

    batch, H = hf_sc.shape
    time_chunk = gf_ref.shape[0] // batch

    # loop-invariant weight loads, hoisted out of the step loop
    whf = whf_ref[...]
    whb = whb_ref[...]

    def cell(gates, c_prev):
        # NOTE: with H < 128 these are sub-lane slices; harmless at this scale,
        # lane-aligned automatically once H is a multiple of 128.
        i_g = jax.nn.sigmoid(gates[:, 0 * H:1 * H])
        f_g = jax.nn.sigmoid(gates[:, 1 * H:2 * H])
        g_g = jnp.tanh(gates[:, 2 * H:3 * H])
        o_g = jax.nn.sigmoid(gates[:, 3 * H:4 * H])
        c_new = f_g * c_prev + i_g * g_g
        h_new = o_g * jnp.tanh(c_new)
        return h_new, c_new

    def step(s, carry):
        # ---- forward direction: position s within the chunk
        rf = pl.multiple_of(s * batch, batch)
        g_f = (gf_ref[pl.ds(rf, batch), :]
               + jnp.dot(hf_sc[...].astype(whf.dtype), whf,
                         preferred_element_type=jnp.float32))
        h_f, c_f = cell(g_f, cf_sc[...])
        hf_sc[...] = h_f
        cf_sc[...] = c_f
        of_ref[pl.ds(rf, batch), :] = h_f.astype(of_ref.dtype)

        # ---- backward direction: position Tc-1-s (original time descending)
        rb = pl.multiple_of((time_chunk - 1 - s) * batch, batch)
        g_b = (gb_ref[pl.ds(rb, batch), :]
               + jnp.dot(hb_sc[...].astype(whb.dtype), whb,
                         preferred_element_type=jnp.float32))
        h_b, c_b = cell(g_b, cb_sc[...])
        hb_sc[...] = h_b
        cb_sc[...] = c_b
        ob_ref[pl.ds(rb, batch), :] = h_b.astype(ob_ref.dtype)
        return carry

    lax.fori_loop(0, time_chunk, step, 0, unroll=True)


def head_kernel(hf_ref, hb_ref, wf_ref, wb_ref, b_ref, o_ref):
    """hidden2sent as a VPU multiply + lane reduce (no MXU for a [2H]->1 matvec)."""
    acc = (jnp.sum(hf_ref[...] * wf_ref[...], axis=-1, keepdims=True)
           + jnp.sum(hb_ref[...] * wb_ref[...], axis=-1, keepdims=True)
           + b_ref[...])
    o_ref[...] = acc


# ---------------------------------------------------------------------------
# Wrappers
# ---------------------------------------------------------------------------
def input_projection(x2, w_f, w_b, b_f, b_b, batch):
    """x2: [T*B, F] time-major rows. Returns (gates_f, gates_b): [T*B, 4H] f32."""
    M, F = x2.shape
    H4 = w_f.shape[1]
    T = M // batch
    tproj = _pick_time_chunk(T, max(1, 1024 // batch))
    tm = tproj * batch
    return pl.pallas_call(
        proj1_kernel,
        out_shape=(jax.ShapeDtypeStruct((M, H4), jnp.float32),
                   jax.ShapeDtypeStruct((M, H4), jnp.float32)),
        grid_spec=pltpu.PrefetchScalarGridSpec(
            num_scalar_prefetch=0,
            grid=(M // tm,),
            in_specs=[
                pl.BlockSpec((tm, F), lambda i: (i, 0)),
                pl.BlockSpec((F, H4), lambda i: (0, 0)),
                pl.BlockSpec((F, H4), lambda i: (0, 0)),
                pl.BlockSpec((1, H4), lambda i: (0, 0)),
                pl.BlockSpec((1, H4), lambda i: (0, 0)),
            ],
            out_specs=[pl.BlockSpec((tm, H4), lambda i: (i, 0)),
                       pl.BlockSpec((tm, H4), lambda i: (i, 0))],
        ),
        compiler_params=pltpu.CompilerParams(
            dimension_semantics=("parallel",)),
    )(x2, w_f, w_b, b_f, b_b)


def input_projection2(xf, xb, w_ff, w_fb, w_bf, w_bb, b_f, b_b, batch):
    """Projection for layers > 0: inputs are the previous layer's fwd/bwd outputs."""
    M, H = xf.shape
    H4 = w_ff.shape[1]
    T = M // batch
    tproj = _pick_time_chunk(T, max(1, 1024 // batch))
    tm = tproj * batch
    return pl.pallas_call(
        proj2_kernel,
        out_shape=(jax.ShapeDtypeStruct((M, H4), jnp.float32),
                   jax.ShapeDtypeStruct((M, H4), jnp.float32)),
        grid_spec=pltpu.PrefetchScalarGridSpec(
            num_scalar_prefetch=0,
            grid=(M // tm,),
            in_specs=[
                pl.BlockSpec((tm, H), lambda i: (i, 0)),
                pl.BlockSpec((tm, H), lambda i: (i, 0)),
                pl.BlockSpec((H, H4), lambda i: (0, 0)),
                pl.BlockSpec((H, H4), lambda i: (0, 0)),
                pl.BlockSpec((H, H4), lambda i: (0, 0)),
                pl.BlockSpec((H, H4), lambda i: (0, 0)),
                pl.BlockSpec((1, H4), lambda i: (0, 0)),
                pl.BlockSpec((1, H4), lambda i: (0, 0)),
            ],
            out_specs=[pl.BlockSpec((tm, H4), lambda i: (i, 0)),
                       pl.BlockSpec((tm, H4), lambda i: (i, 0))],
        ),
        compiler_params=pltpu.CompilerParams(
            dimension_semantics=("parallel",)),
    )(xf, xb, w_ff, w_fb, w_bf, w_bb, b_f, b_b)


def bidir_lstm_layer(gates_f, gates_b, w_hh_f, w_hh_b, batch, max_time_chunk=32):
    """Run the fused bidirectional recurrence.

    gates_f/gates_b: [T*B, 4H] f32 precomputed input gates (time-major rows).
    w_hh_f/w_hh_b:   [H, 4H] pre-transposed recurrent weights (bf16).
    Returns (out_f, out_b): [T*B, H] f32 hidden states in ORIGINAL time order.
    """
    M, H4 = gates_f.shape
    H = H4 // 4
    T = M // batch
    tc = _pick_time_chunk(T, max_time_chunk)
    nc = T // tc
    rows = tc * batch
    return pl.pallas_call(
        bidir_lstm_kernel,
        out_shape=(jax.ShapeDtypeStruct((M, H), jnp.float32),
                   jax.ShapeDtypeStruct((M, H), jnp.float32)),
        grid_spec=pltpu.PrefetchScalarGridSpec(
            num_scalar_prefetch=0,
            grid=(nc,),
            in_specs=[
                pl.BlockSpec((rows, H4), lambda c: (c, 0)),           # fwd gates
                pl.BlockSpec((rows, H4), lambda c: (nc - 1 - c, 0)),  # bwd gates (reversed)
                pl.BlockSpec((H, H4), lambda c: (0, 0)),              # W_hh fwd (invariant)
                pl.BlockSpec((H, H4), lambda c: (0, 0)),              # W_hh bwd (invariant)
            ],
            out_specs=[
                pl.BlockSpec((rows, H), lambda c: (c, 0)),            # fwd outputs
                pl.BlockSpec((rows, H), lambda c: (nc - 1 - c, 0)),   # bwd outputs (reversed)
            ],
            scratch_shapes=[pltpu.VMEM((batch, H), jnp.float32)
                            for _ in range(4)],                       # h_f, c_f, h_b, c_b
        ),
        compiler_params=pltpu.CompilerParams(
            dimension_semantics=("arbitrary",)),                      # sequential recurrence
    )(gates_f, gates_b, w_hh_f, w_hh_b)


def hidden2sent(out_f, out_b, w_f, w_b, b, batch, seq_len):
    """Logits from the last time step: concat(h_f[T-1], h_b[T-1]) @ W^T + b."""
    H = out_f.shape[-1]
    return pl.pallas_call(
        head_kernel,
        out_shape=jax.ShapeDtypeStruct((batch, 1), jnp.float32),
        grid_spec=pltpu.PrefetchScalarGridSpec(
            num_scalar_prefetch=0,
            grid=(1,),
            in_specs=[
                pl.BlockSpec((batch, H), lambda i: (seq_len - 1, 0)),  # h_f at t = T-1
                pl.BlockSpec((batch, H), lambda i: (seq_len - 1, 0)),  # h_b at t = T-1
                pl.BlockSpec((1, H), lambda i: (0, 0)),
                pl.BlockSpec((1, H), lambda i: (0, 0)),
                pl.BlockSpec((1, 1), lambda i: (0, 0)),
            ],
            out_specs=pl.BlockSpec((batch, 1), lambda i: (0, 0)),
        ),
    )(out_f, out_b, w_f, w_b, b)


def lstm_forward(text, params):
    """Equivalent of LSTM.forward(text); text: [B, T, E] (batch_first)."""
    B, T, E = text.shape
    B_pad = _round_up(B, 8)                      # fill the 8 sublanes of a vreg
    if B_pad != B:
        text = jnp.pad(text, ((0, B_pad - B), (0, 0), (0, 0)))
    # time-major, flattened rows: row r = t * B_pad + b
    x2 = jnp.transpose(text, (1, 0, 2)).reshape(T * B_pad, E)

    layer0 = params["lstm"][0]
    gf, gb = input_projection(x2, layer0["w_ih_f"], layer0["w_ih_b"],
                              layer0["b_f"], layer0["b_b"], B_pad)
    out_f, out_b = bidir_lstm_layer(gf, gb, layer0["w_hh_f"], layer0["w_hh_b"],
                                    B_pad)

    for layer_p in params["lstm"][1:]:
        # TODO(synk): nn.LSTM inter-layer dropout skipped (deterministic / eval).
        gf, gb = input_projection2(out_f, out_b,
                                   layer_p["w_ih_ff"], layer_p["w_ih_fb"],
                                   layer_p["w_ih_bf"], layer_p["w_ih_bb"],
                                   layer_p["b_f"], layer_p["b_b"], B_pad)
        out_f, out_b = bidir_lstm_layer(gf, gb, layer_p["w_hh_f"],
                                        layer_p["w_hh_b"], B_pad)

    logits = hidden2sent(out_f, out_b, params["w_out_f"], params["w_out_b"],
                         params["b_out"], B_pad, T)
    return logits[:B]                            # drop batch padding


def lstm_predict(text, params):
    return jax.nn.sigmoid(lstm_forward(text, params))


# ---------------------------------------------------------------------------
# Deterministic parameter init (PyTorch-style uniform(-1/sqrt(H), 1/sqrt(H)))
# Weights are stored pre-transposed ([K, 4H]) in bf16; biases (b_ih + b_hh) in f32.
# ---------------------------------------------------------------------------
def init_params(key, embedding_dim, hidden_dim, n_layers):
    H = hidden_dim
    bound = 1.0 / math.sqrt(H)
    params = {"lstm": []}
    for layer in range(n_layers):
        in_dim = embedding_dim if layer == 0 else 2 * H
        layer_p = {}
        for d in ("f", "b"):                     # d = direction (fwd / bwd)
            key, k1, k2, k3, k4 = jax.random.split(key, 5)
            w_ih = jax.random.uniform(k1, (4 * H, in_dim), jnp.float32, -bound, bound)
            w_hh = jax.random.uniform(k2, (4 * H, H), jnp.float32, -bound, bound)
            b_ih = jax.random.uniform(k3, (4 * H,), jnp.float32, -bound, bound)
            b_hh = jax.random.uniform(k4, (4 * H,), jnp.float32, -bound, bound)
            w_ih_t = w_ih.T.astype(MATMUL_DTYPE)            # [in_dim, 4H]
            if layer == 0:
                layer_p[f"w_ih_{d}"] = w_ih_t
            else:
                layer_p[f"w_ih_{d}f"] = w_ih_t[:H]          # applied to fwd features
                layer_p[f"w_ih_{d}b"] = w_ih_t[H:]          # applied to bwd features
            layer_p[f"w_hh_{d}"] = w_hh.T.astype(MATMUL_DTYPE)   # [H, 4H]
            layer_p[f"b_{d}"] = (b_ih + b_hh).reshape(1, 4 * H)  # f32
        params["lstm"].append(layer_p)
    bound_out = 1.0 / math.sqrt(2 * H)
    key, k1, k2 = jax.random.split(key, 3)
    w_out = jax.random.uniform(k1, (1, 2 * H), jnp.float32, -bound_out, bound_out)
    params["w_out_f"] = w_out[:, :H]
    params["w_out_b"] = w_out[:, H:]
    params["b_out"] = jax.random.uniform(k2, (1, 1), jnp.float32,
                                         -bound_out, bound_out)
    return params


# ---------------------------------------------------------------------------
if __name__ == "__main__":
    B, T, E, H, n_layers = 4, 8, 16, 32, 2

    key = jax.random.PRNGKey(0)
    key, k_x, k_p = jax.random.split(key, 3)
    text = jax.random.normal(k_x, (B, T, E), jnp.float32)   # [batch, seq, emb]
    params = init_params(k_p, E, H, n_layers)

    logits = jax.jit(lstm_forward)(text, params)
    logits = jax.block_until_ready(logits)
    assert logits.shape == (B, 1)
    assert bool(jnp.all(jnp.isfinite(logits)))
    print("KERNEL_OK")
</pallas_src>

<mosaic_0001>
module attributes {stable_mosaic.version = 11 : i64} {
  func.func @proj1_kernel(%arg0: i32, %arg1: memref<64x16xf32, #tpu.memory_space<vmem>>, %arg2: memref<16x128xbf16, #tpu.memory_space<vmem>>, %arg3: memref<16x128xbf16, #tpu.memory_space<vmem>>, %arg4: memref<1x128xf32, #tpu.memory_space<vmem>>, %arg5: memref<1x128xf32, #tpu.memory_space<vmem>>, %arg6: memref<64x128xf32, #tpu.memory_space<vmem>>, %arg7: memref<64x128xf32, #tpu.memory_space<vmem>>) attributes {dimension_semantics = [#tpu.dimension_semantics<parallel>], iteration_bounds = array<i64: 1>, scalar_prefetch = 0 : i64, scratch_operands = 0 : i64, tpu.core_type = #tpu.core_type<tc>, window_params = [{transform_indices = @transform_0, window_bounds = array<i64: 64, 16>}, {pipeline_mode = #tpu.pipeline_mode<synchronous>, transform_indices = @transform_1, window_bounds = array<i64: 16, 128>}, {pipeline_mode = #tpu.pipeline_mode<synchronous>, transform_indices = @transform_2, window_bounds = array<i64: 16, 128>}, {pipeline_mode = #tpu.pipeline_mode<synchronous>, transform_indices = @transform_3, window_bounds = array<i64: 1, 128>}, {pipeline_mode = #tpu.pipeline_mode<synchronous>, transform_indices = @transform_4, window_bounds = array<i64: 1, 128>}, {transform_indices = @transform_5, window_bounds = array<i64: 64, 128>}, {transform_indices = @transform_6, window_bounds = array<i64: 64, 128>}]} {
    %c0 = arith.constant 0 : index
    %c0_0 = arith.constant 0 : index
    %0 = vector.load %arg1[%c0, %c0_0] : memref<64x16xf32, #tpu.memory_space<vmem>>, vector<64x16xf32>
    %1 = arith.truncf %0 : vector<64x16xf32> to vector<64x16xbf16>
    %c0_1 = arith.constant 0 : index
    %c0_2 = arith.constant 0 : index
    %2 = vector.load %arg2[%c0_1, %c0_2] : memref<16x128xbf16, #tpu.memory_space<vmem>>, vector<16x128xbf16>
    %cst = arith.constant dense<0.000000e+00> : vector<64x128xf32>
    %3 = tpu.matmul %1, %2, %cst {dimension_numbers = #tpu.dot_dimension_numbers<[1], [0], [0], [1], [0, 0, 1, 1], [], []>} : vector<64x16xbf16>, vector<16x128xbf16>, vector<64x128xf32> -> vector<64x128xf32>
    %c0_3 = arith.constant 0 : index
    %c0_4 = arith.constant 0 : index
    %4 = vector.load %arg4[%c0_3, %c0_4] : memref<1x128xf32, #tpu.memory_space<vmem>>, vector<1x128xf32>
    %5 = vector.broadcast %4 : vector<1x128xf32> to vector<64x128xf32>
    %6 = arith.addf %3, %5 : vector<64x128xf32>
    %c0_5 = arith.constant 0 : index
    %c0_6 = arith.constant 0 : index
    %7 = vector.load %arg6[%c0_5, %c0_6] : memref<64x128xf32, #tpu.memory_space<vmem>>, vector<64x128xf32>
    tpu.vector_store %arg6[%c0_5, %c0_6], %6 {strides = array<i32>} : memref<64x128xf32, #tpu.memory_space<vmem>>, vector<64x128xf32>,
    %c0_7 = arith.constant 0 : index
    %c0_8 = arith.constant 0 : index
    %8 = vector.load %arg3[%c0_7, %c0_8] : memref<16x128xbf16, #tpu.memory_space<vmem>>, vector<16x128xbf16>
    %cst_9 = arith.constant dense<0.000000e+00> : vector<64x128xf32>
    %9 = tpu.matmul %1, %8, %cst_9 {dimension_numbers = #tpu.dot_dimension_numbers<[1], [0], [0], [1], [0, 0, 1, 1], [], []>} : vector<64x16xbf16>, vector<16x128xbf16>, vector<64x128xf32> -> vector<64x128xf32>
    %c0_10 = arith.constant 0 : index
    %c0_11 = arith.constant 0 : index
    %10 = vector.load %arg5[%c0_10, %c0_11] : memref<1x128xf32, #tpu.memory_space<vmem>>, vector<1x128xf32>
    %11 = vector.broadcast %10 : vector<1x128xf32> to vector<64x128xf32>
    %12 = arith.addf %9, %11 : vector<64x128xf32>
    %c0_12 = arith.constant 0 : index
    %c0_13 = arith.constant 0 : index
    %13 = vector.load %arg7[%c0_12, %c0_13] : memref<64x128xf32, #tpu.memory_space<vmem>>, vector<64x128xf32>
    tpu.vector_store %arg7[%c0_12, %c0_13], %12 {strides = array<i32>} : memref<64x128xf32, #tpu.memory_space<vmem>>, vector<64x128xf32>,
    return
  }
  func.func @transform_0(%arg0: i32) -> (i32, i32) {
    %c0_i32 = arith.constant 0 : i32
    %c0_i32_0 = arith.constant 0 : i32
    return %arg0, %c0_i32 : i32, i32
  }
  func.func @transform_1(%arg0: i32) -> (i32, i32) {
    %c0_i32 = arith.constant 0 : i32
    %c0_i32_0 = arith.constant 0 : i32
    %c0_i32_1 = arith.constant 0 : i32
    return %c0_i32, %c0_i32_0 : i32, i32
  }
  func.func @transform_2(%arg0: i32) -> (i32, i32) {
    %c0_i32 = arith.constant 0 : i32
    %c0_i32_0 = arith.constant 0 : i32
    %c0_i32_1 = arith.constant 0 : i32
    return %c0_i32, %c0_i32_0 : i32, i32
  }
  func.func @transform_3(%arg0: i32) -> (i32, i32) {
    %c0_i32 = arith.constant 0 : i32
    %c0_i32_0 = arith.constant 0 : i32
    %c0_i32_1 = arith.constant 0 : i32
    return %c0_i32, %c0_i32_0 : i32, i32
  }
  func.func @transform_4(%arg0: i32) -> (i32, i32) {
    %c0_i32 = arith.constant 0 : i32
    %c0_i32_0 = arith.constant 0 : i32
    %c0_i32_1 = arith.constant 0 : i32
    return %c0_i32, %c0_i32_0 : i32, i32
  }
  func.func @transform_5(%arg0: i32) -> (i32, i32) {
    %c0_i32 = arith.constant 0 : i32
    %c0_i32_0 = arith.constant 0 : i32
    return %arg0, %c0_i32 : i32, i32
  }
  func.func @transform_6(%arg0: i32) -> (i32, i32) {
    %c0_i32 = arith.constant 0 : i32
    %c0_i32_0 = arith.constant 0 : i32
    return %arg0, %c0_i32 : i32, i32
  }
}

module attributes {stable_mosaic.version = 11 : i64} {
  func.func @bidir_lstm_kernel(%arg0: i32, %arg1: memref<64x128xf32, #tpu.memory_space<vmem>>, %arg2: memref<64x128xf32, #tpu.memory_space<vmem>>, %arg3: memref<32x128xbf16, #tpu.memory_space<vmem>>, %arg4: memref<32x128xbf16, #tpu.memory_space<vmem>>, %arg5: memref<64x32xf32, #tpu.memory_space<vmem>>, %arg6: memref<64x32xf32, #tpu.memory_space<vmem>>, %arg7: memref<8x32xf32, #tpu.memory_space<vmem>>, %arg8: memref<8x32xf32, #tpu.memory_space<vmem>>, %arg9: memref<8x32xf32, #tpu.memory_space<vmem>>, %arg10: memref<8x32xf32, #tpu.memory_space<vmem>>) attributes {dimension_semantics = [#tpu.dimension_semantics<arbitrary>], iteration_bounds = array<i64: 1>, scalar_prefetch = 0 : i64, scratch_operands = 4 : i64, tpu.core_type = #tpu.core_type<tc>, window_params = [{transform_indices = @transform_0, window_bounds = array<i64: 64, 128>}, {transform_indices = @transform_1, window_bounds = array<i64: 64, 128>}, {pipeline_mode = #tpu.pipeline_mode<synchronous>, transform_indices = @transform_2, window_bounds = array<i64: 32, 128>}, {pipeline_mode = #tpu.pipeline_mode<synchronous>, transform_indices = @transform_3, window_bounds = array<i64: 32, 128>}, {transform_indices = @transform_4, window_bounds = array<i64: 64, 32>}, {transform_indices = @transform_5, window_bounds = array<i64: 64, 32>}]} {
    %c0_i32 = arith.constant 0 : i32
    %0 = arith.cmpi eq, %arg0, %c0_i32 : i32
    %1 = arith.extui %0 : i1 to i32
    %c0_i32_0 = arith.constant 0 : i32
    %2 = arith.cmpi ne, %1, %c0_i32_0 : i32
    scf.if %2 {
      %cst_252 = arith.constant 0.000000e+00 : f32
      %621 = vector.broadcast %cst_252 : f32 to vector<8x32xf32>
      %c0_253 = arith.constant 0 : index
      %c0_254 = arith.constant 0 : index
      %622 = vector.load %arg7[%c0_253, %c0_254] : memref<8x32xf32, #tpu.memory_space<vmem>>, vector<8x32xf32>
      tpu.vector_store %arg7[%c0_253, %c0_254], %621 {strides = array<i32>} : memref<8x32xf32, #tpu.memory_space<vmem>>, vector<8x32xf32>,
      %cst_255 = arith.constant 0.000000e+00 : f32
      %623 = vector.broadcast %cst_255 : f32 to vector<8x32xf32>
      %c0_256 = arith.constant 0 : index
      %c0_257 = arith.constant 0 : index
      %624 = vector.load %arg8[%c0_256, %c0_257] : memref<8x32xf32, #tpu.memory_space<vmem>>, vector<8x32xf32>
      tpu.vector_store %arg8[%c0_256, %c0_257], %623 {strides = array<i32>} : memref<8x32xf32, #tpu.memory_space<vmem>>, vector<8x32xf32>,
      %cst_258 = arith.constant 0.000000e+00 : f32
      %625 = vector.broadcast %cst_258 : f32 to vector<8x32xf32>
      %c0_259 = arith.constant 0 : index
      %c0_260 = arith.constant 0 : index
      %626 = vector.load %arg9[%c0_259, %c0_260] : memref<8x32xf32, #tpu.memory_space<vmem>>, vector<8x32xf32>
      tpu.vector_store %arg9[%c0_259, %c0_260], %625 {strides = array<i32>} : memref<8x32xf32, #tpu.memory_space<vmem>>, vector<8x32xf32>,
      %cst_261 = arith.constant 0.000000e+00 : f32
      %627 = vector.broadcast %cst_261 : f32 to vector<8x32xf32>
      %c0_262 = arith.constant 0 : index
      %c0_263 = arith.constant 0 : index
      %628 = vector.load %arg10[%c0_262, %c0_263] : memref<8x32xf32, #tpu.memory_space<vmem>>, vector<8x32xf32>
      tpu.vector_store %arg10[%c0_262, %c0_263], %627 {strides = array<i32>} : memref<8x32xf32, #tpu.memory_space<vmem>>, vector<8x32xf32>,
    } else {
    }
    %c0 = arith.constant 0 : index
    %c0_1 = arith.constant 0 : index
    %3 = vector.load %arg3[%c0, %c0_1] : memref<32x128xbf16, #tpu.memory_space<vmem>>, vector<32x128xbf16>
    %c0_2 = arith.constant 0 : index
    %c0_3 = arith.constant 0 : index
    %4 = vector.load %arg4[%c0_2, %c0_3] : memref<32x128xbf16, #tpu.memory_space<vmem>>, vector<32x128xbf16>
    %c0_i32_4 = arith.constant 0 : i32
    %c8_i32 = arith.constant 8 : i32
    %5 = arith.muli %c0_i32_4, %c8_i32 : i32
    %6 = tpu.assume_multiple %5, 8 : i32
    %7 = arith.index_cast %6 : i32 to index
    %c0_5 = arith.constant 0 : index
    %8 = vector.load %arg1[%7, %c0_5] : memref<64x128xf32, #tpu.memory_space<vmem>>, vector<8x128xf32>
    %c0_6 = arith.constant 0 : index
    %c0_7 = arith.constant 0 : index
    %9 = vector.load %arg7[%c0_6, %c0_7] : memref<8x32xf32, #tpu.memory_space<vmem>>, vector<8x32xf32>
    %10 = arith.truncf %9 : vector<8x32xf32> to vector<8x32xbf16>
    %cst = arith.constant dense<0.000000e+00> : vector<8x128xf32>
    %11 = tpu.matmul %10, %3, %cst {dimension_numbers = #tpu.dot_dimension_numbers<[1], [0], [0], [1], [0, 0, 1, 1], [], []>} : vector<8x32xbf16>, vector<32x128xbf16>, vector<8x128xf32> -> vector<8x128xf32>
    %12 = arith.addf %8, %11 : vector<8x128xf32>
    %c0_8 = arith.constant 0 : index
    %c0_9 = arith.constant 0 : index
    %13 = vector.load %arg8[%c0_8, %c0_9] : memref<8x32xf32, #tpu.memory_space<vmem>>, vector<8x32xf32>
    %14 = vector.extract_strided_slice %12 {offsets = [0, 0], sizes = [8, 32], strides = [1, 1]} : vector<8x128xf32> to vector<8x32xf32>
    %15 = arith.negf %14 : vector<8x32xf32>
    %16 = math.exp %15 : vector<8x32xf32>
    %cst_10 = arith.constant 1.000000e+00 : f32
    %17 = vector.broadcast %cst_10 : f32 to vector<8x32xf32>
    %18 = arith.addf %17, %16 : vector<8x32xf32>
    %19 = arith.divf %17, %18 : vector<8x32xf32>
    %20 = vector.extract_strided_slice %12 {offsets = [0, 32], sizes = [8, 32], strides = [1, 1]} : vector<8x128xf32> to vector<8x32xf32>
    %21 = arith.negf %20 : vector<8x32xf32>
    %22 = math.exp %21 : vector<8x32xf32>
    %cst_11 = arith.constant 1.000000e+00 : f32
    %23 = vector.broadcast %cst_11 : f32 to vector<8x32xf32>
    %24 = arith.addf %23, %22 : vector<8x32xf32>
    %25 = arith.divf %23, %24 : vector<8x32xf32>
    %26 = vector.extract_strided_slice %12 {offsets = [0, 64], sizes = [8, 32], strides = [1, 1]} : vector<8x128xf32> to vector<8x32xf32>
    %27 = math.tanh %26 : vector<8x32xf32>
    %28 = vector.extract_strided_slice %12 {offsets = [0, 96], sizes = [8, 32], strides = [1, 1]} : vector<8x128xf32> to vector<8x32xf32>
    %29 = arith.negf %28 : vector<8x32xf32>
    %30 = math.exp %29 : vector<8x32xf32>
    %cst_12 = arith.constant 1.000000e+00 : f32
    %31 = vector.broadcast %cst_12 : f32 to vector<8x32xf32>
    %32 = arith.addf %31, %30 : vector<8x32xf32>
    %33 = arith.divf %31, %32 : vector<8x32xf32>
    %34 = arith.mulf %25, %13 : vector<8x32xf32>
    %35 = arith.mulf %19, %27 : vector<8x32xf32>
    %36 = arith.addf %34, %35 : vector<8x32xf32>
    %37 = math.tanh %36 : vector<8x32xf32>
    %38 = arith.mulf %33, %37 : vector<8x32xf32>
    %c0_13 = arith.constant 0 : index
    %c0_14 = arith.constant 0 : index
    %39 = vector.load %arg7[%c0_13, %c0_14] : memref<8x32xf32, #tpu.memory_space<vmem>>, vector<8x32xf32>
    tpu.vector_store %arg7[%c0_13, %c0_14], %38 {strides = array<i32>} : memref<8x32xf32, #tpu.memory_space<vmem>>, vector<8x32xf32>,
    %c0_15 = arith.constant 0 : index
    %c0_16 = arith.constant 0 : index
    %40 = vector.load %arg8[%c0_15, %c0_16] : memref<8x32xf32, #tpu.memory_space<vmem>>, vector<8x32xf32>
    tpu.vector_store %arg8[%c0_15, %c0_16], %36 {strides = array<i32>} : memref<8x32xf32, #tpu.memory_space<vmem>>, vector<8x32xf32>,
    %41 = arith.index_cast %6 : i32 to index
    %c0_17 = arith.constant 0 : index
    %42 = vector.load %arg5[%41, %c0_17] : memref<64x32xf32, #tpu.memory_space<vmem>>, vector<8x32xf32>
    tpu.vector_store %arg5[%41, %c0_17], %38 {strides = array<i32>} : memref<64x32xf32, #tpu.memory_space<vmem>>, vector<8x32xf32>,
    %c7_i32 = arith.constant 7 : i32
    %43 = arith.subi %c7_i32, %c0_i32_4 : i32
    %c8_i32_18 = arith.constant 8 : i32
    %44 = arith.muli %43, %c8_i32_18 : i32
    %45 = tpu.assume_multiple %44, 8 : i32
    %46 = arith.index_cast %45 : i32 to index
    %c0_19 = arith.constant 0 : index
    %47 = vector.load %arg2[%46, %c0_19] : memref<64x128xf32, #tpu.memory_space<vmem>>, vector<8x128xf32>
    %c0_20 = arith.constant 0 : index
    %c0_21 = arith.constant 0 : index
    %48 = vector.load %arg9[%c0_20, %c0_21] : memref<8x32xf32, #tpu.memory_space<vmem>>, vector<8x32xf32>
    %49 = arith.truncf %48 : vector<8x32xf32> to vector<8x32xbf16>
    %cst_22 = arith.constant dense<0.000000e+00> : vector<8x128xf32>
    %50 = tpu.matmul %49, %4, %cst_22 {dimension_numbers = #tpu.dot_dimension_numbers<[1], [0], [0], [1], [0, 0, 1, 1], [], []>} : vector<8x32xbf16>, vector<32x128xbf16>, vector<8x128xf32> -> vector<8x128xf32>
    %51 = arith.addf %47, %50 : vector<8x128xf32>
    %c0_23 = arith.constant 0 : index
    %c0_24 = arith.constant 0 : index
    %52 = vector.load %arg10[%c0_23, %c0_24] : memref<8x32xf32, #tpu.memory_space<vmem>>, vector<8x32xf32>
    %53 = vector.extract_strided_slice %51 {offsets = [0, 0], sizes = [8, 32], strides = [1, 1]} : vector<8x128xf32> to vector<8x32xf32>
    %54 = arith.negf %53 : vector<8x32xf32>
    %55 = math.exp %54 : vector<8x32xf32>
    %cst_25 = arith.constant 1.000000e+00 : f32
    %56 = vector.broadcast %cst_25 : f32 to vector<8x32xf32>
    %57 = arith.addf %56, %55 : vector<8x32xf32>
    %58 = arith.divf %56, %57 : vector<8x32xf32>
    %59 = vector.extract_strided_slice %51 {offsets = [0, 32], sizes = [8, 32], strides = [1, 1]} : vector<8x128xf32> to vector<8x32xf32>
    %60 = arith.negf %59 : vector<8x32xf32>
    %61 = math.exp %60 : vector<8x32xf32>
    %cst_26 = arith.constant 1.000000e+00 : f32
    %62 = vector.broadcast %cst_26 : f32 to vector<8x32xf32>
    %63 = arith.addf %62, %61 : vector<8x32xf32>
    %64 = arith.divf %62, %63 : vector<8x32xf32>
    %65 = vector.extract_strided_slice %51 {offsets = [0, 64], sizes = [8, 32], strides = [1, 1]} : vector<8x128xf32> to vector<8x32xf32>
    %66 = math.tanh %65 : vector<8x32xf32>
    %67 = vector.extract_strided_slice %51 {offsets = [0, 96], sizes = [8, 32], strides = [1, 1]} : vector<8x128xf32> to vector<8x32xf32>
    %68 = arith.negf %67 : vector<8x32xf32>
    %69 = math.exp %68 : vector<8x32xf32>
    %cst_27 = arith.constant 1.000000e+00 : f32
    %70 = vector.broadcast %cst_27 : f32 to vector<8x32xf32>
    %71 = arith.addf %70, %69 : vector<8x32xf32>
    %72 = arith.divf %70, %71 : vector<8x32xf32>
    %73 = arith.mulf %64, %52 : vector<8x32xf32>
    %74 = arith.mulf %58, %66 : vector<8x32xf32>
    %75 = arith.addf %73, %74 : vector<8x32xf32>
    %76 = math.tanh %75 : vector<8x32xf32>
    %77 = arith.mulf %72, %76 : vector<8x32xf32>
    %c0_28 = arith.constant 0 : index
    %c0_29 = arith.constant 0 : index
    %78 = vector.load %arg9[%c0_28, %c0_29] : memref<8x32xf32, #tpu.memory_space<vmem>>, vector<8x32xf32>
    tpu.vector_store %arg9[%c0_28, %c0_29], %77 {strides = array<i32>} : memref<8x32xf32, #tpu.memory_space<vmem>>, vector<8x32xf32>,
    %c0_30 = arith.constant 0 : index
    %c0_31 = arith.constant 0 : index
    %79 = vector.load %arg10[%c0_30, %c0_31] : memref<8x32xf32, #tpu.memory_space<vmem>>, vector<8x32xf32>
    tpu.vector_store %arg10[%c0_30, %c0_31], %75 {strides = array<i32>} : memref<8x32xf32, #tpu.memory_space<vmem>>, vector<8x32xf32>,
    %80 = arith.index_cast %45 : i32 to index
    %c0_32 = arith.constant 0 : index
    %81 = vector.load %arg6[%80, %c0_32] : memref<64x32xf32, #tpu.memory_space<vmem>>, vector<8x32xf32>
    tpu.vector_store %arg6[%80, %c0_32], %77 {strides = array<i32>} : memref<64x32xf32, #tpu.memory_space<vmem>>, vector<8x32xf32>,
    %c1_i32 = arith.constant 1 : i32
    %c8_i32_33 = arith.constant 8 : i32
    %82 = arith.muli %c1_i32, %c8_i32_33 : i32
    %83 = tpu.assume_multiple %82, 8 : i32
    %84 = arith.index_cast %83 : i32 to index
    %c0_34 = arith.constant 0 : index
    %85 = vector.load %arg1[%84, %c0_34] : memref<64x128xf32, #tpu.memory_space<vmem>>, vector<8x128xf32>
    %c0_35 = arith.constant 0 : index
    %c0_36 = arith.constant 0 : index
    %86 = vector.load %arg7[%c0_35, %c0_36] : memref<8x32xf32, #tpu.memory_space<vmem>>, vector<8x32xf32>
    %87 = arith.truncf %86 : vector<8x32xf32> to vector<8x32xbf16>
    %cst_37 = arith.constant dense<0.000000e+00> : vector<8x128xf32>
    %88 = tpu.matmul %87, %3, %cst_37 {dimension_numbers = #tpu.dot_dimension_numbers<[1], [0], [0], [1], [0, 0, 1, 1], [], []>} : vector<8x32xbf16>, vector<32x128xbf16>, vector<8x128xf32> -> vector<8x128xf32>
    %89 = arith.addf %85, %88 : vector<8x128xf32>
    %c0_38 = arith.constant 0 : index
    %c0_39 = arith.constant 0 : index
    %90 = vector.load %arg8[%c0_38, %c0_39] : memref<8x32xf32, #tpu.memory_space<vmem>>, vector<8x32xf32>
    %91 = vector.extract_strided_slice %89 {offsets = [0, 0], sizes = [8, 32], strides = [1, 1]} : vector<8x128xf32> to vector<8x32xf32>
    %92 = arith.negf %91 : vector<8x32xf32>
    %93 = math.exp %92 : vector<8x32xf32>
    %cst_40 = arith.constant 1.000000e+00 : f32
    %94 = vector.broadcast %cst_40 : f32 to vector<8x32xf32>
    %95 = arith.addf %94, %93 : vector<8x32xf32>
    %96 = arith.divf %94, %95 : vector<8x32xf32>
    %97 = vector.extract_strided_slice %89 {offsets = [0, 32], sizes = [8, 32], strides = [1, 1]} : vector<8x128xf32> to vector<8x32xf32>
    %98 = arith.negf %97 : vector<8x32xf32>
    %99 = math.exp %98 : vector<8x32xf32>
    %cst_41 = arith.constant 1.000000e+00 : f32
    %100 = vector.broadcast %cst_41 : f32 to vector<8x32xf32>
    %101 = arith.addf %100, %99 : vector<8x32xf32>
    %102 = arith.divf %100, %101 : vector<8x32xf32>
    %103 = vector.extract_strided_slice %89 {offsets = [0, 64], sizes = [8, 32], strides = [1, 1]} : vector<8x128xf32> to vector<8x32xf32>
    %104 = math.tanh %103 : vector<8x32xf32>
    %105 = vector.extract_strided_slice %89 {offsets = [0, 96], sizes = [8, 32], strides = [1, 1]} : vector<8x128xf32> to vector<8x32xf32>
    %106 = arith.negf %105 : vector<8x32xf32>
    %107 = math.exp %106 : vector<8x32xf32>
    %cst_42 = arith.constant 1.000000e+00 : f32
    %108 = vector.broadcast %cst_42 : f32 to vector<8x32xf32>
    %109 = arith.addf %108, %107 : vector<8x32xf32>
    %110 = arith.divf %108, %109 : vector<8x32xf32>
    %111 = arith.mulf %102, %90 : vector<8x32xf32>
    %112 = arith.mulf %96, %104 : vector<8x32xf32>
    %113 = arith.addf %111, %112 : vector<8x32xf32>
    %114 = math.tanh %113 : vector<8x32xf32>
    %115 = arith.mulf %110, %114 : vector<8x32xf32>
    %c0_43 = arith.constant 0 : index
    %c0_44 = arith.constant 0 : index
    %116 = vector.load %arg7[%c0_43, %c0_44] : memref<8x32xf32, #tpu.memory_space<vmem>>, vector<8x32xf32>
    tpu.vector_store %arg7[%c0_43, %c0_44], %115 {strides = array<i32>} : memref<8x32xf32, #tpu.memory_space<vmem>>, vector<8x32xf32>,
    %c0_45 = arith.constant 0 : index
    %c0_46 = arith.constant 0 : index
    %117 = vector.load %arg8[%c0_45, %c0_46] : memref<8x32xf32, #tpu.memory_space<vmem>>, vector<8x32xf32>
    tpu.vector_store %arg8[%c0_45, %c0_46], %113 {strides = array<i32>} : memref<8x32xf32, #tpu.memory_space<vmem>>, vector<8x32xf32>,
    %118 = arith.index_cast %83 : i32 to index
    %c0_47 = arith.constant 0 : index
    %119 = vector.load %arg5[%118, %c0_47] : memref<64x32xf32, #tpu.memory_space<vmem>>, vector<8x32xf32>
    tpu.vector_store %arg5[%118, %c0_47], %115 {strides = array<i32>} : memref<64x32xf32, #tpu.memory_space<vmem>>, vector<8x32xf32>,
    %c7_i32_48 = arith.constant 7 : i32
    %120 = arith.subi %c7_i32_48, %c1_i32 : i32
    %c8_i32_49 = arith.constant 8 : i32
    %121 = arith.muli %120, %c8_i32_49 : i32
    %122 = tpu.assume_multiple %121, 8 : i32
    %123 = arith.index_cast %122 : i32 to index
    %c0_50 = arith.constant 0 : index
    %124 = vector.load %arg2[%123, %c0_50] : memref<64x128xf32, #tpu.memory_space<vmem>>, vector<8x128xf32>
    %c0_51 = arith.constant 0 : index
    %c0_52 = arith.constant 0 : index
    %125 = vector.load %arg9[%c0_51, %c0_52] : memref<8x32xf32, #tpu.memory_space<vmem>>, vector<8x32xf32>
    %126 = arith.truncf %125 : vector<8x32xf32> to vector<8x32xbf16>
    %cst_53 = arith.constant dense<0.000000e+00> : vector<8x128xf32>
    %127 = tpu.matmul %126, %4, %cst_53 {dimension_numbers = #tpu.dot_dimension_numbers<[1], [0], [0], [1], [0, 0, 1, 1], [], []>} : vector<8x32xbf16>, vector<32x128xbf16>, vector<8x128xf32> -> vector<8x128xf32>
    %128 = arith.addf %124, %127 : vector<8x128xf32>
    %c0_54 = arith.constant 0 : index
    %c0_55 = arith.constant 0 : index
    %129 = vector.load %arg10[%c0_54, %c0_55] : memref<8x32xf32, #tpu.memory_space<vmem>>, vector<8x32xf32>
    %130 = vector.extract_strided_slice %128 {offsets = [0, 0], sizes = [8, 32], strides = [1, 1]} : vector<8x128xf32> to vector<8x32xf32>
    %131 = arith.negf %130 : vector<8x32xf32>
    %132 = math.exp %131 : vector<8x32xf32>
    %cst_56 = arith.constant 1.000000e+00 : f32
    %133 = vector.broadcast %cst_56 : f32 to vector<8x32xf32>
    %134 = arith.addf %133, %132 : vector<8x32xf32>
    %135 = arith.divf %133, %134 : vector<8x32xf32>
    %136 = vector.extract_strided_slice %128 {offsets = [0, 32], sizes = [8, 32], strides = [1, 1]} : vector<8x128xf32> to vector<8x32xf32>
    %137 = arith.negf %136 : vector<8x32xf32>
    %138 = math.exp %137 : vector<8x32xf32>
    %cst_57 = arith.constant 1.000000e+00 : f32
    %139 = vector.broadcast %cst_57 : f32 to vector<8x32xf32>
    %140 = arith.addf %139, %138 : vector<8x32xf32>
    %141 = arith.divf %139, %140 : vector<8x32xf32>
    %142 = vector.extract_strided_slice %128 {offsets = [0, 64], sizes = [8, 32], strides = [1, 1]} : vector<8x128xf32> to vector<8x32xf32>
    %143 = math.tanh %142 : vector<8x32xf32>
    %144 = vector.extract_strided_slice %128 {offsets = [0, 96], sizes = [8, 32], strides = [1, 1]} : vector<8x128xf32> to vector<8x32xf32>
    %145 = arith.negf %144 : vector<8x32xf32>
    %146 = math.exp %145 : vector<8x32xf32>
    %cst_58 = arith.constant 1.000000e+00 : f32
    %147 = vector.broadcast %cst_58 : f32 to vector<8x32xf32>
    %148 = arith.addf %147, %146 : vector<8x32xf32>
    %149 = arith.divf %147, %148 : vector<8x32xf32>
    %150 = arith.mulf %141, %129 : vector<8x32xf32>
    %151 = arith.mulf %135, %143 : vector<8x32xf32>
    %152 = arith.addf %150, %151 : vector<8x32xf32>
    %153 = math.tanh %152 : vector<8x32xf32>
    %154 = arith.mulf %149, %153 : vector<8x32xf32>
    %c0_59 = arith.constant 0 : index
    %c0_60 = arith.constant 0 : index
    %155 = vector.load %arg9[%c0_59, %c0_60] : memref<8x32xf32, #tpu.memory_space<vmem>>, vector<8x32xf32>
    tpu.vector_store %arg9[%c0_59, %c0_60], %154 {strides = array<i32>} : memref<8x32xf32, #tpu.memory_space<vmem>>, vector<8x32xf32>,
    %c0_61 = arith.constant 0 : index
    %c0_62 = arith.constant 0 : index
    %156 = vector.load %arg10[%c0_61, %c0_62] : memref<8x32xf32, #tpu.memory_space<vmem>>, vector<8x32xf32>
    tpu.vector_store %arg10[%c0_61, %c0_62], %152 {strides = array<i32>} : memref<8x32xf32, #tpu.memory_space<vmem>>, vector<8x32xf32>,
    %157 = arith.index_cast %122 : i32 to index
    %c0_63 = arith.constant 0 : index
    %158 = vector.load %arg6[%157, %c0_63] : memref<64x32xf32, #tpu.memory_space<vmem>>, vector<8x32xf32>
    tpu.vector_store %arg6[%157, %c0_63], %154 {strides = array<i32>} : memref<64x32xf32, #tpu.memory_space<vmem>>, vector<8x32xf32>,
    %c2_i32 = arith.constant 2 : i32
    %c8_i32_64 = arith.constant 8 : i32
    %159 = arith.muli %c2_i32, %c8_i32_64 : i32
    %160 = tpu.assume_multiple %159, 8 : i32
    %161 = arith.index_cast %160 : i32 to index
    %c0_65 = arith.constant 0 : index
    %162 = vector.load %arg1[%161, %c0_65] : memref<64x128xf32, #tpu.memory_space<vmem>>, vector<8x128xf32>
    %c0_66 = arith.constant 0 : index
    %c0_67 = arith.constant 0 : index
    %163 = vector.load %arg7[%c0_66, %c0_67] : memref<8x32xf32, #tpu.memory_space<vmem>>, vector<8x32xf32>
    %164 = arith.truncf %163 : vector<8x32xf32> to vector<8x32xbf16>
    %cst_68 = arith.constant dense<0.000000e+00> : vector<8x128xf32>
    %165 = tpu.matmul %164, %3, %cst_68 {dimension_numbers = #tpu.dot_dimension_numbers<[1], [0], [0], [1], [0, 0, 1, 1], [], []>} : vector<8x32xbf16>, vector<32x128xbf16>, vector<8x128xf32> -> vector<8x128xf32>
    %166 = arith.addf %162, %165 : vector<8x128xf32>
    %c0_69 = arith.constant 0 : index
    %c0_70 = arith.constant 0 : index
    %167 = vector.load %arg8[%c0_69, %c0_70] : memref<8x32xf32, #tpu.memory_space<vmem>>, vector<8x32xf32>
    %168 = vector.extract_strided_slice %166 {offsets = [0, 0], sizes = [8, 32], strides = [1, 1]} : vector<8x128xf32> to vector<8x32xf32>
    %169 = arith.negf %168 : vector<8x32xf32>
    %170 = math.exp %169 : vector<8x32xf32>
    %cst_71 = arith.constant 1.000000e+00 : f32
    %171 = vector.broadcast %cst_71 : f32 to vector<8x32xf32>
    %172 = arith.addf %171, %170 : vector<8x32xf32>
    %173 = arith.divf %171, %172 : vector<8x32xf32>
    %174 = vector.extract_strided_slice %166 {offsets = [0, 32], sizes = [8, 32], strides = [1, 1]} : vector<8x128xf32> to vector<8x32xf32>
    %175 = arith.negf %174 : vector<8x32xf32>
    %176 = math.exp %175 : vector<8x32xf32>
    %cst_72 = arith.constant 1.000000e+00 : f32
    %177 = vector.broadcast %cst_72 : f32 to vector<8x32xf32>
    %178 = arith.addf %177, %176 : vector<8x32xf32>
    %179 = arith.divf %177, %178 : vector<8x32xf32>
    %180 = vector.extract_strided_slice %166 {offsets = [0, 64], sizes = [8, 32], strides = [1, 1]} : vector<8x128xf32> to vector<8x32xf32>
    %181 = math.tanh %180 : vector<8x32xf32>
    %182 = vector.extract_strided_slice %166 {offsets = [0, 96], sizes = [8, 32], strides = [1, 1]} : vector<8x128xf32> to vector<8x32xf32>
    %183 = arith.negf %182 : vector<8x32xf32>
    %184 = math.exp %183 : vector<8x32xf32>
    %cst_73 = arith.constant 1.000000e+00 : f32
    %185 = vector.broadcast %cst_73 : f32 to vector<8x32xf32>
    %186 = arith.addf %185, %184 : vector<8x32xf32>
    %187 = arith.divf %185, %186 : vector<8x32xf32>
    %188 = arith.mulf %179, %167 : vector<8x32xf32>
    %189 = arith.mulf %173, %181 : vector<8x32xf32>
    %190 = arith.addf %188, %189 : vector<8x32xf32>
    %191 = math.tanh %190 : vector<8x32xf32>
    %192 = arith.mulf %187, %191 : vector<8x32xf32>
    %c0_74 = arith.constant 0 : index
    %c0_75 = arith.constant 0 : index
    %193 = vector.load %arg7[%c0_74, %c0_75] : memref<8x32xf32, #tpu.memory_space<vmem>>, vector<8x32xf32>
    tpu.vector_store %arg7[%c0_74, %c0_75], %192 {strides = array<i32>} : memref<8x32xf32, #tpu.memory_space<vmem>>, vector<8x32xf32>,
    %c0_76 = arith.constant 0 : index
    %c0_77 = arith.constant 0 : index
    %194 = vector.load %arg8[%c0_76, %c0_77] : memref<8x32xf32, #tpu.memory_space<vmem>>, vector<8x32xf32>
    tpu.vector_store %arg8[%c0_76, %c0_77], %190 {strides = array<i32>} : memref<8x32xf32, #tpu.memory_space<vmem>>, vector<8x32xf32>,
    %195 = arith.index_cast %160 : i32 to index
    %c0_78 = arith.constant 0 : index
    %196 = vector.load %arg5[%195, %c0_78] : memref<64x32xf32, #tpu.memory_space<vmem>>, vector<8x32xf32>
    tpu.vector_store %arg5[%195, %c0_78], %192 {strides = array<i32>} : memref<64x32xf32, #tpu.memory_space<vmem>>, vector<8x32xf32>,
    %c7_i32_79 = arith.constant 7 : i32
    %197 = arith.subi %c7_i32_79, %c2_i32 : i32
    %c8_i32_80 = arith.constant 8 : i32
    %198 = arith.muli %197, %c8_i32_80 : i32
    %199 = tpu.assume_multiple %198, 8 : i32
    %200 = arith.index_cast %199 : i32 to index
    %c0_81 = arith.constant 0 : index
    %201 = vector.load %arg2[%200, %c0_81] : memref<64x128xf32, #tpu.memory_space<vmem>>, vector<8x128xf32>
    %c0_82 = arith.constant 0 : index
    %c0_83 = arith.constant 0 : index
    %202 = vector.load %arg9[%c0_82, %c0_83] : memref<8x32xf32, #tpu.memory_space<vmem>>, vector<8x32xf32>
    %203 = arith.truncf %202 : vector<8x32xf32> to vector<8x32xbf16>
    %cst_84 = arith.constant dense<0.000000e+00> : vector<8x128xf32>
    %204 = tpu.matmul %203, %4, %cst_84 {dimension_numbers = #tpu.dot_dimension_numbers<[1], [0], [0], [1], [0, 0, 1, 1], [], []>} : vector<8x32xbf16>, vector<32x128xbf16>, vector<8x128xf32> -> vector<8x128xf32>
    %205 = arith.addf %201, %204 : vector<8x128xf32>
    %c0_85 = arith.constant 0 : index
    %c0_86 = arith.constant 0 : index
    %206 = vector.load %arg10[%c0_85, %c0_86] : memref<8x32xf32, #tpu.memory_space<vmem>>, vector<8x32xf32>
    %207 = vector.extract_strided_slice %205 {offsets = [0, 0], sizes = [8, 32], strides = [1, 1]} : vector<8x128xf32> to vector<8x32xf32>
    %208 = arith.negf %207 : vector<8x32xf32>
    %209 = math.exp %208 : vector<8x32xf32>
    %cst_87 = arith.constant 1.000000e+00 : f32
    %210 = vector.broadcast %cst_87 : f32 to vector<8x32xf32>
    %211 = arith.addf %210, %209 : vector<8x32xf32>
    %212 = arith.divf %210, %211 : vector<8x32xf32>
    %213 = vector.extract_strided_slice %205 {offsets = [0, 32], sizes = [8, 32], strides = [1, 1]} : vector<8x128xf32> to vector<8x32xf32>
    %214 = arith.negf %213 : vector<8x32xf32>
    %215 = math.exp %214 : vector<8x32xf32>
    %cst_88 = arith.constant 1.000000e+00 : f32
    %216 = vector.broadcast %cst_88 : f32 to vector<8x32xf32>
    %217 = arith.addf %216, %215 : vector<8x32xf32>
    %218 = arith.divf %216, %217 : vector<8x32xf32>
    %219 = vector.extract_strided_slice %205 {offsets = [0, 64], sizes = [8, 32], strides = [1, 1]} : vector<8x128xf32> to vector<8x32xf32>
    %220 = math.tanh %219 : vector<8x32xf32>
    %221 = vector.extract_strided_slice %205 {offsets = [0, 96], sizes = [8, 32], strides = [1, 1]} : vector<8x128xf32> to vector<8x32xf32>
    %222 = arith.negf %221 : vector<8x32xf32>
    %223 = math.exp %222 : vector<8x32xf32>
    %cst_89 = arith.constant 1.000000e+00 : f32
    %224 = vector.broadcast %cst_89 : f32 to vector<8x32xf32>
    %225 = arith.addf %224, %223 : vector<8x32xf32>
    %226 = arith.divf %224, %225 : vector<8x32xf32>
    %227 = arith.mulf %218, %206 : vector<8x32xf32>
    %228 = arith.mulf %212, %220 : vector<8x32xf32>
    %229 = arith.addf %227, %228 : vector<8x32xf32>
    %230 = math.tanh %229 : vector<8x32xf32>
    %231 = arith.mulf %226, %230 : vector<8x32xf32>
    %c0_90 = arith.constant 0 : index
    %c0_91 = arith.constant 0 : index
    %232 = vector.load %arg9[%c0_90, %c0_91] : memref<8x32xf32, #tpu.memory_space<vmem>>, vector<8x32xf32>
    tpu.vector_store %arg9[%c0_90, %c0_91], %231 {strides = array<i32>} : memref<8x32xf32, #tpu.memory_space<vmem>>, vector<8x32xf32>,
    %c0_92 = arith.constant 0 : index
    %c0_93 = arith.constant 0 : index
    %233 = vector.load %arg10[%c0_92, %c0_93] : memref<8x32xf32, #tpu.memory_space<vmem>>, vector<8x32xf32>
    tpu.vector_store %arg10[%c0_92, %c0_93], %229 {strides = array<i32>} : memref<8x32xf32, #tpu.memory_space<vmem>>, vector<8x32xf32>,
    %234 = arith.index_cast %199 : i32 to index
    %c0_94 = arith.constant 0 : index
    %235 = vector.load %arg6[%234, %c0_94] : memref<64x32xf32, #tpu.memory_space<vmem>>, vector<8x32xf32>
    tpu.vector_store %arg6[%234, %c0_94], %231 {strides = array<i32>} : memref<64x32xf32, #tpu.memory_space<vmem>>, vector<8x32xf32>,
    %c3_i32 = arith.constant 3 : i32
    %c8_i32_95 = arith.constant 8 : i32
    %236 = arith.muli %c3_i32, %c8_i32_95 : i32
    %237 = tpu.assume_multiple %236, 8 : i32
    %238 = arith.index_cast %237 : i32 to index
    %c0_96 = arith.constant 0 : index
    %239 = vector.load %arg1[%238, %c0_96] : memref<64x128xf32, #tpu.memory_space<vmem>>, vector<8x128xf32>
    %c0_97 = arith.constant 0 : index
    %c0_98 = arith.constant 0 : index
    %240 = vector.load %arg7[%c0_97, %c0_98] : memref<8x32xf32, #tpu.memory_space<vmem>>, vector<8x32xf32>
    %241 = arith.truncf %240 : vector<8x32xf32> to vector<8x32xbf16>
    %cst_99 = arith.constant dense<0.000000e+00> : vector<8x128xf32>
    %242 = tpu.matmul %241, %3, %cst_99 {dimension_numbers = #tpu.dot_dimension_numbers<[1], [0], [0], [1], [0, 0, 1, 1], [], []>} : vector<8x32xbf16>, vector<32x128xbf16>, vector<8x128xf32> -> vector<8x128xf32>
    %243 = arith.addf %239, %242 : vector<8x128xf32>
    %c0_100 = arith.constant 0 : index
    %c0_101 = arith.constant 0 : index
    %244 = vector.load %arg8[%c0_100, %c0_101] : memref<8x32xf32, #tpu.memory_space<vmem>>, vector<8x32xf32>
    %245 = vector.extract_strided_slice %243 {offsets = [0, 0], sizes = [8, 32], strides = [1, 1]} : vector<8x128xf32> to vector<8x32xf32>
    %246 = arith.negf %245 : vector<8x32xf32>
    %247 = math.exp %246 : vector<8x32xf32>
    %cst_102 = arith.constant 1.000000e+00 : f32
    %248 = vector.broadcast %cst_102 : f32 to vector<8x32xf32>
    %249 = arith.addf %248, %247 : vector<8x32xf32>
    %250 = arith.divf %248, %249 : vector<8x32xf32>
    %251 = vector.extract_strided_slice %243 {offsets = [0, 32], sizes = [8, 32], strides = [1, 1]} : vector<8x128xf32> to vector<8x32xf32>
    %252 = arith.negf %251 : vector<8x32xf32>
    %253 = math.exp %252 : vector<8x32xf32>
    %cst_103 = arith.constant 1.000000e+00 : f32
    %254 = vector.broadcast %cst_103 : f32 to vector<8x32xf32>
    %255 = arith.addf %254, %253 : vector<8x32xf32>
    %256 = arith.divf %254, %255 : vector<8x32xf32>
    %257 = vector.extract_strided_slice %243 {offsets = [0, 64], sizes = [8, 32], strides = [1, 1]} : vector<8x128xf32> to vector<8x32xf32>
    %258 = math.tanh %257 : vector<8x32xf32>
    %259 = vector.extract_strided_slice %243 {offsets = [0, 96], sizes = [8, 32], strides = [1, 1]} : vector<8x128xf32> to vector<8x32xf32>
    %260 = arith.negf %259 : vector<8x32xf32>
    %261 = math.exp %260 : vector<8x32xf32>
    %cst_104 = arith.constant 1.000000e+00 : f32
    %262 = vector.broadcast %cst_104 : f32 to vector<8x32xf32>
    %263 = arith.addf %262, %261 : vector<8x32xf32>
    %264 = arith.divf %262, %263 : vector<8x32xf32>
    %265 = arith.mulf %256, %244 : vector<8x32xf32>
    %266 = arith.mulf %250, %258 : vector<8x32xf32>
    %267 = arith.addf %265, %266 : vector<8x32xf32>
    %268 = math.tanh %267 : vector<8x32xf32>
    %269 = arith.mulf %264, %268 : vector<8x32xf32>
    %c0_105 = arith.constant 0 : index
    %c0_106 = arith.constant 0 : index
    %270 = vector.load %arg7[%c0_105, %c0_106] : memref<8x32xf32, #tpu.memory_space<vmem>>, vector<8x32xf32>
    tpu.vector_store %arg7[%c0_105, %c0_106], %269 {strides = array<i32>} : memref<8x32xf32, #tpu.memory_space<vmem>>, vector<8x32xf32>,
    %c0_107 = arith.constant 0 : index
    %c0_108 = arith.constant 0 : index
    %271 = vector.load %arg8[%c0_107, %c0_108] : memref<8x32xf32, #tpu.memory_space<vmem>>, vector<8x32xf32>
    tpu.vector_store %arg8[%c0_107, %c0_108], %267 {strides = array<i32>} : memref<8x32xf32, #tpu.memory_space<vmem>>, vector<8x32xf32>,
    %272 = arith.index_cast %237 : i32 to index
    %c0_109 = arith.constant 0 : index
    %273 = vector.load %arg5[%272, %c0_109] : memref<64x32xf32, #tpu.memory_space<vmem>>, vector<8x32xf32>
    tpu.vector_store %arg5[%272, %c0_109], %269 {strides = array<i32>} : memref<64x32xf32, #tpu.memory_space<vmem>>, vector<8x32xf32>,
    %c7_i32_110 = arith.constant 7 : i32
    %274 = arith.subi %c7_i32_110, %c3_i32 : i32
    %c8_i32_111 = arith.constant 8 : i32
    %275 = arith.muli %274, %c8_i32_111 : i32
    %276 = tpu.assume_multiple %275, 8 : i32
    %277 = arith.index_cast %276 : i32 to index
    %c0_112 = arith.constant 0 : index
    %278 = vector.load %arg2[%277, %c0_112] : memref<64x128xf32, #tpu.memory_space<vmem>>, vector<8x128xf32>
    %c0_113 = arith.constant 0 : index
    %c0_114 = arith.constant 0 : index
    %279 = vector.load %arg9[%c0_113, %c0_114] : memref<8x32xf32, #tpu.memory_space<vmem>>, vector<8x32xf32>
    %280 = arith.truncf %279 : vector<8x32xf32> to vector<8x32xbf16>
    %cst_115 = arith.constant dense<0.000000e+00> : vector<8x128xf32>
    %281 = tpu.matmul %280, %4, %cst_115 {dimension_numbers = #tpu.dot_dimension_numbers<[1], [0], [0], [1], [0, 0, 1, 1], [], []>} : vector<8x32xbf16>, vector<32x128xbf16>, vector<8x128xf32> -> vector<8x128xf32>
    %282 = arith.addf %278, %281 : vector<8x128xf32>
    %c0_116 = arith.constant 0 : index
    %c0_117 = arith.constant 0 : index
    %283 = vector.load %arg10[%c0_116, %c0_117] : memref<8x32xf32, #tpu.memory_space<vmem>>, vector<8x32xf32>
    %284 = vector.extract_strided_slice %282 {offsets = [0, 0], sizes = [8, 32], strides = [1, 1]} : vector<8x128xf32> to vector<8x32xf32>
    %285 = arith.negf %284 : vector<8x32xf32>
    %286 = math.exp %285 : vector<8x32xf32>
    %cst_118 = arith.constant 1.000000e+00 : f32
    %287 = vector.broadcast %cst_118 : f32 to vector<8x32xf32>
    %288 = arith.addf %287, %286 : vector<8x32xf32>
    %289 = arith.divf %287, %288 : vector<8x32xf32>
    %290 = vector.extract_strided_slice %282 {offsets = [0, 32], sizes = [8, 32], strides = [1, 1]} : vector<8x128xf32> to vector<8x32xf32>
    %291 = arith.negf %290 : vector<8x32xf32>
    %292 = math.exp %291 : vector<8x32xf32>
    %cst_119 = arith.constant 1.000000e+00 : f32
    %293 = vector.broadcast %cst_119 : f32 to vector<8x32xf32>
    %294 = arith.addf %293, %292 : vector<8x32xf32>
    %295 = arith.divf %293, %294 : vector<8x32xf32>
    %296 = vector.extract_strided_slice %282 {offsets = [0, 64], sizes = [8, 32], strides = [1, 1]} : vector<8x128xf32> to vector<8x32xf32>
    %297 = math.tanh %296 : vector<8x32xf32>
    %298 = vector.extract_strided_slice %282 {offsets = [0, 96], sizes = [8, 32], strides = [1, 1]} : vector<8x128xf32> to vector<8x32xf32>
    %299 = arith.negf %298 : vector<8x32xf32>
    %300 = math.exp %299 : vector<8x32xf32>
    %cst_120 = arith.constant 1.000000e+00 : f32
    %301 = vector.broadcast %cst_120 : f32 to vector<8x32xf32>
    %302 = arith.addf %301, %300 : vector<8x32xf32>
    %303 = arith.divf %301, %302 : vector<8x32xf32>
    %304 = arith.mulf %295, %283 : vector<8x32xf32>
    %305 = arith.mulf %289, %297 : vector<8x32xf32>
    %306 = arith.addf %304, %305 : vector<8x32xf32>
    %307 = math.tanh %306 : vector<8x32xf32>
    %308 = arith.mulf %303, %307 : vector<8x32xf32>
    %c0_121 = arith.constant 0 : index
    %c0_122 = arith.constant 0 : index
    %309 = vector.load %arg9[%c0_121, %c0_122] : memref<8x32xf32, #tpu.memory_space<vmem>>, vector<8x32xf32>
    tpu.vector_store %arg9[%c0_121, %c0_122], %308 {strides = array<i32>} : memref<8x32xf32, #tpu.memory_space<vmem>>, vector<8x32xf32>,
    %c0_123 = arith.constant 0 : index
    %c0_124 = arith.constant 0 : index
    %310 = vector.load %arg10[%c0_123, %c0_124] : memref<8x32xf32, #tpu.memory_space<vmem>>, vector<8x32xf32>
    tpu.vector_store %arg10[%c0_123, %c0_124], %306 {strides = array<i32>} : memref<8x32xf32, #tpu.memory_space<vmem>>, vector<8x32xf32>,
    %311 = arith.index_cast %276 : i32 to index
    %c0_125 = arith.constant 0 : index
    %312 = vector.load %arg6[%311, %c0_125] : memref<64x32xf32, #tpu.memory_space<vmem>>, vector<8x32xf32>
    tpu.vector_store %arg6[%311, %c0_125], %308 {strides = array<i32>} : memref<64x32xf32, #tpu.memory_space<vmem>>, vector<8x32xf32>,
    %c4_i32 = arith.constant 4 : i32
    %c8_i32_126 = arith.constant 8 : i32
    %313 = arith.muli %c4_i32, %c8_i32_126 : i32
    %314 = tpu.assume_multiple %313, 8 : i32
    %315 = arith.index_cast %314 : i32 to index
    %c0_127 = arith.constant 0 : index
    %316 = vector.load %arg1[%315, %c0_127] : memref<64x128xf32, #tpu.memory_space<vmem>>, vector<8x128xf32>
    %c0_128 = arith.constant 0 : index
    %c0_129 = arith.constant 0 : index
    %317 = vector.load %arg7[%c0_128, %c0_129] : memref<8x32xf32, #tpu.memory_space<vmem>>, vector<8x32xf32>
    %318 = arith.truncf %317 : vector<8x32xf32> to vector<8x32xbf16>
    %cst_130 = arith.constant dense<0.000000e+00> : vector<8x128xf32>
    %319 = tpu.matmul %318, %3, %cst_130 {dimension_numbers = #tpu.dot_dimension_numbers<[1], [0], [0], [1], [0, 0, 1, 1], [], []>} : vector<8x32xbf16>, vector<32x128xbf16>, vector<8x128xf32> -> vector<8x128xf32>
    %320 = arith.addf %316, %319 : vector<8x128xf32>
    %c0_131 = arith.constant 0 : index
    %c0_132 = arith.constant 0 : index
    %321 = vector.load %arg8[%c0_131, %c0_132] : memref<8x32xf32, #tpu.memory_space<vmem>>, vector<8x32xf32>
    %322 = vector.extract_strided_slice %320 {offsets = [0, 0], sizes = [8, 32], strides = [1, 1]} : vector<8x128xf32> to vector<8x32xf32>
    %323 = arith.negf %322 : vector<8x32xf32>
    %324 = math.exp %323 : vector<8x32xf32>
    %cst_133 = arith.constant 1.000000e+00 : f32
    %325 = vector.broadcast %cst_133 : f32 to vector<8x32xf32>
    %326 = arith.addf %325, %324 : vector<8x32xf32>
    %327 = arith.divf %325, %326 : vector<8x32xf32>
    %328 = vector.extract_strided_slice %320 {offsets = [0, 32], sizes = [8, 32], strides = [1, 1]} : vector<8x128xf32> to vector<8x32xf32>
    %329 = arith.negf %328 : vector<8x32xf32>
    %330 = math.exp %329 : vector<8x32xf32>
    %cst_134 = arith.constant 1.000000e+00 : f32
    %331 = vector.broadcast %cst_134 : f32 to vector<8x32xf32>
    %332 = arith.addf %331, %330 : vector<8x32xf32>
    %333 = arith.divf %331, %332 : vector<8x32xf32>
    %334 = vector.extract_strided_slice %320 {offsets = [0, 64], sizes = [8, 32], strides = [1, 1]} : vector<8x128xf32> to vector<8x32xf32>
    %335 = math.tanh %334 : vector<8x32xf32>
    %336 = vector.extract_strided_slice %320 {offsets = [0, 96], sizes = [8, 32], strides = [1, 1]} : vector<8x128xf32> to vector<8x32xf32>
    %337 = arith.negf %336 : vector<8x32xf32>
    %338 = math.exp %337 : vector<8x32xf32>
    %cst_135 = arith.constant 1.000000e+00 : f32
    %339 = vector.broadcast %cst_135 : f32 to vector<8x32xf32>
    %340 = arith.addf %339, %338 : vector<8x32xf32>
    %341 = arith.divf %339, %340 : vector<8x32xf32>
    %342 = arith.mulf %333, %321 : vector<8x32xf32>
    %343 = arith.mulf %327, %335 : vector<8x32xf32>
    %344 = arith.addf %342, %343 : vector<8x32xf32>
    %345 = math.tanh %344 : vector<8x32xf32>
    %346 = arith.mulf %341, %345 : vector<8x32xf32>
    %c0_136 = arith.constant 0 : index
    %c0_137 = arith.constant 0 : index
    %347 = vector.load %arg7[%c0_136, %c0_137] : memref<8x32xf32, #tpu.memory_space<vmem>>, vector<8x32xf32>
    tpu.vector_store %arg7[%c0_136, %c0_137], %346 {strides = array<i32>} : memref<8x32xf32, #tpu.memory_space<vmem>>, vector<8x32xf32>,
    %c0_138 = arith.constant 0 : index
    %c0_139 = arith.constant 0 : index
    %348 = vector.load %arg8[%c0_138, %c0_139] : memref<8x32xf32, #tpu.memory_space<vmem>>, vector<8x32xf32>
    tpu.vector_store %arg8[%c0_138, %c0_139], %344 {strides = array<i32>} : memref<8x32xf32, #tpu.memory_space<vmem>>, vector<8x32xf32>,
    %349 = arith.index_cast %314 : i32 to index
    %c0_140 = arith.constant 0 : index
    %350 = vector.load %arg5[%349, %c0_140] : memref<64x32xf32, #tpu.memory_space<vmem>>, vector<8x32xf32>
    tpu.vector_store %arg5[%349, %c0_140], %346 {strides = array<i32>} : memref<64x32xf32, #tpu.memory_space<vmem>>, vector<8x32xf32>,
    %c7_i32_141 = arith.constant 7 : i32
    %351 = arith.subi %c7_i32_141, %c4_i32 : i32
    %c8_i32_142 = arith.constant 8 : i32
    %352 = arith.muli %351, %c8_i32_142 : i32
    %353 = tpu.assume_multiple %352, 8 : i32
    %354 = arith.index_cast %353 : i32 to index
    %c0_143 = arith.constant 0 : index
    %355 = vector.load %arg2[%354, %c0_143] : memref<64x128xf32, #tpu.memory_space<vmem>>, vector<8x128xf32>
    %c0_144 = arith.constant 0 : index
    %c0_145 = arith.constant 0 : index
    %356 = vector.load %arg9[%c0_144, %c0_145] : memref<8x32xf32, #tpu.memory_space<vmem>>, vector<8x32xf32>
    %357 = arith.truncf %356 : vector<8x32xf32> to vector<8x32xbf16>
    %cst_146 = arith.constant dense<0.000000e+00> : vector<8x128xf32>
    %358 = tpu.matmul %357, %4, %cst_146 {dimension_numbers = #tpu.dot_dimension_numbers<[1], [0], [0], [1], [0, 0, 1, 1], [], []>} : vector<8x32xbf16>, vector<32x128xbf16>, vector<8x128xf32> -> vector<8x128xf32>
    %359 = arith.addf %355, %358 : vector<8x128xf32>
    %c0_147 = arith.constant 0 : index
    %c0_148 = arith.constant 0 : index
    %360 = vector.load %arg10[%c0_147, %c0_148] : memref<8x32xf32, #tpu.memory_space<vmem>>, vector<8x32xf32>
    %361 = vector.extract_strided_slice %359 {offsets = [0, 0], sizes = [8, 32], strides = [1, 1]} : vector<8x128xf32> to vector<8x32xf32>
    %362 = arith.negf %361 : vector<8x32xf32>
    %363 = math.exp %362 : vector<8x32xf32>
    %cst_149 = arith.constant 1.000000e+00 : f32
    %364 = vector.broadcast %cst_149 : f32 to vector<8x32xf32>
    %365 = arith.addf %364, %363 : vector<8x32xf32>
    %366 = arith.divf %364, %365 : vector<8x32xf32>
    %367 = vector.extract_strided_slice %359 {offsets = [0, 32], sizes = [8, 32], strides = [1, 1]} : vector<8x128xf32> to vector<8x32xf32>
    %368 = arith.negf %367 : vector<8x32xf32>
    %369 = math.exp %368 : vector<8x32xf32>
    %cst_150 = arith.constant 1.000000e+00 : f32
    %370 = vector.broadcast %cst_150 : f32 to vector<8x32xf32>
    %371 = arith.addf %370, %369 : vector<8x32xf32>
    %372 = arith.divf %370, %371 : vector<8x32xf32>
    %373 = vector.extract_strided_slice %359 {offsets = [0, 64], sizes = [8, 32], strides = [1, 1]} : vector<8x128xf32> to vector<8x32xf32>
    %374 = math.tanh %373 : vector<8x32xf32>
    %375 = vector.extract_strided_slice %359 {offsets = [0, 96], sizes = [8, 32], strides = [1, 1]} : vector<8x128xf32> to vector<8x32xf32>
    %376 = arith.negf %375 : vector<8x32xf32>
    %377 = math.exp %376 : vector<8x32xf32>
    %cst_151 = arith.constant 1.000000e+00 : f32
    %378 = vector.broadcast %cst_151 : f32 to vector<8x32xf32>
    %379 = arith.addf %378, %377 : vector<8x32xf32>
    %380 = arith.divf %378, %379 : vector<8x32xf32>
    %381 = arith.mulf %372, %360 : vector<8x32xf32>
    %382 = arith.mulf %366, %374 : vector<8x32xf32>
    %383 = arith.addf %381, %382 : vector<8x32xf32>
    %384 = math.tanh %383 : vector<8x32xf32>
    %385 = arith.mulf %380, %384 : vector<8x32xf32>
    %c0_152 = arith.constant 0 : index
    %c0_153 = arith.constant 0 : index
    %386 = vector.load %arg9[%c0_152, %c0_153] : memref<8x32xf32, #tpu.memory_space<vmem>>, vector<8x32xf32>
    tpu.vector_store %arg9[%c0_152, %c0_153], %385 {strides = array<i32>} : memref<8x32xf32, #tpu.memory_space<vmem>>, vector<8x32xf32>,
    %c0_154 = arith.constant 0 : index
    %c0_155 = arith.constant 0 : index
    %387 = vector.load %arg10[%c0_154, %c0_155] : memref<8x32xf32, #tpu.memory_space<vmem>>, vector<8x32xf32>
    tpu.vector_store %arg10[%c0_154, %c0_155], %383 {strides = array<i32>} : memref<8x32xf32, #tpu.memory_space<vmem>>, vector<8x32xf32>,
    %388 = arith.index_cast %353 : i32 to index
    %c0_156 = arith.constant 0 : index
    %389 = vector.load %arg6[%388, %c0_156] : memref<64x32xf32, #tpu.memory_space<vmem>>, vector<8x32xf32>
    tpu.vector_store %arg6[%388, %c0_156], %385 {strides = array<i32>} : memref<64x32xf32, #tpu.memory_space<vmem>>, vector<8x32xf32>,
    %c5_i32 = arith.constant 5 : i32
    %c8_i32_157 = arith.constant 8 : i32
    %390 = arith.muli %c5_i32, %c8_i32_157 : i32
    %391 = tpu.assume_multiple %390, 8 : i32
    %392 = arith.index_cast %391 : i32 to index
    %c0_158 = arith.constant 0 : index
    %393 = vector.load %arg1[%392, %c0_158] : memref<64x128xf32, #tpu.memory_space<vmem>>, vector<8x128xf32>
    %c0_159 = arith.constant 0 : index
    %c0_160 = arith.constant 0 : index
    %394 = vector.load %arg7[%c0_159, %c0_160] : memref<8x32xf32, #tpu.memory_space<vmem>>, vector<8x32xf32>
    %395 = arith.truncf %394 : vector<8x32xf32> to vector<8x32xbf16>
    %cst_161 = arith.constant dense<0.000000e+00> : vector<8x128xf32>
    %396 = tpu.matmul %395, %3, %cst_161 {dimension_numbers = #tpu.dot_dimension_numbers<[1], [0], [0], [1], [0, 0, 1, 1], [], []>} : vector<8x32xbf16>, vector<32x128xbf16>, vector<8x128xf32> -> vector<8x128xf32>
    %397 = arith.addf %393, %396 : vector<8x128xf32>
    %c0_162 = arith.constant 0 : index
    %c0_163 = arith.constant 0 : index
    %398 = vector.load %arg8[%c0_162, %c0_163] : memref<8x32xf32, #tpu.memory_space<vmem>>, vector<8x32xf32>
    %399 = vector.extract_strided_slice %397 {offsets = [0, 0], sizes = [8, 32], strides = [1, 1]} : vector<8x128xf32> to vector<8x32xf32>
    %400 = arith.negf %399 : vector<8x32xf32>
    %401 = math.exp %400 : vector<8x32xf32>
    %cst_164 = arith.constant 1.000000e+00 : f32
    %402 = vector.broadcast %cst_164 : f32 to vector<8x32xf32>
    %403 = arith.addf %402, %401 : vector<8x32xf32>
    %404 = arith.divf %402, %403 : vector<8x32xf32>
    %405 = vector.extract_strided_slice %397 {offsets = [0, 32], sizes = [8, 32], strides = [1, 1]} : vector<8x128xf32> to vector<8x32xf32>
    %406 = arith.negf %405 : vector<8x32xf32>
    %407 = math.exp %406 : vector<8x32xf32>
    %cst_165 = arith.constant 1.000000e+00 : f32
    %408 = vector.broadcast %cst_165 : f32 to vector<8x32xf32>
    %409 = arith.addf %408, %407 : vector<8x32xf32>
    %410 = arith.divf %408, %409 : vector<8x32xf32>
    %411 = vector.extract_strided_slice %397 {offsets = [0, 64], sizes = [8, 32], strides = [1, 1]} : vector<8x128xf32> to vector<8x32xf32>
    %412 = math.tanh %411 : vector<8x32xf32>
    %413 = vector.extract_strided_slice %397 {offsets = [0, 96], sizes = [8, 32], strides = [1, 1]} : vector<8x128xf32> to vector<8x32xf32>
    %414 = arith.negf %413 : vector<8x32xf32>
    %415 = math.exp %414 : vector<8x32xf32>
    %cst_166 = arith.constant 1.000000e+00 : f32
    %416 = vector.broadcast %cst_166 : f32 to vector<8x32xf32>
    %417 = arith.addf %416, %415 : vector<8x32xf32>
    %418 = arith.divf %416, %417 : vector<8x32xf32>
    %419 = arith.mulf %410, %398 : vector<8x32xf32>
    %420 = arith.mulf %404, %412 : vector<8x32xf32>
    %421 = arith.addf %419, %420 : vector<8x32xf32>
    %422 = math.tanh %421 : vector<8x32xf32>
    %423 = arith.mulf %418, %422 : vector<8x32xf32>
    %c0_167 = arith.constant 0 : index
    %c0_168 = arith.constant 0 : index
    %424 = vector.load %arg7[%c0_167, %c0_168] : memref<8x32xf32, #tpu.memory_space<vmem>>, vector<8x32xf32>
    tpu.vector_store %arg7[%c0_167, %c0_168], %423 {strides = array<i32>} : memref<8x32xf32, #tpu.memory_space<vmem>>, vector<8x32xf32>,
    %c0_169 = arith.constant 0 : index
    %c0_170 = arith.constant 0 : index
    %425 = vector.load %arg8[%c0_169, %c0_170] : memref<8x32xf32, #tpu.memory_space<vmem>>, vector<8x32xf32>
    tpu.vector_store %arg8[%c0_169, %c0_170], %421 {strides = array<i32>} : memref<8x32xf32, #tpu.memory_space<vmem>>, vector<8x32xf32>,
    %426 = arith.index_cast %391 : i32 to index
    %c0_171 = arith.constant 0 : index
    %427 = vector.load %arg5[%426, %c0_171] : memref<64x32xf32, #tpu.memory_space<vmem>>, vector<8x32xf32>
    tpu.vector_store %arg5[%426, %c0_171], %423 {strides = array<i32>} : memref<64x32xf32, #tpu.memory_space<vmem>>, vector<8x32xf32>,
    %c7_i32_172 = arith.constant 7 : i32
    %428 = arith.subi %c7_i32_172, %c5_i32 : i32
    %c8_i32_173 = arith.constant 8 : i32
    %429 = arith.muli %428, %c8_i32_173 : i32
    %430 = tpu.assume_multiple %429, 8 : i32
    %431 = arith.index_cast %430 : i32 to index
    %c0_174 = arith.constant 0 : index
    %432 = vector.load %arg2[%431, %c0_174] : memref<64x128xf32, #tpu.memory_space<vmem>>, vector<8x128xf32>
    %c0_175 = arith.constant 0 : index
    %c0_176 = arith.constant 0 : index
    %433 = vector.load %arg9[%c0_175, %c0_176] : memref<8x32xf32, #tpu.memory_space<vmem>>, vector<8x32xf32>
    %434 = arith.truncf %433 : vector<8x32xf32> to vector<8x32xbf16>
    %cst_177 = arith.constant dense<0.000000e+00> : vector<8x128xf32>
    %435 = tpu.matmul %434, %4, %cst_177 {dimension_numbers = #tpu.dot_dimension_numbers<[1], [0], [0], [1], [0, 0, 1, 1], [], []>} : vector<8x32xbf16>, vector<32x128xbf16>, vector<8x128xf32> -> vector<8x128xf32>
    %436 = arith.addf %432, %435 : vector<8x128xf32>
    %c0_178 = arith.constant 0 : index
    %c0_179 = arith.constant 0 : index
    %437 = vector.load %arg10[%c0_178, %c0_179] : memref<8x32xf32, #tpu.memory_space<vmem>>, vector<8x32xf32>
    %438 = vector.extract_strided_slice %436 {offsets = [0, 0], sizes = [8, 32], strides = [1, 1]} : vector<8x128xf32> to vector<8x32xf32>
    %439 = arith.negf %438 : vector<8x32xf32>
    %440 = math.exp %439 : vector<8x32xf32>
    %cst_180 = arith.constant 1.000000e+00 : f32
    %441 = vector.broadcast %cst_180 : f32 to vector<8x32xf32>
    %442 = arith.addf %441, %440 : vector<8x32xf32>
    %443 = arith.divf %441, %442 : vector<8x32xf32>
    %444 = vector.extract_strided_slice %436 {offsets = [0, 32], sizes = [8, 32], strides = [1, 1]} : vector<8x128xf32> to vector<8x32xf32>
    %445 = arith.negf %444 : vector<8x32xf32>
    %446 = math.exp %445 : vector<8x32xf32>
    %cst_181 = arith.constant 1.000000e+00 : f32
    %447 = vector.broadcast %cst_181 : f32 to vector<8x32xf32>
    %448 = arith.addf %447, %446 : vector<8x32xf32>
    %449 = arith.divf %447, %448 : vector<8x32xf32>
    %450 = vector.extract_strided_slice %436 {offsets = [0, 64], sizes = [8, 32], strides = [1, 1]} : vector<8x128xf32> to vector<8x32xf32>
    %451 = math.tanh %450 : vector<8x32xf32>
    %452 = vector.extract_strided_slice %436 {offsets = [0, 96], sizes = [8, 32], strides = [1, 1]} : vector<8x128xf32> to vector<8x32xf32>
    %453 = arith.negf %452 : vector<8x32xf32>
    %454 = math.exp %453 : vector<8x32xf32>
    %cst_182 = arith.constant 1.000000e+00 : f32
    %455 = vector.broadcast %cst_182 : f32 to vector<8x32xf32>
    %456 = arith.addf %455, %454 : vector<8x32xf32>
    %457 = arith.divf %455, %456 : vector<8x32xf32>
    %458 = arith.mulf %449, %437 : vector<8x32xf32>
    %459 = arith.mulf %443, %451 : vector<8x32xf32>
    %460 = arith.addf %458, %459 : vector<8x32xf32>
    %461 = math.tanh %460 : vector<8x32xf32>
    %462 = arith.mulf %457, %461 : vector<8x32xf32>
    %c0_183 = arith.constant 0 : index
    %c0_184 = arith.constant 0 : index
    %463 = vector.load %arg9[%c0_183, %c0_184] : memref<8x32xf32, #tpu.memory_space<vmem>>, vector<8x32xf32>
    tpu.vector_store %arg9[%c0_183, %c0_184], %462 {strides = array<i32>} : memref<8x32xf32, #tpu.memory_space<vmem>>, vector<8x32xf32>,
    %c0_185 = arith.constant 0 : index
    %c0_186 = arith.constant 0 : index
    %464 = vector.load %arg10[%c0_185, %c0_186] : memref<8x32xf32, #tpu.memory_space<vmem>>, vector<8x32xf32>
    tpu.vector_store %arg10[%c0_185, %c0_186], %460 {strides = array<i32>} : memref<8x32xf32, #tpu.memory_space<vmem>>, vector<8x32xf32>,
    %465 = arith.index_cast %430 : i32 to index
    %c0_187 = arith.constant 0 : index
    %466 = vector.load %arg6[%465, %c0_187] : memref<64x32xf32, #tpu.memory_space<vmem>>, vector<8x32xf32>
    tpu.vector_store %arg6[%465, %c0_187], %462 {strides = array<i32>} : memref<64x32xf32, #tpu.memory_space<vmem>>, vector<8x32xf32>,
    %c6_i32 = arith.constant 6 : i32
    %c8_i32_188 = arith.constant 8 : i32
    %467 = arith.muli %c6_i32, %c8_i32_188 : i32
    %468 = tpu.assume_multiple %467, 8 : i32
    %469 = arith.index_cast %468 : i32 to index
    %c0_189 = arith.constant 0 : index
    %470 = vector.load %arg1[%469, %c0_189] : memref<64x128xf32, #tpu.memory_space<vmem>>, vector<8x128xf32>
    %c0_190 = arith.constant 0 : index
    %c0_191 = arith.constant 0 : index
    %471 = vector.load %arg7[%c0_190, %c0_191] : memref<8x32xf32, #tpu.memory_space<vmem>>, vector<8x32xf32>
    %472 = arith.truncf %471 : vector<8x32xf32> to vector<8x32xbf16>
    %cst_192 = arith.constant dense<0.000000e+00> : vector<8x128xf32>
    %473 = tpu.matmul %472, %3, %cst_192 {dimension_numbers = #tpu.dot_dimension_numbers<[1], [0], [0], [1], [0, 0, 1, 1], [], []>} : vector<8x32xbf16>, vector<32x128xbf16>, vector<8x128xf32> -> vector<8x128xf32>
    %474 = arith.addf %470, %473 : vector<8x128xf32>
    %c0_193 = arith.constant 0 : index
    %c0_194 = arith.constant 0 : index
    %475 = vector.load %arg8[%c0_193, %c0_194] : memref<8x32xf32, #tpu.memory_space<vmem>>, vector<8x32xf32>
    %476 = vector.extract_strided_slice %474 {offsets = [0, 0], sizes = [8, 32], strides = [1, 1]} : vector<8x128xf32> to vector<8x32xf32>
    %477 = arith.negf %476 : vector<8x32xf32>
    %478 = math.exp %477 : vector<8x32xf32>
    %cst_195 = arith.constant 1.000000e+00 : f32
    %479 = vector.broadcast %cst_195 : f32 to vector<8x32xf32>
    %480 = arith.addf %479, %478 : vector<8x32xf32>
    %481 = arith.divf %479, %480 : vector<8x32xf32>
    %482 = vector.extract_strided_slice %474 {offsets = [0, 32], sizes = [8, 32], strides = [1, 1]} : vector<8x128xf32> to vector<8x32xf32>
    %483 = arith.negf %482 : vector<8x32xf32>
    %484 = math.exp %483 : vector<8x32xf32>
    %cst_196 = arith.constant 1.000000e+00 : f32
    %485 = vector.broadcast %cst_196 : f32 to vector<8x32xf32>
    %486 = arith.addf %485, %484 : vector<8x32xf32>
    %487 = arith.divf %485, %486 : vector<8x32xf32>
    %488 = vector.extract_strided_slice %474 {offsets = [0, 64], sizes = [8, 32], strides = [1, 1]} : vector<8x128xf32> to vector<8x32xf32>
    %489 = math.tanh %488 : vector<8x32xf32>
    %490 = vector.extract_strided_slice %474 {offsets = [0, 96], sizes = [8, 32], strides = [1, 1]} : vector<8x128xf32> to vector<8x32xf32>
    %491 = arith.negf %490 : vector<8x32xf32>
    %492 = math.exp %491 : vector<8x32xf32>
    %cst_197 = arith.constant 1.000000e+00 : f32
    %493 = vector.broadcast %cst_197 : f32 to vector<8x32xf32>
    %494 = arith.addf %493, %492 : vector<8x32xf32>
    %495 = arith.divf %493, %494 : vector<8x32xf32>
    %496 = arith.mulf %487, %475 : vector<8x32xf32>
    %497 = arith.mulf %481, %489 : vector<8x32xf32>
    %498 = arith.addf %496, %497 : vector<8x32xf32>
    %499 = math.tanh %498 : vector<8x32xf32>
    %500 = arith.mulf %495, %499 : vector<8x32xf32>
    %c0_198 = arith.constant 0 : index
    %c0_199 = arith.constant 0 : index
    %501 = vector.load %arg7[%c0_198, %c0_199] : memref<8x32xf32, #tpu.memory_space<vmem>>, vector<8x32xf32>
    tpu.vector_store %arg7[%c0_198, %c0_199], %500 {strides = array<i32>} : memref<8x32xf32, #tpu.memory_space<vmem>>, vector<8x32xf32>,
    %c0_200 = arith.constant 0 : index
    %c0_201 = arith.constant 0 : index
    %502 = vector.load %arg8[%c0_200, %c0_201] : memref<8x32xf32, #tpu.memory_space<vmem>>, vector<8x32xf32>
    tpu.vector_store %arg8[%c0_200, %c0_201], %498 {strides = array<i32>} : memref<8x32xf32, #tpu.memory_space<vmem>>, vector<8x32xf32>,
    %503 = arith.index_cast %468 : i32 to index
    %c0_202 = arith.constant 0 : index
    %504 = vector.load %arg5[%503, %c0_202] : memref<64x32xf32, #tpu.memory_space<vmem>>, vector<8x32xf32>
    tpu.vector_store %arg5[%503, %c0_202], %500 {strides = array<i32>} : memref<64x32xf32, #tpu.memory_space<vmem>>, vector<8x32xf32>,
    %c7_i32_203 = arith.constant 7 : i32
    %505 = arith.subi %c7_i32_203, %c6_i32 : i32
    %c8_i32_204 = arith.constant 8 : i32
    %506 = arith.muli %505, %c8_i32_204 : i32
    %507 = tpu.assume_multiple %506, 8 : i32
    %508 = arith.index_cast %507 : i32 to index
    %c0_205 = arith.constant 0 : index
    %509 = vector.load %arg2[%508, %c0_205] : memref<64x128xf32, #tpu.memory_space<vmem>>, vector<8x128xf32>
    %c0_206 = arith.constant 0 : index
    %c0_207 = arith.constant 0 : index
    %510 = vector.load %arg9[%c0_206, %c0_207] : memref<8x32xf32, #tpu.memory_space<vmem>>, vector<8x32xf32>
    %511 = arith.truncf %510 : vector<8x32xf32> to vector<8x32xbf16>
    %cst_208 = arith.constant dense<0.000000e+00> : vector<8x128xf32>
    %512 = tpu.matmul %511, %4, %cst_208 {dimension_numbers = #tpu.dot_dimension_numbers<[1], [0], [0], [1], [0, 0, 1, 1], [], []>} : vector<8x32xbf16>, vector<32x128xbf16>, vector<8x128xf32> -> vector<8x128xf32>
    %513 = arith.addf %509, %512 : vector<8x128xf32>
    %c0_209 = arith.constant 0 : index
    %c0_210 = arith.constant 0 : index
    %514 = vector.load %arg10[%c0_209, %c0_210] : memref<8x32xf32, #tpu.memory_space<vmem>>, vector<8x32xf32>
    %515 = vector.extract_strided_slice %513 {offsets = [0, 0], sizes = [8, 32], strides = [1, 1]} : vector<8x128xf32> to vector<8x32xf32>
    %516 = arith.negf %515 : vector<8x32xf32>
    %517 = math.exp %516 : vector<8x32xf32>
    %cst_211 = arith.constant 1.000000e+00 : f32
    %518 = vector.broadcast %cst_211 : f32 to vector<8x32xf32>
    %519 = arith.addf %518, %517 : vector<8x32xf32>
    %520 = arith.divf %518, %519 : vector<8x32xf32>
    %521 = vector.extract_strided_slice %513 {offsets = [0, 32], sizes = [8, 32], strides = [1, 1]} : vector<8x128xf32> to vector<8x32xf32>
    %522 = arith.negf %521 : vector<8x32xf32>
    %523 = math.exp %522 : vector<8x32xf32>
    %cst_212 = arith.constant 1.000000e+00 : f32
    %524 = vector.broadcast %cst_212 : f32 to vector<8x32xf32>
    %525 = arith.addf %524, %523 : vector<8x32xf32>
    %526 = arith.divf %524, %525 : vector<8x32xf32>
    %527 = vector.extract_strided_slice %513 {offsets = [0, 64], sizes = [8, 32], strides = [1, 1]} : vector<8x128xf32> to vector<8x32xf32>
    %528 = math.tanh %527 : vector<8x32xf32>
    %529 = vector.extract_strided_slice %513 {offsets = [0, 96], sizes = [8, 32], strides = [1, 1]} : vector<8x128xf32> to vector<8x32xf32>
    %530 = arith.negf %529 : vector<8x32xf32>
    %531 = math.exp %530 : vector<8x32xf32>
    %cst_213 = arith.constant 1.000000e+00 : f32
    %532 = vector.broadcast %cst_213 : f32 to vector<8x32xf32>
    %533 = arith.addf %532, %531 : vector<8x32xf32>
    %534 = arith.divf %532, %533 : vector<8x32xf32>
    %535 = arith.mulf %526, %514 : vector<8x32xf32>
    %536 = arith.mulf %520, %528 : vector<8x32xf32>
    %537 = arith.addf %535, %536 : vector<8x32xf32>
    %538 = math.tanh %537 : vector<8x32xf32>
    %539 = arith.mulf %534, %538 : vector<8x32xf32>
    %c0_214 = arith.constant 0 : index
    %c0_215 = arith.constant 0 : index
    %540 = vector.load %arg9[%c0_214, %c0_215] : memref<8x32xf32, #tpu.memory_space<vmem>>, vector<8x32xf32>
    tpu.vector_store %arg9[%c0_214, %c0_215], %539 {strides = array<i32>} : memref<8x32xf32, #tpu.memory_space<vmem>>, vector<8x32xf32>,
    %c0_216 = arith.constant 0 : index
    %c0_217 = arith.constant 0 : index
    %541 = vector.load %arg10[%c0_216, %c0_217] : memref<8x32xf32, #tpu.memory_space<vmem>>, vector<8x32xf32>
    tpu.vector_store %arg10[%c0_216, %c0_217], %537 {strides = array<i32>} : memref<8x32xf32, #tpu.memory_space<vmem>>, vector<8x32xf32>,
    %542 = arith.index_cast %507 : i32 to index
    %c0_218 = arith.constant 0 : index
    %543 = vector.load %arg6[%542, %c0_218] : memref<64x32xf32, #tpu.memory_space<vmem>>, vector<8x32xf32>
    tpu.vector_store %arg6[%542, %c0_218], %539 {strides = array<i32>} : memref<64x32xf32, #tpu.memory_space<vmem>>, vector<8x32xf32>,
    %c7_i32_219 = arith.constant 7 : i32
    %c8_i32_220 = arith.constant 8 : i32
    %544 = arith.muli %c7_i32_219, %c8_i32_220 : i32
    %545 = tpu.assume_multiple %544, 8 : i32
    %546 = arith.index_cast %545 : i32 to index
    %c0_221 = arith.constant 0 : index
    %547 = vector.load %arg1[%546, %c0_221] : memref<64x128xf32, #tpu.memory_space<vmem>>, vector<8x128xf32>
    %c0_222 = arith.constant 0 : index
    %c0_223 = arith.constant 0 : index
    %548 = vector.load %arg7[%c0_222, %c0_223] : memref<8x32xf32, #tpu.memory_space<vmem>>, vector<8x32xf32>
    %549 = arith.truncf %548 : vector<8x32xf32> to vector<8x32xbf16>
    %cst_224 = arith.constant dense<0.000000e+00> : vector<8x128xf32>
    %550 = tpu.matmul %549, %3, %cst_224 {dimension_numbers = #tpu.dot_dimension_numbers<[1], [0], [0], [1], [0, 0, 1, 1], [], []>} : vector<8x32xbf16>, vector<32x128xbf16>, vector<8x128xf32> -> vector<8x128xf32>
    %551 = arith.addf %547, %550 : vector<8x128xf32>
    %c0_225 = arith.constant 0 : index
    %c0_226 = arith.constant 0 : index
    %552 = vector.load %arg8[%c0_225, %c0_226] : memref<8x32xf32, #tpu.memory_space<vmem>>, vector<8x32xf32>
    %553 = vector.extract_strided_slice %551 {offsets = [0, 0], sizes = [8, 32], strides = [1, 1]} : vector<8x128xf32> to vector<8x32xf32>
    %554 = arith.negf %553 : vector<8x32xf32>
    %555 = math.exp %554 : vector<8x32xf32>
    %cst_227 = arith.constant 1.000000e+00 : f32
    %556 = vector.broadcast %cst_227 : f32 to vector<8x32xf32>
    %557 = arith.addf %556, %555 : vector<8x32xf32>
    %558 = arith.divf %556, %557 : vector<8x32xf32>
    %559 = vector.extract_strided_slice %551 {offsets = [0, 32], sizes = [8, 32], strides = [1, 1]} : vector<8x128xf32> to vector<8x32xf32>
    %560 = arith.negf %559 : vector<8x32xf32>
    %561 = math.exp %560 : vector<8x32xf32>
    %cst_228 = arith.constant 1.000000e+00 : f32
    %562 = vector.broadcast %cst_228 : f32 to vector<8x32xf32>
    %563 = arith.addf %562, %561 : vector<8x32xf32>
    %564 = arith.divf %562, %563 : vector<8x32xf32>
    %565 = vector.extract_strided_slice %551 {offsets = [0, 64], sizes = [8, 32], strides = [1, 1]} : vector<8x128xf32> to vector<8x32xf32>
    %566 = math.tanh %565 : vector<8x32xf32>
    %567 = vector.extract_strided_slice %551 {offsets = [0, 96], sizes = [8, 32], strides = [1, 1]} : vector<8x128xf32> to vector<8x32xf32>
    %568 = arith.negf %567 : vector<8x32xf32>
    %569 = math.exp %568 : vector<8x32xf32>
    %cst_229 = arith.constant 1.000000e+00 : f32
    %570 = vector.broadcast %cst_229 : f32 to vector<8x32xf32>
    %571 = arith.addf %570, %569 : vector<8x32xf32>
    %572 = arith.divf %570, %571 : vector<8x32xf32>
    %573 = arith.mulf %564, %552 : vector<8x32xf32>
    %574 = arith.mulf %558, %566 : vector<8x32xf32>
    %575 = arith.addf %573, %574 : vector<8x32xf32>
    %576 = math.tanh %575 : vector<8x32xf32>
    %577 = arith.mulf %572, %576 : vector<8x32xf32>
    %c0_230 = arith.constant 0 : index
    %c0_231 = arith.constant 0 : index
    %578 = vector.load %arg7[%c0_230, %c0_231] : memref<8x32xf32, #tpu.memory_space<vmem>>, vector<8x32xf32>
    tpu.vector_store %arg7[%c0_230, %c0_231], %577 {strides = array<i32>} : memref<8x32xf32, #tpu.memory_space<vmem>>, vector<8x32xf32>,
    %c0_232 = arith.constant 0 : index
    %c0_233 = arith.constant 0 : index
    %579 = vector.load %arg8[%c0_232, %c0_233] : memref<8x32xf32, #tpu.memory_space<vmem>>, vector<8x32xf32>
    tpu.vector_store %arg8[%c0_232, %c0_233], %575 {strides = array<i32>} : memref<8x32xf32, #tpu.memory_space<vmem>>, vector<8x32xf32>,
    %580 = arith.index_cast %545 : i32 to index
    %c0_234 = arith.constant 0 : index
    %581 = vector.load %arg5[%580, %c0_234] : memref<64x32xf32, #tpu.memory_space<vmem>>, vector<8x32xf32>
    tpu.vector_store %arg5[%580, %c0_234], %577 {strides = array<i32>} : memref<64x32xf32, #tpu.memory_space<vmem>>, vector<8x32xf32>,
    %c7_i32_235 = arith.constant 7 : i32
    %582 = arith.subi %c7_i32_235, %c7_i32_219 : i32
    %c8_i32_236 = arith.constant 8 : i32
    %583 = arith.muli %582, %c8_i32_236 : i32
    %584 = tpu.assume_multiple %583, 8 : i32
    %585 = arith.index_cast %584 : i32 to index
    %c0_237 = arith.constant 0 : index
    %586 = vector.load %arg2[%585, %c0_237] : memref<64x128xf32, #tpu.memory_space<vmem>>, vector<8x128xf32>
    %c0_238 = arith.constant 0 : index
    %c0_239 = arith.constant 0 : index
    %587 = vector.load %arg9[%c0_238, %c0_239] : memref<8x32xf32, #tpu.memory_space<vmem>>, vector<8x32xf32>
    %588 = arith.truncf %587 : vector<8x32xf32> to vector<8x32xbf16>
    %cst_240 = arith.constant dense<0.000000e+00> : vector<8x128xf32>
    %589 = tpu.matmul %588, %4, %cst_240 {dimension_numbers = #tpu.dot_dimension_numbers<[1], [0], [0], [1], [0, 0, 1, 1], [], []>} : vector<8x32xbf16>, vector<32x128xbf16>, vector<8x128xf32> -> vector<8x128xf32>
    %590 = arith.addf %586, %589 : vector<8x128xf32>
    %c0_241 = arith.constant 0 : index
    %c0_242 = arith.constant 0 : index
    %591 = vector.load %arg10[%c0_241, %c0_242] : memref<8x32xf32, #tpu.memory_space<vmem>>, vector<8x32xf32>
    %592 = vector.extract_strided_slice %590 {offsets = [0, 0], sizes = [8, 32], strides = [1, 1]} : vector<8x128xf32> to vector<8x32xf32>
    %593 = arith.negf %592 : vector<8x32xf32>
    %594 = math.exp %593 : vector<8x32xf32>
    %cst_243 = arith.constant 1.000000e+00 : f32
    %595 = vector.broadcast %cst_243 : f32 to vector<8x32xf32>
    %596 = arith.addf %595, %594 : vector<8x32xf32>
    %597 = arith.divf %595, %596 : vector<8x32xf32>
    %598 = vector.extract_strided_slice %590 {offsets = [0, 32], sizes = [8, 32], strides = [1, 1]} : vector<8x128xf32> to vector<8x32xf32>
    %599 = arith.negf %598 : vector<8x32xf32>
    %600 = math.exp %599 : vector<8x32xf32>
    %cst_244 = arith.constant 1.000000e+00 : f32
    %601 = vector.broadcast %cst_244 : f32 to vector<8x32xf32>
    %602 = arith.addf %601, %600 : vector<8x32xf32>
    %603 = arith.divf %601, %602 : vector<8x32xf32>
    %604 = vector.extract_strided_slice %590 {offsets = [0, 64], sizes = [8, 32], strides = [1, 1]} : vector<8x128xf32> to vector<8x32xf32>
    %605 = math.tanh %604 : vector<8x32xf32>
    %606 = vector.extract_strided_slice %590 {offsets = [0, 96], sizes = [8, 32], strides = [1, 1]} : vector<8x128xf32> to vector<8x32xf32>
    %607 = arith.negf %606 : vector<8x32xf32>
    %608 = math.exp %607 : vector<8x32xf32>
    %cst_245 = arith.constant 1.000000e+00 : f32
    %609 = vector.broadcast %cst_245 : f32 to vector<8x32xf32>
    %610 = arith.addf %609, %608 : vector<8x32xf32>
    %611 = arith.divf %609, %610 : vector<8x32xf32>
    %612 = arith.mulf %603, %591 : vector<8x32xf32>
    %613 = arith.mulf %597, %605 : vector<8x32xf32>
    %614 = arith.addf %612, %613 : vector<8x32xf32>
    %615 = math.tanh %614 : vector<8x32xf32>
    %616 = arith.mulf %611, %615 : vector<8x32xf32>
    %c0_246 = arith.constant 0 : index
    %c0_247 = arith.constant 0 : index
    %617 = vector.load %arg9[%c0_246, %c0_247] : memref<8x32xf32, #tpu.memory_space<vmem>>, vector<8x32xf32>
    tpu.vector_store %arg9[%c0_246, %c0_247], %616 {strides = array<i32>} : memref<8x32xf32, #tpu.memory_space<vmem>>, vector<8x32xf32>,
    %c0_248 = arith.constant 0 : index
    %c0_249 = arith.constant 0 : index
    %618 = vector.load %arg10[%c0_248, %c0_249] : memref<8x32xf32, #tpu.memory_space<vmem>>, vector<8x32xf32>
    tpu.vector_store %arg10[%c0_248, %c0_249], %614 {strides = array<i32>} : memref<8x32xf32, #tpu.memory_space<vmem>>, vector<8x32xf32>,
    %619 = arith.index_cast %584 : i32 to index
    %c0_250 = arith.constant 0 : index
    %620 = vector.load %arg6[%619, %c0_250] : memref<64x32xf32, #tpu.memory_space<vmem>>, vector<8x32xf32>
    tpu.vector_store %arg6[%619, %c0_250], %616 {strides = array<i32>} : memref<64x32xf32, #tpu.memory_space<vmem>>, vector<8x32xf32>,
    %c8_i32_251 = arith.constant 8 : i32
    return
  }
  func.func @transform_0(%arg0: i32) -> (i32, i32) {
    %c0_i32 = arith.constant 0 : i32
    %c0_i32_0 = arith.constant 0 : i32
    return %arg0, %c0_i32 : i32, i32
  }
  func.func @transform_1(%arg0: i32) -> (i32, i32) {
    %c0_i32 = arith.constant 0 : i32
    %0 = arith.subi %c0_i32, %arg0 : i32
    %c0_i32_0 = arith.constant 0 : i32
    %c0_i32_1 = arith.constant 0 : i32
    return %0, %c0_i32_0 : i32, i32
  }
  func.func @transform_2(%arg0: i32) -> (i32, i32) {
    %c0_i32 = arith.constant 0 : i32
    %c0_i32_0 = arith.constant 0 : i32
    %c0_i32_1 = arith.constant 0 : i32
    return %c0_i32, %c0_i32_0 : i32, i32
  }
  func.func @transform_3(%arg0: i32) -> (i32, i32) {
    %c0_i32 = arith.constant 0 : i32
    %c0_i32_0 = arith.constant 0 : i32
    %c0_i32_1 = arith.constant 0 : i32
    return %c0_i32, %c0_i32_0 : i32, i32
  }
  func.func @transform_4(%arg0: i32) -> (i32, i32) {
    %c0_i32 = arith.constant 0 : i32
    %c0_i32_0 = arith.constant 0 : i32
    return %arg0, %c0_i32 : i32, i32
  }
  func.func @transform_5(%arg0: i32) -> (i32, i32) {
    %c0_i32 = arith.constant 0 : i32
    %0 = arith.subi %c0_i32, %arg0 : i32
    %c0_i32_0 = arith.constant 0 : i32
    %c0_i32_1 = arith.constant 0 : i32
    return %0, %c0_i32_0 : i32, i32
  }
}

module attributes {stable_mosaic.version = 11 : i64} {
  func.func @proj2_kernel(%arg0: i32, %arg1: memref<64x32xf32, #tpu.memory_space<vmem>>, %arg2: memref<64x32xf32, #tpu.memory_space<vmem>>, %arg3: memref<32x128xbf16, #tpu.memory_space<vmem>>, %arg4: memref<32x128xbf16, #tpu.memory_space<vmem>>, %arg5: memref<32x128xbf16, #tpu.memory_space<vmem>>, %arg6: memref<32x128xbf16, #tpu.memory_space<vmem>>, %arg7: memref<1x128xf32, #tpu.memory_space<vmem>>, %arg8: memref<1x128xf32, #tpu.memory_space<vmem>>, %arg9: memref<64x128xf32, #tpu.memory_space<vmem>>, %arg10: memref<64x128xf32, #tpu.memory_space<vmem>>) attributes {dimension_semantics = [#tpu.dimension_semantics<parallel>], iteration_bounds = array<i64: 1>, scalar_prefetch = 0 : i64, scratch_operands = 0 : i64, tpu.core_type = #tpu.core_type<tc>, window_params = [{transform_indices = @transform_0, window_bounds = array<i64: 64, 32>}, {transform_indices = @transform_1, window_bounds = array<i64: 64, 32>}, {pipeline_mode = #tpu.pipeline_mode<synchronous>, transform_indices = @transform_2, window_bounds = array<i64: 32, 128>}, {pipeline_mode = #tpu.pipeline_mode<synchronous>, transform_indices = @transform_3, window_bounds = array<i64: 32, 128>}, {pipeline_mode = #tpu.pipeline_mode<synchronous>, transform_indices = @transform_4, window_bounds = array<i64: 32, 128>}, {pipeline_mode = #tpu.pipeline_mode<synchronous>, transform_indices = @transform_5, window_bounds = array<i64: 32, 128>}, {pipeline_mode = #tpu.pipeline_mode<synchronous>, transform_indices = @transform_6, window_bounds = array<i64: 1, 128>}, {pipeline_mode = #tpu.pipeline_mode<synchronous>, transform_indices = @transform_7, window_bounds = array<i64: 1, 128>}, {transform_indices = @transform_8, window_bounds = array<i64: 64, 128>}, {transform_indices = @transform_9, window_bounds = array<i64: 64, 128>}]} {
    %c0 = arith.constant 0 : index
    %c0_0 = arith.constant 0 : index
    %0 = vector.load %arg1[%c0, %c0_0] : memref<64x32xf32, #tpu.memory_space<vmem>>, vector<64x32xf32>
    %1 = arith.truncf %0 : vector<64x32xf32> to vector<64x32xbf16>
    %c0_1 = arith.constant 0 : index
    %c0_2 = arith.constant 0 : index
    %2 = vector.load %arg2[%c0_1, %c0_2] : memref<64x32xf32, #tpu.memory_space<vmem>>, vector<64x32xf32>
    %3 = arith.truncf %2 : vector<64x32xf32> to vector<64x32xbf16>
    %c0_3 = arith.constant 0 : index
    %c0_4 = arith.constant 0 : index
    %4 = vector.load %arg3[%c0_3, %c0_4] : memref<32x128xbf16, #tpu.memory_space<vmem>>, vector<32x128xbf16>
    %cst = arith.constant dense<0.000000e+00> : vector<64x128xf32>
    %5 = tpu.matmul %1, %4, %cst {dimension_numbers = #tpu.dot_dimension_numbers<[1], [0], [0], [1], [0, 0, 1, 1], [], []>} : vector<64x32xbf16>, vector<32x128xbf16>, vector<64x128xf32> -> vector<64x128xf32>
    %c0_5 = arith.constant 0 : index
    %c0_6 = arith.constant 0 : index
    %6 = vector.load %arg4[%c0_5, %c0_6] : memref<32x128xbf16, #tpu.memory_space<vmem>>, vector<32x128xbf16>
    %cst_7 = arith.constant dense<0.000000e+00> : vector<64x128xf32>
    %7 = tpu.matmul %3, %6, %cst_7 {dimension_numbers = #tpu.dot_dimension_numbers<[1], [0], [0], [1], [0, 0, 1, 1], [], []>} : vector<64x32xbf16>, vector<32x128xbf16>, vector<64x128xf32> -> vector<64x128xf32>
    %8 = arith.addf %5, %7 : vector<64x128xf32>
    %c0_8 = arith.constant 0 : index
    %c0_9 = arith.constant 0 : index
    %9 = vector.load %arg7[%c0_8, %c0_9] : memref<1x128xf32, #tpu.memory_space<vmem>>, vector<1x128xf32>
    %10 = vector.broadcast %9 : vector<1x128xf32> to vector<64x128xf32>
    %11 = arith.addf %8, %10 : vector<64x128xf32>
    %c0_10 = arith.constant 0 : index
    %c0_11 = arith.constant 0 : index
    %12 = vector.load %arg9[%c0_10, %c0_11] : memref<64x128xf32, #tpu.memory_space<vmem>>, vector<64x128xf32>
    tpu.vector_store %arg9[%c0_10, %c0_11], %11 {strides = array<i32>} : memref<64x128xf32, #tpu.memory_space<vmem>>, vector<64x128xf32>,
    %c0_12 = arith.constant 0 : index
    %c0_13 = arith.constant 0 : index
    %13 = vector.load %arg5[%c0_12, %c0_13] : memref<32x128xbf16, #tpu.memory_space<vmem>>, vector<32x128xbf16>
    %cst_14 = arith.constant dense<0.000000e+00> : vector<64x128xf32>
    %14 = tpu.matmul %1, %13, %cst_14 {dimension_numbers = #tpu.dot_dimension_numbers<[1], [0], [0], [1], [0, 0, 1, 1], [], []>} : vector<64x32xbf16>, vector<32x128xbf16>, vector<64x128xf32> -> vector<64x128xf32>
    %c0_15 = arith.constant 0 : index
    %c0_16 = arith.constant 0 : index
    %15 = vector.load %arg6[%c0_15, %c0_16] : memref<32x128xbf16, #tpu.memory_space<vmem>>, vector<32x128xbf16>
    %cst_17 = arith.constant dense<0.000000e+00> : vector<64x128xf32>
    %16 = tpu.matmul %3, %15, %cst_17 {dimension_numbers = #tpu.dot_dimension_numbers<[1], [0], [0], [1], [0, 0, 1, 1], [], []>} : vector<64x32xbf16>, vector<32x128xbf16>, vector<64x128xf32> -> vector<64x128xf32>
    %17 = arith.addf %14, %16 : vector<64x128xf32>
    %c0_18 = arith.constant 0 : index
    %c0_19 = arith.constant 0 : index
    %18 = vector.load %arg8[%c0_18, %c0_19] : memref<1x128xf32, #tpu.memory_space<vmem>>, vector<1x128xf32>
    %19 = vector.broadcast %18 : vector<1x128xf32> to vector<64x128xf32>
    %20 = arith.addf %17, %19 : vector<64x128xf32>
    %c0_20 = arith.constant 0 : index
    %c0_21 = arith.constant 0 : index
    %21 = vector.load %arg10[%c0_20, %c0_21] : memref<64x128xf32, #tpu.memory_space<vmem>>, vector<64x128xf32>
    tpu.vector_store %arg10[%c0_20, %c0_21], %20 {strides = array<i32>} : memref<64x128xf32, #tpu.memory_space<vmem>>, vector<64x128xf32>,
    return
  }
  func.func @transform_0(%arg0: i32) -> (i32, i32) {
    %c0_i32 = arith.constant 0 : i32
    %c0_i32_0 = arith.constant 0 : i32
    return %arg0, %c0_i32 : i32, i32
  }
  func.func @transform_1(%arg0: i32) -> (i32, i32) {
    %c0_i32 = arith.constant 0 : i32
    %c0_i32_0 = arith.constant 0 : i32
    return %arg0, %c0_i32 : i32, i32
  }
  func.func @transform_2(%arg0: i32) -> (i32, i32) {
    %c0_i32 = arith.constant 0 : i32
    %c0_i32_0 = arith.constant 0 : i32
    %c0_i32_1 = arith.constant 0 : i32
    return %c0_i32, %c0_i32_0 : i32, i32
  }
  func.func @transform_3(%arg0: i32) -> (i32, i32) {
    %c0_i32 = arith.constant 0 : i32
    %c0_i32_0 = arith.constant 0 : i32
    %c0_i32_1 = arith.constant 0 : i32
    return %c0_i32, %c0_i32_0 : i32, i32
  }
  func.func @transform_4(%arg0: i32) -> (i32, i32) {
    %c0_i32 = arith.constant 0 : i32
    %c0_i32_0 = arith.constant 0 : i32
    %c0_i32_1 = arith.constant 0 : i32
    return %c0_i32, %c0_i32_0 : i32, i32
  }
  func.func @transform_5(%arg0: i32) -> (i32, i32) {
    %c0_i32 = arith.constant 0 : i32
    %c0_i32_0 = arith.constant 0 : i32
    %c0_i32_1 = arith.constant 0 : i32
    return %c0_i32, %c0_i32_0 : i32, i32
  }
  func.func @transform_6(%arg0: i32) -> (i32, i32) {
    %c0_i32 = arith.constant 0 : i32
    %c0_i32_0 = arith.constant 0 : i32
    %c0_i32_1 = arith.constant 0 : i32
    return %c0_i32, %c0_i32_0 : i32, i32
  }
  func.func @transform_7(%arg0: i32) -> (i32, i32) {
    %c0_i32 = arith.constant 0 : i32
    %c0_i32_0 = arith.constant 0 : i32
    %c0_i32_1 = arith.constant 0 : i32
    return %c0_i32, %c0_i32_0 : i32, i32
  }
  func.func @transform_8(%arg0: i32) -> (i32, i32) {
    %c0_i32 = arith.constant 0 : i32
    %c0_i32_0 = arith.constant 0 : i32
    return %arg0, %c0_i32 : i32, i32
  }
  func.func @transform_9(%arg0: i32) -> (i32, i32) {
    %c0_i32 = arith.constant 0 : i32
    %c0_i32_0 = arith.constant 0 : i32
    return %arg0, %c0_i32 : i32, i32
  }
}

module attributes {stable_mosaic.version = 11 : i64} {
  func.func @head_kernel(%arg0: i32, %arg1: memref<8x32xf32, #tpu.memory_space<vmem>>, %arg2: memref<8x32xf32, #tpu.memory_space<vmem>>, %arg3: memref<1x32xf32, #tpu.memory_space<vmem>>, %arg4: memref<1x32xf32, #tpu.memory_space<vmem>>, %arg5: memref<1x1xf32, #tpu.memory_space<vmem>>, %arg6: memref<8x1xf32, #tpu.memory_space<vmem>>) attributes {dimension_semantics = [#tpu.dimension_semantics<arbitrary>], iteration_bounds = array<i64: 1>, scalar_prefetch = 0 : i64, scratch_operands = 0 : i64, tpu.core_type = #tpu.core_type<tc>, window_params = [{transform_indices = @transform_0, window_bounds = array<i64: 8, 32>}, {transform_indices = @transform_1, window_bounds = array<i64: 8, 32>}, {pipeline_mode = #tpu.pipeline_mode<synchronous>, transform_indices = @transform_2, window_bounds = array<i64: 1, 32>}, {pipeline_mode = #tpu.pipeline_mode<synchronous>, transform_indices = @transform_3, window_bounds = array<i64: 1, 32>}, {pipeline_mode = #tpu.pipeline_mode<synchronous>, transform_indices = @transform_4, window_bounds = array<i64: 1, 1>}, {pipeline_mode = #tpu.pipeline_mode<synchronous>, transform_indices = @transform_5, window_bounds = array<i64: 8, 1>}]} {
    %c0 = arith.constant 0 : index
    %c0_0 = arith.constant 0 : index
    %0 = vector.load %arg1[%c0, %c0_0] : memref<8x32xf32, #tpu.memory_space<vmem>>, vector<8x32xf32>
    %c0_1 = arith.constant 0 : index
    %c0_2 = arith.constant 0 : index
    %1 = vector.load %arg3[%c0_1, %c0_2] : memref<1x32xf32, #tpu.memory_space<vmem>>, vector<1x32xf32>
    %2 = vector.broadcast %1 : vector<1x32xf32> to vector<8x32xf32>
    %3 = arith.mulf %0, %2 : vector<8x32xf32>
    %cst = arith.constant dense<0.000000e+00> : vector<8xf32>
    %4 = vector.multi_reduction <add>, %3, %cst [1] : vector<8x32xf32> to vector<8xf32>
    %5 = vector.shape_cast %4 : vector<8xf32> to vector<8x1xf32>
    %c0_3 = arith.constant 0 : index
    %c0_4 = arith.constant 0 : index
    %6 = vector.load %arg2[%c0_3, %c0_4] : memref<8x32xf32, #tpu.memory_space<vmem>>, vector<8x32xf32>
    %c0_5 = arith.constant 0 : index
    %c0_6 = arith.constant 0 : index
    %7 = vector.load %arg4[%c0_5, %c0_6] : memref<1x32xf32, #tpu.memory_space<vmem>>, vector<1x32xf32>
    %8 = vector.broadcast %7 : vector<1x32xf32> to vector<8x32xf32>
    %9 = arith.mulf %6, %8 : vector<8x32xf32>
    %cst_7 = arith.constant dense<0.000000e+00> : vector<8xf32>
    %10 = vector.multi_reduction <add>, %9, %cst_7 [1] : vector<8x32xf32> to vector<8xf32>
    %11 = vector.shape_cast %10 : vector<8xf32> to vector<8x1xf32>
    %12 = arith.addf %5, %11 : vector<8x1xf32>
    %c0_8 = arith.constant 0 : index
    %c0_9 = arith.constant 0 : index
    %13 = vector.load %arg5[%c0_8, %c0_9] : memref<1x1xf32, #tpu.memory_space<vmem>>, vector<1x1xf32>
    %14 = vector.broadcast %13 : vector<1x1xf32> to vector<8x1xf32>
    %15 = arith.addf %12, %14 : vector<8x1xf32>
    %c0_10 = arith.constant 0 : index
    %c0_11 = arith.constant 0 : index
    %16 = vector.load %arg6[%c0_10, %c0_11] : memref<8x1xf32, #tpu.memory_space<vmem>>, vector<8x1xf32>
    tpu.vector_store %arg6[%c0_10, %c0_11], %15 {strides = array<i32>} : memref<8x1xf32, #tpu.memory_space<vmem>>, vector<8x1xf32>,
    return
  }
  func.func @transform_0(%arg0: i32) -> (i32, i32) {
    %c7_i32 = arith.constant 7 : i32
    %c0_i32 = arith.constant 0 : i32
    %c0_i32_0 = arith.constant 0 : i32
    return %c7_i32, %c0_i32 : i32, i32
  }
  func.func @transform_1(%arg0: i32) -> (i32, i32) {
    %c7_i32 = arith.constant 7 : i32
    %c0_i32 = arith.constant 0 : i32
    %c0_i32_0 = arith.constant 0 : i32
    return %c7_i32, %c0_i32 : i32, i32
  }
  func.func @transform_2(%arg0: i32) -> (i32, i32) {
    %c0_i32 = arith.constant 0 : i32
    %c0_i32_0 = arith.constant 0 : i32
    %c0_i32_1 = arith.constant 0 : i32
    return %c0_i32, %c0_i32_0 : i32, i32
  }
  func.func @transform_3(%arg0: i32) -> (i32, i32) {
    %c0_i32 = arith.constant 0 : i32
    %c0_i32_0 = arith.constant 0 : i32
    %c0_i32_1 = arith.constant 0 : i32
    return %c0_i32, %c0_i32_0 : i32, i32
  }
  func.func @transform_4(%arg0: i32) -> (i32, i32) {
    %c0_i32 = arith.constant 0 : i32
    %c0_i32_0 = arith.constant 0 : i32
    %c0_i32_1 = arith.constant 0 : i32
    return %c0_i32, %c0_i32_0 : i32, i32
  }
  func.func @transform_5(%arg0: i32) -> (i32, i32) {
    %c0_i32 = arith.constant 0 : i32
    %c0_i32_0 = arith.constant 0 : i32
    %c0_i32_1 = arith.constant 0 : i32
    return %c0_i32, %c0_i32_0 : i32, i32
  }
}

</mosaic_0001>

<llo_original>
// kernel: lstm_forward.5
$region0: #{lstm_forward.5}
  #allocation0 [shape = 'u32[]', space=smem, size = 0x4, offset = 0x4, fixed_abs, tag = 'smem constant byte address 0x4 - core index']
  #allocation1 [shape = 'u32[144,128]{1,0:T(1,128)}', space=vmem, size = 0x12000, scoped, tag = 'internal scratch']
  %s0 = inlined_call_operand.vmem [shape: f32[64,16], index: 0, kind: input, shape index: {}]
  %s1 = inlined_call_operand.vmem [shape: bf16[16,128], index: 1, kind: input, shape index: {}]
  %s2 = inlined_call_operand.vmem [shape: bf16[16,128], index: 2, kind: input, shape index: {}]
  %s3 = inlined_call_operand.vmem [shape: f32[1,128], index: 3, kind: input, shape index: {}]
  %s4 = inlined_call_operand.vmem [shape: f32[1,128], index: 4, kind: input, shape index: {}]
  %s5 = inlined_call_operand.vmem [shape: f32[64,128], index: 5, kind: output, shape index: {0}]
  %s6 = inlined_call_operand.vmem [shape: f32[64,128], index: 6, kind: output, shape index: {1}]
  %7 = xla_tuple %s5, %s6
  %s8 = sld [smem:[#allocation0]]
  $region38: #{lstm_forward.5} parent=0
    _
  %s10 = ssub.s32 1, %s8
  %s11 = scalar_select 0, %s10, %s8
  // Predicated region
  $region2: #{lstm_forward.5} parent=0 // pred_check
    _
  $region3: #{lstm_forward.5} parent=0 // pred_check_branch
    %13 = sbr.rel (0) target = $region5
  $region4: #{lstm_forward.5} parent=0 // pred_region
    _
  $region5: #{lstm_forward.5} parent=0 // pred_fallthru
    _
  // Predicated region
  $region6: #{lstm_forward.5} parent=0 // pred_check
    _
  $region7: #{lstm_forward.5} parent=0 // pred_check_branch
    %15 = sbr.rel (0) target = $region9
  $region8: #{lstm_forward.5} parent=0 // pred_region
    _
  $region9: #{lstm_forward.5} parent=0 // pred_fallthru
    _
  // Predicated region
  $region10: #{lstm_forward.5} parent=0 // pred_check
    _
  $region11: #{lstm_forward.5} parent=0 // pred_check_branch
    %17 = sbr.rel (0) target = $region13
  $region12: #{lstm_forward.5} parent=0 // pred_region
    _
  $region13: #{lstm_forward.5} parent=0 // pred_fallthru
    _
  // Predicated region
  $region14: #{lstm_forward.5} parent=0 // pred_check
    _
  $region15: #{lstm_forward.5} parent=0 // pred_check_branch
    %19 = sbr.rel (0) target = $region17
  $region16: #{lstm_forward.5} parent=0 // pred_region
    _
  $region17: #{lstm_forward.5} parent=0 // pred_fallthru
    _
  // Predicated region
  $region18: #{lstm_forward.5} parent=0 // pred_check
    _
  $region19: #{lstm_forward.5} parent=0 // pred_check_branch
    %21 = sbr.rel (0) target = $region21
  $region20: #{lstm_forward.5} parent=0 // pred_region
    _
  $region21: #{lstm_forward.5} parent=0 // pred_fallthru
    _
  %v23 = vld [vmem:[%s0] sm:$0xff]
  %v24 = vld [vmem:[%s0 + $0x8] sm:$0xff]
  %v25 = vld [vmem:[%s0 + $0x10] sm:$0xff]
  %v26 = vld [vmem:[%s0 + $0x18] sm:$0xff]
  %v27 = vld [vmem:[%s0 + $0x20] sm:$0xff]
  %v28 = vld [vmem:[%s0 + $0x28] sm:$0xff]
  %v29 = vld [vmem:[%s0 + $0x30] sm:$0xff]
  %v30 = vld [vmem:[%s0 + $0x38] sm:$0xff]
  %v31 = vpack.c.bf16 %v24, %v23
  %v32 = vpack.c.bf16 %v26, %v25
  %v33 = vpack.c.bf16 %v28, %v27
  %v34 = vpack.c.bf16 %v30, %v29
  %v35 = vld [vmem:[%s1] sm:$0xf]
  %v36 = vld [vmem:[%s1 + $0x4] sm:$0xf]
  %v37 = vld [vmem:[%s3] sm:$0x1]
  %v39 = vlaneseq
  %v40 = vshrl.u32 %v39, 7
  %v41 = vsub.s32 0, %v40
  %v42 = vrot.slane %v37, %v41
  %v46 = vunpack.c.l.b16 %v35
  %v47 = vunpack.c.l.b16 %v36
  %v48 = vpack.c.b16 %v47, %v46
  %vm50 = vcmask 130048
  %v52 = vsel %vm50, %v31, 0
  %v55 = vsel %vm50, %v32, 0
  %v58 = vsel %vm50, %v33, 0
  %v61 = vsel %vm50, %v34, 0
  %63 = vmatprep.subr.bf16.mxu0 0
  %64 = vmatpush1.bf16.msra.mxu0 0
  %65 = vmatprep.subr.bf16.mxu0 0
  %66 = vmatpush1.bf16.msra.mxu0 0
  %67 = vmatprep.subr.bf16.mxu0 0
  %68 = vmatpush1.bf16.msra.mxu0 0
  %69 = vmatprep.subr.bf16.mxu0 0
  %70 = vmatpush1.bf16.msra.mxu0 0
  %71 = vmatprep.subr.bf16.mxu0 0
  %72 = vmatpush1.bf16.msra.mxu0 0
  %73 = vmatprep.subr.bf16.mxu0 0
  %74 = vmatpush1.bf16.msra.mxu0 0
  %75 = vmatprep.subr.bf16.mxu0 0
  %76 = vmatpush1.bf16.msra.mxu0 0
  %77 = vmatprep.subr.bf16.mxu0 0
  %78 = vmatpush1.bf16.msra.mxu0 %v48
  %79 = vmatprep.subr.bf16.mxu0 0
  %80 = vmatpush2.bf16.msra.mxu0 0
  %81 = vmatprep.subr.bf16.mxu0 0
  %82 = vmatpush2.bf16.msra.mxu0 0
  %83 = vmatprep.subr.bf16.mxu0 0
  %84 = vmatpush2.bf16.msra.mxu0 0
  %85 = vmatprep.subr.bf16.mxu0 0
  %86 = vmatpush2.bf16.msra.mxu0 0
  %87 = vmatprep.subr.bf16.mxu0 0
  %88 = vmatpush2.bf16.msra.mxu0 0
  %89 = vmatprep.subr.bf16.mxu0 0
  %90 = vmatpush2.bf16.msra.mxu0 0
  %91 = vmatprep.subr.bf16.mxu0 0
  %92 = vmatpush2.bf16.msra.mxu0 0
  %93 = vmatprep.subr.bf16.mxu0 0
  %94 = vmatpush2.bf16.msra.mxu0 0
  %95 = vmatprep.mubr.bf16.mxu0 0
  %96 = vmatmul.mubr.bf16.gmra.mxu0 %v52
  %v97 = vpop.f32.mrf.mxu0
  %v98 = vadd.f32 %v42, %v97
  %v99 = vpop.f32.mrf.mxu0
  %v100 = vpop.f32.mrf.mxu0
  %v101 = vadd.f32 %v42, %v100
  %v102 = vpop.f32.mrf.mxu0
  %103 = vmatprep.mubr.bf16.mxu0 0
  %104 = vmatmul.mubr.bf16.gmra.mxu0 %v55
  %v105 = vpop.f32.mrf.mxu0
  %v106 = vadd.f32 %v42, %v105
  %v107 = vpop.f32.mrf.mxu0
  %v108 = vpop.f32.mrf.mxu0
  %v109 = vadd.f32 %v42, %v108
  %v110 = vpop.f32.mrf.mxu0
  %111 = vmatprep.mubr.bf16.mxu0 0
  %112 = vmatmul.mubr.bf16.gmra.mxu0 %v58
  %v113 = vpop.f32.mrf.mxu0
  %v114 = vadd.f32 %v42, %v113
  %v115 = vpop.f32.mrf.mxu0
  %v116 = vpop.f32.mrf.mxu0
  %v117 = vadd.f32 %v42, %v116
  %v118 = vpop.f32.mrf.mxu0
  %119 = vmatprep.mubr.bf16.mxu0 0
  %120 = vmatmul.mubr.bf16.gmra.mxu0 %v61
  %v121 = vpop.f32.mrf.mxu0
  %v122 = vadd.f32 %v42, %v121
  %v123 = vpop.f32.mrf.mxu0
  %v124 = vpop.f32.mrf.mxu0
  %v125 = vadd.f32 %v42, %v124
  %v126 = vpop.f32.mrf.mxu0
  %127 = vdwg.mxu0
  %128 = vst [vmem:[%s5] sm:$0xff] %v98
  %129 = vst [vmem:[%s5 + $0x8] sm:$0xff] %v101
  %130 = vst [vmem:[%s5 + $0x10] sm:$0xff] %v106
  %131 = vst [vmem:[%s5 + $0x18] sm:$0xff] %v109
  %132 = vst [vmem:[%s5 + $0x20] sm:$0xff] %v114
  %133 = vst [vmem:[%s5 + $0x28] sm:$0xff] %v117
  %134 = vst [vmem:[%s5 + $0x30] sm:$0xff] %v122
  %135 = vst [vmem:[%s5 + $0x38] sm:$0xff] %v125
  %v136 = vld [vmem:[%s2] sm:$0xf]
  %v137 = vld [vmem:[%s2 + $0x4] sm:$0xf]
  %v138 = vld [vmem:[%s4] sm:$0x1]
  %v140 = vlaneseq
  %v141 = vshrl.u32 %v140, 7
  %v142 = vsub.s32 0, %v141
  %v143 = vrot.slane %v138, %v142
  %v147 = vunpack.c.l.b16 %v136
  %v148 = vunpack.c.l.b16 %v137
  %v149 = vpack.c.b16 %v148, %v147
  %151 = vmatprep.subr.bf16.mxu0 0
  %152 = vmatpush1.bf16.msra.mxu0 0
  %153 = vmatprep.subr.bf16.mxu0 0
  %154 = vmatpush1.bf16.msra.mxu0 0
  %155 = vmatprep.subr.bf16.mxu0 0
  %156 = vmatpush1.bf16.msra.mxu0 0
  %157 = vmatprep.subr.bf16.mxu0 0
  %158 = vmatpush1.bf16.msra.mxu0 0
  %159 = vmatprep.subr.bf16.mxu0 0
  %160 = vmatpush1.bf16.msra.mxu0 0
  %161 = vmatprep.subr.bf16.mxu0 0
  %162 = vmatpush1.bf16.msra.mxu0 0
  %163 = vmatprep.subr.bf16.mxu0 0
  %164 = vmatpush1.bf16.msra.mxu0 0
  %165 = vmatprep.subr.bf16.mxu0 0
  %166 = vmatpush1.bf16.msra.mxu0 %v149
  %167 = vmatprep.subr.bf16.mxu0 0
  %168 = vmatpush2.bf16.msra.mxu0 0
  %169 = vmatprep.subr.bf16.mxu0 0
  %170 = vmatpush2.bf16.msra.mxu0 0
  %171 = vmatprep.subr.bf16.mxu0 0
  %172 = vmatpush2.bf16.msra.mxu0 0
  %173 = vmatprep.subr.bf16.mxu0 0
  %174 = vmatpush2.bf16.msra.mxu0 0
  %175 = vmatprep.subr.bf16.mxu0 0
  %176 = vmatpush2.bf16.msra.mxu0 0
  %177 = vmatprep.subr.bf16.mxu0 0
  %178 = vmatpush2.bf16.msra.mxu0 0
  %179 = vmatprep.subr.bf16.mxu0 0
  %180 = vmatpush2.bf16.msra.mxu0 0
  %181 = vmatprep.subr.bf16.mxu0 0
  %182 = vmatpush2.bf16.msra.mxu0 0
  %183 = vmatprep.mubr.bf16.mxu0 0
  %184 = vmatmul.mubr.bf16.gmra.mxu0 %v52
  %v185 = vpop.f32.mrf.mxu0
  %v186 = vadd.f32 %v143, %v185
  %v187 = vpop.f32.mrf.mxu0
  %v188 = vpop.f32.mrf.mxu0
  %v189 = vadd.f32 %v143, %v188
  %v190 = vpop.f32.mrf.mxu0
  %191 = vmatprep.mubr.bf16.mxu0 0
  %192 = vmatmul.mubr.bf16.gmra.mxu0 %v55
  %v193 = vpop.f32.mrf.mxu0
  %v194 = vadd.f32 %v143, %v193
  %v195 = vpop.f32.mrf.mxu0
  %v196 = vpop.f32.mrf.mxu0
  %v197 = vadd.f32 %v143, %v196
  %v198 = vpop.f32.mrf.mxu0
  %199 = vmatprep.mubr.bf16.mxu0 0
  %200 = vmatmul.mubr.bf16.gmra.mxu0 %v58
  %v201 = vpop.f32.mrf.mxu0
  %v202 = vadd.f32 %v143, %v201
  %v203 = vpop.f32.mrf.mxu0
  %v204 = vpop.f32.mrf.mxu0
  %v205 = vadd.f32 %v143, %v204
  %v206 = vpop.f32.mrf.mxu0
  %207 = vmatprep.mubr.bf16.mxu0 0
  %208 = vmatmul.mubr.bf16.gmra.mxu0 %v61
  %v209 = vpop.f32.mrf.mxu0
  %v210 = vadd.f32 %v143, %v209
  %v211 = vpop.f32.mrf.mxu0
  %v212 = vpop.f32.mrf.mxu0
  %v213 = vadd.f32 %v143, %v212
  %v214 = vpop.f32.mrf.mxu0
  %215 = vdwg.mxu0
  %216 = vst [vmem:[%s6] sm:$0xff] %v186
  %217 = vst [vmem:[%s6 + $0x8] sm:$0xff] %v189
  %218 = vst [vmem:[%s6 + $0x10] sm:$0xff] %v194
  %219 = vst [vmem:[%s6 + $0x18] sm:$0xff] %v197
  %220 = vst [vmem:[%s6 + $0x20] sm:$0xff] %v202
  %221 = vst [vmem:[%s6 + $0x28] sm:$0xff] %v205
  %222 = vst [vmem:[%s6 + $0x30] sm:$0xff] %v210
  %223 = vst [vmem:[%s6 + $0x38] sm:$0xff] %v213
  // Predicated region
  $region22: #{lstm_forward.5} parent=0 // pred_check
    _
  $region23: #{lstm_forward.5} parent=0 // pred_check_branch
    %225 = sbr.rel (0) target = $region25
  $region24: #{lstm_forward.5} parent=0 // pred_region
    _
  $region25: #{lstm_forward.5} parent=0 // pred_fallthru
    _
  // Predicated region
  $region26: #{lstm_forward.5} parent=0 // pred_check
    _
  $region27: #{lstm_forward.5} parent=0 // pred_check_branch
    %227 = sbr.rel (0) target = $region29
  $region28: #{lstm_forward.5} parent=0 // pred_region
    _
  $region29: #{lstm_forward.5} parent=0 // pred_fallthru
    _
  // Predicated region
  $region30: #{lstm_forward.5} parent=0 // pred_check
    _
  $region31: #{lstm_forward.5} parent=0 // pred_check_branch
    %229 = sbr.rel (0) target = $region33
  $region32: #{lstm_forward.5} parent=0 // pred_region
    _
  $region33: #{lstm_forward.5} parent=0 // pred_fallthru
    _
  // Predicated region
  $region34: #{lstm_forward.5} parent=0 // pred_check
    _
  $region35: #{lstm_forward.5} parent=0 // pred_check_branch
    %231 = sbr.rel (0) target = $region37
  $region36: #{lstm_forward.5} parent=0 // pred_region
    _
  $region37: #{lstm_forward.5} parent=0 // pred_fallthru
    _

// kernel: lstm_forward.9
$region0: #{lstm_forward.9}
  #allocation0 [shape = 'u32[]', space=smem, size = 0x4, offset = 0x4, fixed_abs, tag = 'smem constant byte address 0x4 - core index']
  #allocation1 [shape = 'u32[144,128]{1,0:T(1,128)}', space=vmem, size = 0x12000, scoped, tag = 'internal scratch']
  #allocation2 [shape = 'f32[1,1]{1,0:T(1,128)S(1)}', space=vmem, size = 0x200, scoped, tag = 'scoped memory for lstm_forward.9']
  %s0 = inlined_call_operand.vmem [shape: f32[64,32], index: 0, kind: input, shape index: {}]
  %s1 = inlined_call_operand.vmem [shape: f32[64,32], index: 1, kind: input, shape index: {}]
  %s2 = inlined_call_operand.vmem [shape: f32[1,32], index: 2, kind: input, shape index: {}]
  %s3 = inlined_call_operand.vmem [shape: f32[1,32], index: 3, kind: input, shape index: {}]
  %s4 = inlined_call_operand.<no memory space> [shape: f32[1,1], index: 4, kind: input, shape index: {}]
  %s5 = inlined_call_operand.vmem [shape: f32[8,1], index: 5, kind: output, shape index: {}]
  %s6 = sld [smem:[#allocation0]]
  $region30: #{lstm_forward.9} parent=0
    _
  %s8 = ssub.s32 1, %s6
  %s9 = scalar_select 0, %s8, %s6
  %v10 = vstv %s4
  %11 = vst [vmem:[#allocation2] sm:$0x1] %v10
  // Predicated region
  $region2: #{lstm_forward.9} parent=0 // pred_check
    _
  $region3: #{lstm_forward.9} parent=0 // pred_check_branch
    %13 = sbr.rel (0) target = $region5
  $region4: #{lstm_forward.9} parent=0 // pred_region
    %s14 = scalar_lea.vmem %s0, 56
  $region5: #{lstm_forward.9} parent=0 // pred_fallthru
    _
  // Predicated region
  $region6: #{lstm_forward.9} parent=0 // pred_check
    _
  $region7: #{lstm_forward.9} parent=0 // pred_check_branch
    %16 = sbr.rel (0) target = $region9
  $region8: #{lstm_forward.9} parent=0 // pred_region
    %s17 = scalar_lea.vmem %s1, 56
  $region9: #{lstm_forward.9} parent=0 // pred_fallthru
    _
  // Predicated region
  $region10: #{lstm_forward.9} parent=0 // pred_check
    _
  $region11: #{lstm_forward.9} parent=0 // pred_check_branch
    %19 = sbr.rel (0) target = $region13
  $region12: #{lstm_forward.9} parent=0 // pred_region
    _
  $region13: #{lstm_forward.9} parent=0 // pred_fallthru
    _
  // Predicated region
  $region14: #{lstm_forward.9} parent=0 // pred_check
    _
  $region15: #{lstm_forward.9} parent=0 // pred_check_branch
    %21 = sbr.rel (0) target = $region17
  $region16: #{lstm_forward.9} parent=0 // pred_region
    _
  $region17: #{lstm_forward.9} parent=0 // pred_fallthru
    _
  // Predicated region
  $region18: #{lstm_forward.9} parent=0 // pred_check
    _
  $region19: #{lstm_forward.9} parent=0 // pred_check_branch
    %23 = sbr.rel (0) target = $region21
  $region20: #{lstm_forward.9} parent=0 // pred_region
    _
  $region21: #{lstm_forward.9} parent=0 // pred_fallthru
    _
  %s24 = scalar_lea.vmem %s0, 56
  %s25 = scalar_lea.vmem %s1, 56
  %s26 = scalar_lea.vmem %s0, 56
  %s27 = scalar_lea.vmem %s1, 56
  %v28 = vld [vmem:[%s26] sm:$0xff]
  %v29 = vld [vmem:[%s2] sm:$0x1]
  %v31 = vlaneseq
  %v32 = vshrl.u32 %v31, 7
  %v33 = vsub.s32 0, %v32
  %v34 = vrot.slane %v29, %v33
  %v36 = vmul.f32 %v28, %v34
  %vm37 = vcmask 261120
  %v38 = vsel %vm37, %v36, 0.0
  %39 = vadd.xlane.f32.xlu0 %v38
  %v40 = vpop.xlane.xlu0 %39
  %v41 = vld [vmem:[%s27] sm:$0xff]
  %v42 = vld [vmem:[%s3] sm:$0x1]
  %v44 = vlaneseq
  %v45 = vshrl.u32 %v44, 7
  %v46 = vsub.s32 0, %v45
  %v47 = vrot.slane %v42, %v46
  %v49 = vmul.f32 %v41, %v47
  %v50 = vsel %vm37, %v49, 0.0
  %51 = vadd.xlane.f32.xlu0 %v50
  %v52 = vpop.xlane.xlu0 %51
  %v53 = vadd.f32 %v40, %v52
  %v54 = vld [vmem:[#allocation2] sm:$0x1]
  %v56 = vlaneseq
  %v57 = vshrl.u32 %v56, 7
  %v58 = vsub.s32 0, %v57
  %v59 = vrot.slane %v54, %v58
  %v61 = vadd.f32 %v53, %v59
  %vm62 = vcmask 7168
  %63 = vst.msk [vmem:[%s5] sm:$0xff] %vm62, %v61
  // Predicated region
  $region22: #{lstm_forward.9} parent=0 // pred_check
    _
  $region23: #{lstm_forward.9} parent=0 // pred_check_branch
    %65 = sbr.rel (0) target = $region25
  $region24: #{lstm_forward.9} parent=0 // pred_region
    _
  $region25: #{lstm_forward.9} parent=0 // pred_fallthru
    _
  // Predicated region
  $region26: #{lstm_forward.9} parent=0 // pred_check
    _
  $region27: #{lstm_forward.9} parent=0 // pred_check_branch
    %67 = sbr.rel (0) target = $region29
  $region28: #{lstm_forward.9} parent=0 // pred_region
    _
  $region29: #{lstm_forward.9} parent=0 // pred_fallthru
    _

// kernel: lstm_forward.7
$region0: #{lstm_forward.7}
  #allocation0 [shape = 'u32[]', space=smem, size = 0x4, offset = 0x4, fixed_abs, tag = 'smem constant byte address 0x4 - core index']
  #allocation1 [shape = 'u32[144,128]{1,0:T(1,128)}', space=vmem, size = 0x12000, scoped, tag = 'internal scratch']
  %s0 = inlined_call_operand.vmem [shape: f32[64,32], index: 0, kind: input, shape index: {}]
  %s1 = inlined_call_operand.vmem [shape: f32[64,32], index: 1, kind: input, shape index: {}]
  %s2 = inlined_call_operand.vmem [shape: bf16[32,128], index: 2, kind: input, shape index: {}]
  %s3 = inlined_call_operand.vmem [shape: bf16[32,128], index: 3, kind: input, shape index: {}]
  %s4 = inlined_call_operand.vmem [shape: bf16[32,128], index: 4, kind: input, shape index: {}]
  %s5 = inlined_call_operand.vmem [shape: bf16[32,128], index: 5, kind: input, shape index: {}]
  %s6 = inlined_call_operand.vmem [shape: f32[1,128], index: 6, kind: input, shape index: {}]
  %s7 = inlined_call_operand.vmem [shape: f32[1,128], index: 7, kind: input, shape index: {}]
  %s8 = inlined_call_operand.vmem [shape: f32[64,128], index: 8, kind: output, shape index: {0}]
  %s9 = inlined_call_operand.vmem [shape: f32[64,128], index: 9, kind: output, shape index: {1}]
  %10 = xla_tuple %s8, %s9
  %s11 = sld [smem:[#allocation0]]
  $region50: #{lstm_forward.7} parent=0
    _
  %s13 = ssub.s32 1, %s11
  %s14 = scalar_select 0, %s13, %s11
  // Predicated region
  $region2: #{lstm_forward.7} parent=0 // pred_check
    _
  $region3: #{lstm_forward.7} parent=0 // pred_check_branch
    %16 = sbr.rel (0) target = $region5
  $region4: #{lstm_forward.7} parent=0 // pred_region
    _
  $region5: #{lstm_forward.7} parent=0 // pred_fallthru
    _
  // Predicated region
  $region6: #{lstm_forward.7} parent=0 // pred_check
    _
  $region7: #{lstm_forward.7} parent=0 // pred_check_branch
    %18 = sbr.rel (0) target = $region9
  $region8: #{lstm_forward.7} parent=0 // pred_region
    _
  $region9: #{lstm_forward.7} parent=0 // pred_fallthru
    _
  // Predicated region
  $region10: #{lstm_forward.7} parent=0 // pred_check
    _
  $region11: #{lstm_forward.7} parent=0 // pred_check_branch
    %20 = sbr.rel (0) target = $region13
  $region12: #{lstm_forward.7} parent=0 // pred_region
    _
  $region13: #{lstm_forward.7} parent=0 // pred_fallthru
    _
  // Predicated region
  $region14: #{lstm_forward.7} parent=0 // pred_check
    _
  $region15: #{lstm_forward.7} parent=0 // pred_check_branch
    %22 = sbr.rel (0) target = $region17
  $region16: #{lstm_forward.7} parent=0 // pred_region
    _
  $region17: #{lstm_forward.7} parent=0 // pred_fallthru
    _
  // Predicated region
  $region18: #{lstm_forward.7} parent=0 // pred_check
    _
  $region19: #{lstm_forward.7} parent=0 // pred_check_branch
    %24 = sbr.rel (0) target = $region21
  $region20: #{lstm_forward.7} parent=0 // pred_region
    _
  $region21: #{lstm_forward.7} parent=0 // pred_fallthru
    _
  // Predicated region
  $region22: #{lstm_forward.7} parent=0 // pred_check
    _
  $region23: #{lstm_forward.7} parent=0 // pred_check_branch
    %26 = sbr.rel (0) target = $region25
  $region24: #{lstm_forward.7} parent=0 // pred_region
    _
  $region25: #{lstm_forward.7} parent=0 // pred_fallthru
    _
  // Predicated region
  $region26: #{lstm_forward.7} parent=0 // pred_check
    _
  $region27: #{lstm_forward.7} parent=0 // pred_check_branch
    %28 = sbr.rel (0) target = $region29
  $region28: #{lstm_forward.7} parent=0 // pred_region
    _
  $region29: #{lstm_forward.7} parent=0 // pred_fallthru
    _
  // Predicated region
  $region30: #{lstm_forward.7} parent=0 // pred_check
    _
  $region31: #{lstm_forward.7} parent=0 // pred_check_branch
    %30 = sbr.rel (0) target = $region33
  $region32: #{lstm_forward.7} parent=0 // pred_region
    _
  $region33: #{lstm_forward.7} parent=0 // pred_fallthru
    _
  %v32 = vld [vmem:[%s0] sm:$0xff]
  %v33 = vld [vmem:[%s0 + $0x8] sm:$0xff]
  %v34 = vld [vmem:[%s0 + $0x10] sm:$0xff]
  %v35 = vld [vmem:[%s0 + $0x18] sm:$0xff]
  %v36 = vld [vmem:[%s0 + $0x20] sm:$0xff]
  %v37 = vld [vmem:[%s0 + $0x28] sm:$0xff]
  %v38 = vld [vmem:[%s0 + $0x30] sm:$0xff]
  %v39 = vld [vmem:[%s0 + $0x38] sm:$0xff]
  %v40 = vpack.c.bf16 %v33, %v32
  %v41 = vpack.c.bf16 %v35, %v34
  %v42 = vpack.c.bf16 %v37, %v36
  %v43 = vpack.c.bf16 %v39, %v38
  %v44 = vld [vmem:[%s1] sm:$0xff]
  %v45 = vld [vmem:[%s1 + $0x8] sm:$0xff]
  %v46 = vld [vmem:[%s1 + $0x10] sm:$0xff]
  %v47 = vld [vmem:[%s1 + $0x18] sm:$0xff]
  %v48 = vld [vmem:[%s1 + $0x20] sm:$0xff]
  %v49 = vld [vmem:[%s1 + $0x28] sm:$0xff]
  %v50 = vld [vmem:[%s1 + $0x30] sm:$0xff]
  %v51 = vld [vmem:[%s1 + $0x38] sm:$0xff]
  %v52 = vpack.c.bf16 %v45, %v44
  %v53 = vpack.c.bf16 %v47, %v46
  %v54 = vpack.c.bf16 %v49, %v48
  %v55 = vpack.c.bf16 %v51, %v50
  %v56 = vld [vmem:[%s2] sm:$0xf]
  %v57 = vld [vmem:[%s2 + $0x4] sm:$0xf]
  %v58 = vld [vmem:[%s2 + $0x8] sm:$0xf]
  %v59 = vld [vmem:[%s2 + $0xc] sm:$0xf]
  %v60 = vld [vmem:[%s3] sm:$0xf]
  %v61 = vld [vmem:[%s3 + $0x4] sm:$0xf]
  %v62 = vld [vmem:[%s3 + $0x8] sm:$0xf]
  %v63 = vld [vmem:[%s3 + $0xc] sm:$0xf]
  %v68 = vunpack.c.l.b16 %v60
  %v69 = vunpack.c.l.b16 %v61
  %v70 = vunpack.c.l.b16 %v62
  %v71 = vunpack.c.l.b16 %v63
  %v72 = vpack.c.b16 %v69, %v68
  %v73 = vpack.c.b16 %v71, %v70
  %vm76 = vcmask 261120
  %v78 = vsel %vm76, %v52, 0
  %v81 = vsel %vm76, %v53, 0
  %v84 = vsel %vm76, %v54, 0
  %v87 = vsel %vm76, %v55, 0
  %89 = vmatprep.subr.bf16.mxu0 0
  %90 = vmatpush1.bf16.msra.mxu0 0
  %91 = vmatprep.subr.bf16.mxu0 0
  %92 = vmatpush1.bf16.msra.mxu0 0
  %93 = vmatprep.subr.bf16.mxu0 0
  %94 = vmatpush1.bf16.msra.mxu0 0
  %95 = vmatprep.subr.bf16.mxu0 0
  %96 = vmatpush1.bf16.msra.mxu0 0
  %97 = vmatprep.subr.bf16.mxu0 0
  %98 = vmatpush1.bf16.msra.mxu0 0
  %99 = vmatprep.subr.bf16.mxu0 0
  %100 = vmatpush1.bf16.msra.mxu0 0
  %101 = vmatprep.subr.bf16.mxu0 0
  %102 = vmatpush1.bf16.msra.mxu0 %v73
  %103 = vmatprep.subr.bf16.mxu0 0
  %104 = vmatpush1.bf16.msra.mxu0 %v72
  %105 = vmatprep.subr.bf16.mxu0 0
  %106 = vmatpush2.bf16.msra.mxu0 0
  %107 = vmatprep.subr.bf16.mxu0 0
  %108 = vmatpush2.bf16.msra.mxu0 0
  %109 = vmatprep.subr.bf16.mxu0 0
  %110 = vmatpush2.bf16.msra.mxu0 0
  %111 = vmatprep.subr.bf16.mxu0 0
  %112 = vmatpush2.bf16.msra.mxu0 0
  %113 = vmatprep.subr.bf16.mxu0 0
  %114 = vmatpush2.bf16.msra.mxu0 0
  %115 = vmatprep.subr.bf16.mxu0 0
  %116 = vmatpush2.bf16.msra.mxu0 0
  %117 = vmatprep.subr.bf16.mxu0 0
  %118 = vmatpush2.bf16.msra.mxu0 0
  %119 = vmatprep.subr.bf16.mxu0 0
  %120 = vmatpush2.bf16.msra.mxu0 0
  %121 = vmatprep.mubr.bf16.mxu0 0
  %122 = vmatmul.mubr.bf16.gmra.mxu0 %v78
  %v123 = vpop.f32.mrf.mxu0
  %v124 = vadd.f32 0.0, %v123
  %v125 = vpop.f32.mrf.mxu0
  %v126 = vpop.f32.mrf.mxu0
  %v127 = vadd.f32 0.0, %v126
  %v128 = vpop.f32.mrf.mxu0
  %129 = vmatprep.mubr.bf16.mxu0 0
  %130 = vmatmul.mubr.bf16.gmra.mxu0 %v81
  %v131 = vpop.f32.mrf.mxu0
  %v132 = vadd.f32 0.0, %v131
  %v133 = vpop.f32.mrf.mxu0
  %v134 = vpop.f32.mrf.mxu0
  %v135 = vadd.f32 0.0, %v134
  %v136 = vpop.f32.mrf.mxu0
  %137 = vmatprep.mubr.bf16.mxu0 0
  %138 = vmatmul.mubr.bf16.gmra.mxu0 %v84
  %v139 = vpop.f32.mrf.mxu0
  %v140 = vadd.f32 0.0, %v139
  %v141 = vpop.f32.mrf.mxu0
  %v142 = vpop.f32.mrf.mxu0
  %v143 = vadd.f32 0.0, %v142
  %v144 = vpop.f32.mrf.mxu0
  %145 = vmatprep.mubr.bf16.mxu0 0
  %146 = vmatmul.mubr.bf16.gmra.mxu0 %v87
  %v147 = vpop.f32.mrf.mxu0
  %v148 = vadd.f32 0.0, %v147
  %v149 = vpop.f32.mrf.mxu0
  %v150 = vpop.f32.mrf.mxu0
  %v151 = vadd.f32 0.0, %v150
  %v152 = vpop.f32.mrf.mxu0
  %153 = vdwg.mxu0
  %v158 = vunpack.c.l.b16 %v56
  %v159 = vunpack.c.l.b16 %v57
  %v160 = vunpack.c.l.b16 %v58
  %v161 = vunpack.c.l.b16 %v59
  %v162 = vpack.c.b16 %v159, %v158
  %v163 = vpack.c.b16 %v161, %v160
  %v167 = vsel %vm76, %v40, 0
  %v170 = vsel %vm76, %v41, 0
  %v173 = vsel %vm76, %v42, 0
  %v176 = vsel %vm76, %v43, 0
  %178 = vmatprep.subr.bf16.mxu0 0
  %179 = vmatpush1.bf16.msra.mxu0 0
  %180 = vmatprep.subr.bf16.mxu0 0
  %181 = vmatpush1.bf16.msra.mxu0 0
  %182 = vmatprep.subr.bf16.mxu0 0
  %183 = vmatpush1.bf16.msra.mxu0 0
  %184 = vmatprep.subr.bf16.mxu0 0
  %185 = vmatpush1.bf16.msra.mxu0 0
  %186 = vmatprep.subr.bf16.mxu0 0
  %187 = vmatpush1.bf16.msra.mxu0 0
  %188 = vmatprep.subr.bf16.mxu0 0
  %189 = vmatpush1.bf16.msra.mxu0 0
  %190 = vmatprep.subr.bf16.mxu0 0
  %191 = vmatpush1.bf16.msra.mxu0 %v163
  %192 = vmatprep.subr.bf16.mxu0 0
  %193 = vmatpush1.bf16.msra.mxu0 %v162
  %194 = vmatprep.subr.bf16.mxu0 0
  %195 = vmatpush2.bf16.msra.mxu0 0
  %196 = vmatprep.subr.bf16.mxu0 0
  %197 = vmatpush2.bf16.msra.mxu0 0
  %198 = vmatprep.subr.bf16.mxu0 0
  %199 = vmatpush2.bf16.msra.mxu0 0
  %200 = vmatprep.subr.bf16.mxu0 0
  %201 = vmatpush2.bf16.msra.mxu0 0
  %202 = vmatprep.subr.bf16.mxu0 0
  %203 = vmatpush2.bf16.msra.mxu0 0
  %204 = vmatprep.subr.bf16.mxu0 0
  %205 = vmatpush2.bf16.msra.mxu0 0
  %206 = vmatprep.subr.bf16.mxu0 0
  %207 = vmatpush2.bf16.msra.mxu0 0
  %208 = vmatprep.subr.bf16.mxu0 0
  %209 = vmatpush2.bf16.msra.mxu0 0
  %210 = vmatprep.mubr.bf16.mxu0 0
  %211 = vmatmul.mubr.bf16.gmra.mxu0 %v167
  %v212 = vpop.f32.mrf.mxu0
  %v213 = vadd.f32 %v124, %v212
  %v214 = vpop.f32.mrf.mxu0
  %v215 = vpop.f32.mrf.mxu0
  %v216 = vadd.f32 %v127, %v215
  %v217 = vpop.f32.mrf.mxu0
  %218 = vmatprep.mubr.bf16.mxu0 0
  %219 = vmatmul.mubr.bf16.gmra.mxu0 %v170
  %v220 = vpop.f32.mrf.mxu0
  %v221 = vadd.f32 %v132, %v220
  %v222 = vpop.f32.mrf.mxu0
  %v223 = vpop.f32.mrf.mxu0
  %v224 = vadd.f32 %v135, %v223
  %v225 = vpop.f32.mrf.mxu0
  %226 = vmatprep.mubr.bf16.mxu0 0
  %227 = vmatmul.mubr.bf16.gmra.mxu0 %v173
  %v228 = vpop.f32.mrf.mxu0
  %v229 = vadd.f32 %v140, %v228
  %v230 = vpop.f32.mrf.mxu0
  %v231 = vpop.f32.mrf.mxu0
  %v232 = vadd.f32 %v143, %v231
  %v233 = vpop.f32.mrf.mxu0
  %234 = vmatprep.mubr.bf16.mxu0 0
  %235 = vmatmul.mubr.bf16.gmra.mxu0 %v176
  %v236 = vpop.f32.mrf.mxu0
  %v237 = vadd.f32 %v148, %v236
  %v238 = vpop.f32.mrf.mxu0
  %v239 = vpop.f32.mrf.mxu0
  %v240 = vadd.f32 %v151, %v239
  %v241 = vpop.f32.mrf.mxu0
  %242 = vdwg.mxu0
  %v243 = vld [vmem:[%s6] sm:$0x1]
  %v245 = vlaneseq
  %v246 = vshrl.u32 %v245, 7
  %v247 = vsub.s32 0, %v246
  %v248 = vrot.slane %v243, %v247
  %v250 = vadd.f32 %v213, %v248
  %v251 = vadd.f32 %v216, %v248
  %v252 = vadd.f32 %v221, %v248
  %v253 = vadd.f32 %v224, %v248
  %v254 = vadd.f32 %v229, %v248
  %v255 = vadd.f32 %v232, %v248
  %v256 = vadd.f32 %v237, %v248
  %v257 = vadd.f32 %v240, %v248
  %258 = vst [vmem:[%s8] sm:$0xff] %v250
  %259 = vst [vmem:[%s8 + $0x8] sm:$0xff] %v251
  %260 = vst [vmem:[%s8 + $0x10] sm:$0xff] %v252
  %261 = vst [vmem:[%s8 + $0x18] sm:$0xff] %v253
  %262 = vst [vmem:[%s8 + $0x20] sm:$0xff] %v254
  %263 = vst [vmem:[%s8 + $0x28] sm:$0xff] %v255
  %264 = vst [vmem:[%s8 + $0x30] sm:$0xff] %v256
  %265 = vst [vmem:[%s8 + $0x38] sm:$0xff] %v257
  %v266 = vld [vmem:[%s4] sm:$0xf]
  %v267 = vld [vmem:[%s4 + $0x4] sm:$0xf]
  %v268 = vld [vmem:[%s4 + $0x8] sm:$0xf]
  %v269 = vld [vmem:[%s4 + $0xc] sm:$0xf]
  %v270 = vld [vmem:[%s5] sm:$0xf]
  %v271 = vld [vmem:[%s5 + $0x4] sm:$0xf]
  %v272 = vld [vmem:[%s5 + $0x8] sm:$0xf]
  %v273 = vld [vmem:[%s5 + $0xc] sm:$0xf]
  %v278 = vunpack.c.l.b16 %v270
  %v279 = vunpack.c.l.b16 %v271
  %v280 = vunpack.c.l.b16 %v272
  %v281 = vunpack.c.l.b16 %v273
  %v282 = vpack.c.b16 %v279, %v278
  %v283 = vpack.c.b16 %v281, %v280
  %286 = vmatprep.subr.bf16.mxu0 0
  %287 = vmatpush1.bf16.msra.mxu0 0
  %288 = vmatprep.subr.bf16.mxu0 0
  %289 = vmatpush1.bf16.msra.mxu0 0
  %290 = vmatprep.subr.bf16.mxu0 0
  %291 = vmatpush1.bf16.msra.mxu0 0
  %292 = vmatprep.subr.bf16.mxu0 0
  %293 = vmatpush1.bf16.msra.mxu0 0
  %294 = vmatprep.subr.bf16.mxu0 0
  %295 = vmatpush1.bf16.msra.mxu0 0
  %296 = vmatprep.subr.bf16.mxu0 0
  %297 = vmatpush1.bf16.msra.mxu0 0
  %298 = vmatprep.subr.bf16.mxu0 0
  %299 = vmatpush1.bf16.msra.mxu0 %v283
  %300 = vmatprep.subr.bf16.mxu0 0
  %301 = vmatpush1.bf16.msra.mxu0 %v282
  %302 = vmatprep.subr.bf16.mxu0 0
  %303 = vmatpush2.bf16.msra.mxu0 0
  %304 = vmatprep.subr.bf16.mxu0 0
  %305 = vmatpush2.bf16.msra.mxu0 0
  %306 = vmatprep.subr.bf16.mxu0 0
  %307 = vmatpush2.bf16.msra.mxu0 0
  %308 = vmatprep.subr.bf16.mxu0 0
  %309 = vmatpush2.bf16.msra.mxu0 0
  %310 = vmatprep.subr.bf16.mxu0 0
  %311 = vmatpush2.bf16.msra.mxu0 0
  %312 = vmatprep.subr.bf16.mxu0 0
  %313 = vmatpush2.bf16.msra.mxu0 0
  %314 = vmatprep.subr.bf16.mxu0 0
  %315 = vmatpush2.bf16.msra.mxu0 0
  %316 = vmatprep.subr.bf16.mxu0 0
  %317 = vmatpush2.bf16.msra.mxu0 0
  %318 = vmatprep.mubr.bf16.mxu0 0
  %319 = vmatmul.mubr.bf16.gmra.mxu0 %v78
  %v320 = vpop.f32.mrf.mxu0
  %v321 = vadd.f32 0.0, %v320
  %v322 = vpop.f32.mrf.mxu0
  %v323 = vpop.f32.mrf.mxu0
  %v324 = vadd.f32 0.0, %v323
  %v325 = vpop.f32.mrf.mxu0
  %326 = vmatprep.mubr.bf16.mxu0 0
  %327 = vmatmul.mubr.bf16.gmra.mxu0 %v81
  %v328 = vpop.f32.mrf.mxu0
  %v329 = vadd.f32 0.0, %v328
  %v330 = vpop.f32.mrf.mxu0
  %v331 = vpop.f32.mrf.mxu0
  %v332 = vadd.f32 0.0, %v331
  %v333 = vpop.f32.mrf.mxu0
  %334 = vmatprep.mubr.bf16.mxu0 0
  %335 = vmatmul.mubr.bf16.gmra.mxu0 %v84
  %v336 = vpop.f32.mrf.mxu0
  %v337 = vadd.f32 0.0, %v336
  %v338 = vpop.f32.mrf.mxu0
  %v339 = vpop.f32.mrf.mxu0
  %v340 = vadd.f32 0.0, %v339
  %v341 = vpop.f32.mrf.mxu0
  %342 = vmatprep.mubr.bf16.mxu0 0
  %343 = vmatmul.mubr.bf16.gmra.mxu0 %v87
  %v344 = vpop.f32.mrf.mxu0
  %v345 = vadd.f32 0.0, %v344
  %v346 = vpop.f32.mrf.mxu0
  %v347 = vpop.f32.mrf.mxu0
  %v348 = vadd.f32 0.0, %v347
  %v349 = vpop.f32.mrf.mxu0
  %350 = vdwg.mxu0
  %v355 = vunpack.c.l.b16 %v266
  %v356 = vunpack.c.l.b16 %v267
  %v357 = vunpack.c.l.b16 %v268
  %v358 = vunpack.c.l.b16 %v269
  %v359 = vpack.c.b16 %v356, %v355
  %v360 = vpack.c.b16 %v358, %v357
  %363 = vmatprep.subr.bf16.mxu0 0
  %364 = vmatpush1.bf16.msra.mxu0 0
  %365 = vmatprep.subr.bf16.mxu0 0
  %366 = vmatpush1.bf16.msra.mxu0 0
  %367 = vmatprep.subr.bf16.mxu0 0
  %368 = vmatpush1.bf16.msra.mxu0 0
  %369 = vmatprep.subr.bf16.mxu0 0
  %370 = vmatpush1.bf16.msra.mxu0 0
  %371 = vmatprep.subr.bf16.mxu0 0
  %372 = vmatpush1.bf16.msra.mxu0 0
  %373 = vmatprep.subr.bf16.mxu0 0
  %374 = vmatpush1.bf16.msra.mxu0 0
  %375 = vmatprep.subr.bf16.mxu0 0
  %376 = vmatpush1.bf16.msra.mxu0 %v360
  %377 = vmatprep.subr.bf16.mxu0 0
  %378 = vmatpush1.bf16.msra.mxu0 %v359
  %379 = vmatprep.subr.bf16.mxu0 0
  %380 = vmatpush2.bf16.msra.mxu0 0
  %381 = vmatprep.subr.bf16.mxu0 0
  %382 = vmatpush2.bf16.msra.mxu0 0
  %383 = vmatprep.subr.bf16.mxu0 0
  %384 = vmatpush2.bf16.msra.mxu0 0
  %385 = vmatprep.subr.bf16.mxu0 0
  %386 = vmatpush2.bf16.msra.mxu0 0
  %387 = vmatprep.subr.bf16.mxu0 0
  %388 = vmatpush2.bf16.msra.mxu0 0
  %389 = vmatprep.subr.bf16.mxu0 0
  %390 = vmatpush2.bf16.msra.mxu0 0
  %391 = vmatprep.subr.bf16.mxu0 0
  %392 = vmatpush2.bf16.msra.mxu0 0
  %393 = vmatprep.subr.bf16.mxu0 0
  %394 = vmatpush2.bf16.msra.mxu0 0
  %395 = vmatprep.mubr.bf16.mxu0 0
  %396 = vmatmul.mubr.bf16.gmra.mxu0 %v167
  %v397 = vpop.f32.mrf.mxu0
  %v398 = vadd.f32 %v321, %v397
  %v399 = vpop.f32.mrf.mxu0
  %v400 = vpop.f32.mrf.mxu0
  %v401 = vadd.f32 %v324, %v400
  %v402 = vpop.f32.mrf.mxu0
  %403 = vmatprep.mubr.bf16.mxu0 0
  %404 = vmatmul.mubr.bf16.gmra.mxu0 %v170
  %v405 = vpop.f32.mrf.mxu0
  %v406 = vadd.f32 %v329, %v405
  %v407 = vpop.f32.mrf.mxu0
  %v408 = vpop.f32.mrf.mxu0
  %v409 = vadd.f32 %v332, %v408
  %v410 = vpop.f32.mrf.mxu0
  %411 = vmatprep.mubr.bf16.mxu0 0
  %412 = vmatmul.mubr.bf16.gmra.mxu0 %v173
  %v413 = vpop.f32.mrf.mxu0
  %v414 = vadd.f32 %v337, %v413
  %v415 = vpop.f32.mrf.mxu0
  %v416 = vpop.f32.mrf.mxu0
  %v417 = vadd.f32 %v340, %v416
  %v418 = vpop.f32.mrf.mxu0
  %419 = vmatprep.mubr.bf16.mxu0 0
  %420 = vmatmul.mubr.bf16.gmra.mxu0 %v176
  %v421 = vpop.f32.mrf.mxu0
  %v422 = vadd.f32 %v345, %v421
  %v423 = vpop.f32.mrf.mxu0
  %v424 = vpop.f32.mrf.mxu0
  %v425 = vadd.f32 %v348, %v424
  %v426 = vpop.f32.mrf.mxu0
  %427 = vdwg.mxu0
  %v428 = vld [vmem:[%s7] sm:$0x1]
  %v430 = vlaneseq
  %v431 = vshrl.u32 %v430, 7
  %v432 = vsub.s32 0, %v431
  %v433 = vrot.slane %v428, %v432
  %v435 = vadd.f32 %v398, %v433
  %v436 = vadd.f32 %v401, %v433
  %v437 = vadd.f32 %v406, %v433
  %v438 = vadd.f32 %v409, %v433
  %v439 = vadd.f32 %v414, %v433
  %v440 = vadd.f32 %v417, %v433
  %v441 = vadd.f32 %v422, %v433
  %v442 = vadd.f32 %v425, %v433
  %443 = vst [vmem:[%s9] sm:$0xff] %v435
  %444 = vst [vmem:[%s9 + $0x8] sm:$0xff] %v436
  %445 = vst [vmem:[%s9 + $0x10] sm:$0xff] %v437
  %446 = vst [vmem:[%s9 + $0x18] sm:$0xff] %v438
  %447 = vst [vmem:[%s9 + $0x20] sm:$0xff] %v439
  %448 = vst [vmem:[%s9 + $0x28] sm:$0xff] %v440
  %449 = vst [vmem:[%s9 + $0x30] sm:$0xff] %v441
  %450 = vst [vmem:[%s9 + $0x38] sm:$0xff] %v442
  // Predicated region
  $region34: #{lstm_forward.7} parent=0 // pred_check
    _
  $region35: #{lstm_forward.7} parent=0 // pred_check_branch
    %452 = sbr.rel (0) target = $region37
  $region36: #{lstm_forward.7} parent=0 // pred_region
    _
  $region37: #{lstm_forward.7} parent=0 // pred_fallthru
    _
  // Predicated region
  $region38: #{lstm_forward.7} parent=0 // pred_check
    _
  $region39: #{lstm_forward.7} parent=0 // pred_check_branch
    %454 = sbr.rel (0) target = $region41
  $region40: #{lstm_forward.7} parent=0 // pred_region
    _
  $region41: #{lstm_forward.7} parent=0 // pred_fallthru
    _
  // Predicated region
  $region42: #{lstm_forward.7} parent=0 // pred_check
    _
  $region43: #{lstm_forward.7} parent=0 // pred_check_branch
    %456 = sbr.rel (0) target = $region45
  $region44: #{lstm_forward.7} parent=0 // pred_region
    _
  $region45: #{lstm_forward.7} parent=0 // pred_fallthru
    _
  // Predicated region
  $region46: #{lstm_forward.7} parent=0 // pred_check
    _
  $region47: #{lstm_forward.7} parent=0 // pred_check_branch
    %458 = sbr.rel (0) target = $region49
  $region48: #{lstm_forward.7} parent=0 // pred_region
    _
  $region49: #{lstm_forward.7} parent=0 // pred_fallthru
    _

// kernel: lstm_forward.6
$region0: #{lstm_forward.6}
  #allocation0 [shape = 'u32[]', space=smem, size = 0x4, offset = 0x4, fixed_abs, tag = 'smem constant byte address 0x4 - core index']
  #allocation1 [shape = 'u32[144,128]{1,0:T(1,128)}', space=vmem, size = 0x12000, scoped, tag = 'internal scratch']
  #allocation2 [shape = 'f32[8,32]{1,0:T(8,128)}', space=vmem, size = 0x1000, scoped, tag = 'scratch operand']
  #allocation3 [shape = 'f32[8,32]{1,0:T(8,128)}', space=vmem, size = 0x1000, scoped, tag = 'scratch operand']
  #allocation4 [shape = 'f32[8,32]{1,0:T(8,128)}', space=vmem, size = 0x1000, scoped, tag = 'scratch operand']
  #allocation5 [shape = 'f32[8,32]{1,0:T(8,128)}', space=vmem, size = 0x1000, scoped, tag = 'scratch operand']
  %s0 = inlined_call_operand.vmem [shape: f32[64,128], index: 0, kind: input, shape index: {}]
  %s1 = inlined_call_operand.vmem [shape: f32[64,128], index: 1, kind: input, shape index: {}]
  %s2 = inlined_call_operand.vmem [shape: bf16[32,128], index: 2, kind: input, shape index: {}]
  %s3 = inlined_call_operand.vmem [shape: bf16[32,128], index: 3, kind: input, shape index: {}]
  %s4 = inlined_call_operand.vmem [shape: f32[64,32], index: 4, kind: output, shape index: {0}]
  %s5 = inlined_call_operand.vmem [shape: f32[64,32], index: 5, kind: output, shape index: {1}]
  %6 = xla_tuple %s4, %s5
  %s7 = sld [smem:[#allocation0]]
  $region38: #{lstm_forward.6} parent=0
    _
  %s9 = ssub.s32 1, %s7
  %s10 = scalar_select 0, %s9, %s7
  // Predicated region
  $region2: #{lstm_forward.6} parent=0 // pred_check
    _
  $region3: #{lstm_forward.6} parent=0 // pred_check_branch
    %12 = sbr.rel (0) target = $region5
  $region4: #{lstm_forward.6} parent=0 // pred_region
    _
  $region5: #{lstm_forward.6} parent=0 // pred_fallthru
    _
  // Predicated region
  $region6: #{lstm_forward.6} parent=0 // pred_check
    _
  $region7: #{lstm_forward.6} parent=0 // pred_check_branch
    %14 = sbr.rel (0) target = $region9
  $region8: #{lstm_forward.6} parent=0 // pred_region
    %s15 = ssub.s32 0, 0
    %s16 = smul.u32 8, %s15
    %p17 = scmp.lt.s32.totalorder %s16, 7
    %s18 = scalar_select %p17, %s16, 7
    %s19 = smul.addr %s18, 8
    %s20 = scalar_lea.vmem %s1, %s19
    %s21 = ssub.s32 0, 0
    %s22 = smul.u32 8, %s21
  $region9: #{lstm_forward.6} parent=0 // pred_fallthru
    _
  // Predicated region
  $region10: #{lstm_forward.6} parent=0 // pred_check
    _
  $region11: #{lstm_forward.6} parent=0 // pred_check_branch
    %24 = sbr.rel (0) target = $region13
  $region12: #{lstm_forward.6} parent=0 // pred_region
    _
  $region13: #{lstm_forward.6} parent=0 // pred_fallthru
    _
  // Predicated region
  $region14: #{lstm_forward.6} parent=0 // pred_check
    _
  $region15: #{lstm_forward.6} parent=0 // pred_check_branch
    %26 = sbr.rel (0) target = $region17
  $region16: #{lstm_forward.6} parent=0 // pred_region
    _
  $region17: #{lstm_forward.6} parent=0 // pred_fallthru
    _
  %s27 = ssub.s32 0, 0
  %s28 = smul.u32 8, %s27
  %p29 = scmp.lt.s32.totalorder %s28, 7
  %s30 = scalar_select %p29, %s28, 7
  %s31 = smul.addr %s30, 8
  %s32 = scalar_lea.vmem %s1, %s31
  %s33 = ssub.s32 0, 0
  %s34 = smul.u32 8, %s33
  %p35 = scmp.lt.s32.totalorder %s34, 7
  %s36 = scalar_select %p35, %s34, 7
  %s37 = smul.addr %s36, 8
  %s38 = scalar_lea.vmem %s5, %s37
  %s39 = ssub.s32 0, 0
  %s40 = smul.u32 8, %s39
  %p41 = scmp.lt.s32.totalorder %s40, 7
  %s42 = scalar_select %p41, %s40, 7
  %s43 = smul.addr %s42, 8
  %s44 = scalar_lea.vmem %s1, %s43
  %s45 = ssub.s32 0, 0
  %s46 = smul.u32 8, %s45
  %s47 = ssub.s32 0, 0
  %s48 = smul.u32 8, %s47
  %p49 = scmp.lt.s32.totalorder %s48, 7
  %s50 = scalar_select %p49, %s48, 7
  %s51 = smul.addr %s50, 8
  %s52 = scalar_lea.vmem %s5, %s51
  %s53 = ssub.s32 0, 0
  %s54 = smul.u32 8, %s53
  %p56 = scmp.eq.s32.totalorder 0, 0
  // Predicated region
  $region18: #{lstm_forward.6} parent=0 // pred_check
    %p57 = pneg %p56
  $region19: #{lstm_forward.6} parent=0 // pred_check_branch
    %59 = sbr.rel (%p57) target = $region21
  $region20: #{lstm_forward.6} parent=0 // pred_region
    %vm60 = vcmask 261120
    %61 = vst.msk [vmem:[#allocation2] sm:$0xff] %vm60, 0.0
    %62 = vst.msk [vmem:[#allocation3] sm:$0xff] %vm60, 0.0
    %63 = vst.msk [vmem:[#allocation4] sm:$0xff] %vm60, 0.0
    %64 = vst.msk [vmem:[#allocation5] sm:$0xff] %vm60, 0.0
  $region21: #{lstm_forward.6} parent=0 // pred_fallthru
    _
  %v65 = vld [vmem:[%s2] sm:$0xf]
  %v66 = vld [vmem:[%s2 + $0x4] sm:$0xf]
  %v67 = vld [vmem:[%s2 + $0x8] sm:$0xf]
  %v68 = vld [vmem:[%s2 + $0xc] sm:$0xf]
  %v69 = vld [vmem:[%s3] sm:$0xf]
  %v70 = vld [vmem:[%s3 + $0x4] sm:$0xf]
  %v71 = vld [vmem:[%s3 + $0x8] sm:$0xf]
  %v72 = vld [vmem:[%s3 + $0xc] sm:$0xf]
  %v73 = vld [vmem:[%s0] sm:$0xff]
  %v74 = vld [vmem:[#allocation2] sm:$0xff]
  %v75 = vpack.c.bf16 %v74, %v74
  %v80 = vunpack.c.l.b16 %v65
  %v81 = vunpack.c.l.b16 %v66
  %v82 = vunpack.c.l.b16 %v67
  %v83 = vunpack.c.l.b16 %v68
  %v84 = vpack.c.b16 %v81, %v80
  %v85 = vpack.c.b16 %v83, %v82
  %vm88 = vcmask 261120
  %v90 = vsel %vm88, %v75, 0
  %92 = vmatprep.subr.bf16.mxu0 0
  %93 = vmatpush1.bf16.msra.mxu0 0
  %94 = vmatprep.subr.bf16.mxu0 0
  %95 = vmatpush1.bf16.msra.mxu0 0
  %96 = vmatprep.subr.bf16.mxu0 0
  %97 = vmatpush1.bf16.msra.mxu0 0
  %98 = vmatprep.subr.bf16.mxu0 0
  %99 = vmatpush1.bf16.msra.mxu0 0
  %100 = vmatprep.subr.bf16.mxu0 0
  %101 = vmatpush1.bf16.msra.mxu0 0
  %102 = vmatprep.subr.bf16.mxu0 0
  %103 = vmatpush1.bf16.msra.mxu0 0
  %104 = vmatprep.subr.bf16.mxu0 0
  %105 = vmatpush1.bf16.msra.mxu0 %v85
  %106 = vmatprep.subr.bf16.mxu0 0
  %107 = vmatpush1.bf16.msra.mxu0 %v84
  %108 = vmatprep.subr.bf16.mxu0 0
  %109 = vmatpush2.bf16.msra.mxu0 0
  %110 = vmatprep.subr.bf16.mxu0 0
  %111 = vmatpush2.bf16.msra.mxu0 0
  %112 = vmatprep.subr.bf16.mxu0 0
  %113 = vmatpush2.bf16.msra.mxu0 0
  %114 = vmatprep.subr.bf16.mxu0 0
  %115 = vmatpush2.bf16.msra.mxu0 0
  %116 = vmatprep.subr.bf16.mxu0 0
  %117 = vmatpush2.bf16.msra.mxu0 0
  %118 = vmatprep.subr.bf16.mxu0 0
  %119 = vmatpush2.bf16.msra.mxu0 0
  %120 = vmatprep.subr.bf16.mxu0 0
  %121 = vmatpush2.bf16.msra.mxu0 0
  %122 = vmatprep.subr.bf16.mxu0 0
  %123 = vmatpush2.bf16.msra.mxu0 0
  %124 = vmatprep.mubr.bf16.mxu0 0
  %125 = vmatmul.mubr.bf16.gmra.mxu0 %v90
  %v126 = vpop.f32.mrf.mxu0
  %v127 = vadd.f32 0.0, %v126
  %v128 = vpop.f32.mrf.mxu0
  %v129 = vpop.f32.mrf.mxu0
  %v130 = vpop.f32.mrf.mxu0
  %131 = vdwg.mxu0
  %v132 = vadd.f32 %v73, %v127
  %v133 = vld [vmem:[#allocation3] sm:$0xff]
  %v134 = vxor.u32 %v132, 2147483648
  %v135 = vmul.f32 %v134, 1.442695
  %v136 = vpow.pop %v135
  %v137 = vadd.f32 %v136, 1.0
  %v138 = vrcp.pop %v137
  %v139 = vmul.f32 1.0, %v138
  %v140 = vtanh.pop %v132
  %142 = vrot.lane.b32.xlu0 %v133, 32
  %v143 = vpop.permute.xlu0 %142
  %v145 = vmul.f32 %v139, %v143
  %147 = vrot.lane.b32.xlu0 %v140, 64
  %v148 = vpop.permute.xlu0 %147
  %v150 = vmul.f32 %v139, %v148
  %152 = vrot.lane.b32.xlu0 %v150, 32
  %v153 = vpop.permute.xlu0 %152
  %v155 = vadd.f32 %v145, %v153
  %v156 = vtanh.pop %v155
  %158 = vrot.lane.b32.xlu0 %v156, 64
  %v159 = vpop.permute.xlu0 %158
  %v161 = vmul.f32 %v139, %v159
  %163 = vrot.lane.b32.xlu0 %v161, 32
  %v164 = vpop.permute.xlu0 %163
  %166 = vst.msk [vmem:[#allocation2] sm:$0xff] %vm88, %v164
  %168 = vrot.lane.b32.xlu0 %v155, 96
  %v169 = vpop.permute.xlu0 %168
  %171 = vst.msk [vmem:[#allocation3] sm:$0xff] %vm88, %v169
  %172 = vst.msk [vmem:[%s4] sm:$0xff] %vm88, %v164
  %s173 = scalar_lea.vmem %s44, 56
  %v174 = vld [vmem:[%s173] sm:$0xff]
  %v175 = vld [vmem:[#allocation4] sm:$0xff]
  %v176 = vpack.c.bf16 %v175, %v175
  %v181 = vunpack.c.l.b16 %v69
  %v182 = vunpack.c.l.b16 %v70
  %v183 = vunpack.c.l.b16 %v71
  %v184 = vunpack.c.l.b16 %v72
  %v185 = vpack.c.b16 %v182, %v181
  %v186 = vpack.c.b16 %v184, %v183
  %v190 = vsel %vm88, %v176, 0
  %192 = vmatprep.subr.bf16.mxu0 0
  %193 = vmatpush1.bf16.msra.mxu0 0
  %194 = vmatprep.subr.bf16.mxu0 0
  %195 = vmatpush1.bf16.msra.mxu0 0
  %196 = vmatprep.subr.bf16.mxu0 0
  %197 = vmatpush1.bf16.msra.mxu0 0
  %198 = vmatprep.subr.bf16.mxu0 0
  %199 = vmatpush1.bf16.msra.mxu0 0
  %200 = vmatprep.subr.bf16.mxu0 0
  %201 = vmatpush1.bf16.msra.mxu0 0
  %202 = vmatprep.subr.bf16.mxu0 0
  %203 = vmatpush1.bf16.msra.mxu0 0
  %204 = vmatprep.subr.bf16.mxu0 0
  %205 = vmatpush1.bf16.msra.mxu0 %v186
  %206 = vmatprep.subr.bf16.mxu0 0
  %207 = vmatpush1.bf16.msra.mxu0 %v185
  %208 = vmatprep.subr.bf16.mxu0 0
  %209 = vmatpush2.bf16.msra.mxu0 0
  %210 = vmatprep.subr.bf16.mxu0 0
  %211 = vmatpush2.bf16.msra.mxu0 0
  %212 = vmatprep.subr.bf16.mxu0 0
  %213 = vmatpush2.bf16.msra.mxu0 0
  %214 = vmatprep.subr.bf16.mxu0 0
  %215 = vmatpush2.bf16.msra.mxu0 0
  %216 = vmatprep.subr.bf16.mxu0 0
  %217 = vmatpush2.bf16.msra.mxu0 0
  %218 = vmatprep.subr.bf16.mxu0 0
  %219 = vmatpush2.bf16.msra.mxu0 0
  %220 = vmatprep.subr.bf16.mxu0 0
  %221 = vmatpush2.bf16.msra.mxu0 0
  %222 = vmatprep.subr.bf16.mxu0 0
  %223 = vmatpush2.bf16.msra.mxu0 0
  %224 = vmatprep.mubr.bf16.mxu0 0
  %225 = vmatmul.mubr.bf16.gmra.mxu0 %v190
  %v226 = vpop.f32.mrf.mxu0
  %v227 = vadd.f32 0.0, %v226
  %v228 = vpop.f32.mrf.mxu0
  %v229 = vpop.f32.mrf.mxu0
  %v230 = vpop.f32.mrf.mxu0
  %231 = vdwg.mxu0
  %v232 = vadd.f32 %v174, %v227
  %v233 = vld [vmem:[#allocation5] sm:$0xff]
  %v234 = vxor.u32 %v232, 2147483648
  %v235 = vmul.f32 %v234, 1.442695
  %v236 = vpow.pop %v235
  %v237 = vadd.f32 %v236, 1.0
  %v238 = vrcp.pop %v237
  %v239 = vmul.f32 1.0, %v238
  %v240 = vtanh.pop %v232
  %242 = vrot.lane.b32.xlu0 %v233, 32
  %v243 = vpop.permute.xlu0 %242
  %v245 = vmul.f32 %v239, %v243
  %247 = vrot.lane.b32.xlu0 %v240, 64
  %v248 = vpop.permute.xlu0 %247
  %v250 = vmul.f32 %v239, %v248
  %252 = vrot.lane.b32.xlu0 %v250, 32
  %v253 = vpop.permute.xlu0 %252
  %v255 = vadd.f32 %v245, %v253
  %v256 = vtanh.pop %v255
  %258 = vrot.lane.b32.xlu0 %v256, 64
  %v259 = vpop.permute.xlu0 %258
  %v261 = vmul.f32 %v239, %v259
  %263 = vrot.lane.b32.xlu0 %v261, 32
  %v264 = vpop.permute.xlu0 %263
  %266 = vst.msk [vmem:[#allocation4] sm:$0xff] %vm88, %v264
  %268 = vrot.lane.b32.xlu0 %v255, 96
  %v269 = vpop.permute.xlu0 %268
  %271 = vst.msk [vmem:[#allocation5] sm:$0xff] %vm88, %v269
  %s272 = scalar_lea.vmem %s52, 56
  %273 = vst.msk [vmem:[%s272] sm:$0xff] %vm88, %v264
  %s274 = scalar_lea.vmem %s0, 8
  %v275 = vld [vmem:[%s274] sm:$0xff]
  %v276 = vld [vmem:[#allocation2] sm:$0xff]
  %v277 = vpack.c.bf16 %v276, %v276
  %v279 = vsel %vm88, %v277, 0
  %281 = vmatprep.subr.bf16.mxu0 0
  %282 = vmatpush1.bf16.msra.mxu0 0
  %283 = vmatprep.subr.bf16.mxu0 0
  %284 = vmatpush1.bf16.msra.mxu0 0
  %285 = vmatprep.subr.bf16.mxu0 0
  %286 = vmatpush1.bf16.msra.mxu0 0
  %287 = vmatprep.subr.bf16.mxu0 0
  %288 = vmatpush1.bf16.msra.mxu0 0
  %289 = vmatprep.subr.bf16.mxu0 0
  %290 = vmatpush1.bf16.msra.mxu0 0
  %291 = vmatprep.subr.bf16.mxu0 0
  %292 = vmatpush1.bf16.msra.mxu0 0
  %293 = vmatprep.subr.bf16.mxu0 0
  %294 = vmatpush1.bf16.msra.mxu0 %v85
  %295 = vmatprep.subr.bf16.mxu0 0
  %296 = vmatpush1.bf16.msra.mxu0 %v84
  %297 = vmatprep.subr.bf16.mxu0 0
  %298 = vmatpush2.bf16.msra.mxu0 0
  %299 = vmatprep.subr.bf16.mxu0 0
  %300 = vmatpush2.bf16.msra.mxu0 0
  %301 = vmatprep.subr.bf16.mxu0 0
  %302 = vmatpush2.bf16.msra.mxu0 0
  %303 = vmatprep.subr.bf16.mxu0 0
  %304 = vmatpush2.bf16.msra.mxu0 0
  %305 = vmatprep.subr.bf16.mxu0 0
  %306 = vmatpush2.bf16.msra.mxu0 0
  %307 = vmatprep.subr.bf16.mxu0 0
  %308 = vmatpush2.bf16.msra.mxu0 0
  %309 = vmatprep.subr.bf16.mxu0 0
  %310 = vmatpush2.bf16.msra.mxu0 0
  %311 = vmatprep.subr.bf16.mxu0 0
  %312 = vmatpush2.bf16.msra.mxu0 0
  %313 = vmatprep.mubr.bf16.mxu0 0
  %314 = vmatmul.mubr.bf16.gmra.mxu0 %v279
  %v315 = vpop.f32.mrf.mxu0
  %v316 = vadd.f32 0.0, %v315
  %v317 = vpop.f32.mrf.mxu0
  %v318 = vpop.f32.mrf.mxu0
  %v319 = vpop.f32.mrf.mxu0
  %320 = vdwg.mxu0
  %v321 = vadd.f32 %v275, %v316
  %v322 = vld [vmem:[#allocation3] sm:$0xff]
  %v323 = vxor.u32 %v321, 2147483648
  %v324 = vmul.f32 %v323, 1.442695
  %v325 = vpow.pop %v324
  %v326 = vadd.f32 %v325, 1.0
  %v327 = vrcp.pop %v326
  %v328 = vmul.f32 1.0, %v327
  %v329 = vtanh.pop %v321
  %331 = vrot.lane.b32.xlu0 %v322, 32
  %v332 = vpop.permute.xlu0 %331
  %v334 = vmul.f32 %v328, %v332
  %336 = vrot.lane.b32.xlu0 %v329, 64
  %v337 = vpop.permute.xlu0 %336
  %v339 = vmul.f32 %v328, %v337
  %341 = vrot.lane.b32.xlu0 %v339, 32
  %v342 = vpop.permute.xlu0 %341
  %v344 = vadd.f32 %v334, %v342
  %v345 = vtanh.pop %v344
  %347 = vrot.lane.b32.xlu0 %v345, 64
  %v348 = vpop.permute.xlu0 %347
  %v350 = vmul.f32 %v328, %v348
  %352 = vrot.lane.b32.xlu0 %v350, 32
  %v353 = vpop.permute.xlu0 %352
  %355 = vst.msk [vmem:[#allocation2] sm:$0xff] %vm88, %v353
  %357 = vrot.lane.b32.xlu0 %v344, 96
  %v358 = vpop.permute.xlu0 %357
  %360 = vst.msk [vmem:[#allocation3] sm:$0xff] %vm88, %v358
  %s361 = scalar_lea.vmem %s4, 8
  %362 = vst.msk [vmem:[%s361] sm:$0xff] %vm88, %v353
  %s363 = scalar_lea.vmem %s44, 48
  %v364 = vld [vmem:[%s363] sm:$0xff]
  %v365 = vld [vmem:[#allocation4] sm:$0xff]
  %v366 = vpack.c.bf16 %v365, %v365
  %v368 = vsel %vm88, %v366, 0
  %370 = vmatprep.subr.bf16.mxu0 0
  %371 = vmatpush1.bf16.msra.mxu0 0
  %372 = vmatprep.subr.bf16.mxu0 0
  %373 = vmatpush1.bf16.msra.mxu0 0
  %374 = vmatprep.subr.bf16.mxu0 0
  %375 = vmatpush1.bf16.msra.mxu0 0
  %376 = vmatprep.subr.bf16.mxu0 0
  %377 = vmatpush1.bf16.msra.mxu0 0
  %378 = vmatprep.subr.bf16.mxu0 0
  %379 = vmatpush1.bf16.msra.mxu0 0
  %380 = vmatprep.subr.bf16.mxu0 0
  %381 = vmatpush1.bf16.msra.mxu0 0
  %382 = vmatprep.subr.bf16.mxu0 0
  %383 = vmatpush1.bf16.msra.mxu0 %v186
  %384 = vmatprep.subr.bf16.mxu0 0
  %385 = vmatpush1.bf16.msra.mxu0 %v185
  %386 = vmatprep.subr.bf16.mxu0 0
  %387 = vmatpush2.bf16.msra.mxu0 0
  %388 = vmatprep.subr.bf16.mxu0 0
  %389 = vmatpush2.bf16.msra.mxu0 0
  %390 = vmatprep.subr.bf16.mxu0 0
  %391 = vmatpush2.bf16.msra.mxu0 0
  %392 = vmatprep.subr.bf16.mxu0 0
  %393 = vmatpush2.bf16.msra.mxu0 0
  %394 = vmatprep.subr.bf16.mxu0 0
  %395 = vmatpush2.bf16.msra.mxu0 0
  %396 = vmatprep.subr.bf16.mxu0 0
  %397 = vmatpush2.bf16.msra.mxu0 0
  %398 = vmatprep.subr.bf16.mxu0 0
  %399 = vmatpush2.bf16.msra.mxu0 0
  %400 = vmatprep.subr.bf16.mxu0 0
  %401 = vmatpush2.bf16.msra.mxu0 0
  %402 = vmatprep.mubr.bf16.mxu0 0
  %403 = vmatmul.mubr.bf16.gmra.mxu0 %v368
  %v404 = vpop.f32.mrf.mxu0
  %v405 = vadd.f32 0.0, %v404
  %v406 = vpop.f32.mrf.mxu0
  %v407 = vpop.f32.mrf.mxu0
  %v408 = vpop.f32.mrf.mxu0
  %409 = vdwg.mxu0
  %v410 = vadd.f32 %v364, %v405
  %v411 = vld [vmem:[#allocation5] sm:$0xff]
  %v412 = vxor.u32 %v410, 2147483648
  %v413 = vmul.f32 %v412, 1.442695
  %v414 = vpow.pop %v413
  %v415 = vadd.f32 %v414, 1.0
  %v416 = vrcp.pop %v415
  %v417 = vmul.f32 1.0, %v416
  %v418 = vtanh.pop %v410
  %420 = vrot.lane.b32.xlu0 %v411, 32
  %v421 = vpop.permute.xlu0 %420
  %v423 = vmul.f32 %v417, %v421
  %425 = vrot.lane.b32.xlu0 %v418, 64
  %v426 = vpop.permute.xlu0 %425
  %v428 = vmul.f32 %v417, %v426
  %430 = vrot.lane.b32.xlu0 %v428, 32
  %v431 = vpop.permute.xlu0 %430
  %v433 = vadd.f32 %v423, %v431
  %v434 = vtanh.pop %v433
  %436 = vrot.lane.b32.xlu0 %v434, 64
  %v437 = vpop.permute.xlu0 %436
  %v439 = vmul.f32 %v417, %v437
  %441 = vrot.lane.b32.xlu0 %v439, 32
  %v442 = vpop.permute.xlu0 %441
  %444 = vst.msk [vmem:[#allocation4] sm:$0xff] %vm88, %v442
  %446 = vrot.lane.b32.xlu0 %v433, 96
  %v447 = vpop.permute.xlu0 %446
  %449 = vst.msk [vmem:[#allocation5] sm:$0xff] %vm88, %v447
  %s450 = scalar_lea.vmem %s52, 48
  %451 = vst.msk [vmem:[%s450] sm:$0xff] %vm88, %v442
  %s452 = scalar_lea.vmem %s0, 16
  %v453 = vld [vmem:[%s452] sm:$0xff]
  %v454 = vld [vmem:[#allocation2] sm:$0xff]
  %v455 = vpack.c.bf16 %v454, %v454
  %v457 = vsel %vm88, %v455, 0
  %459 = vmatprep.subr.bf16.mxu0 0
  %460 = vmatpush1.bf16.msra.mxu0 0
  %461 = vmatprep.subr.bf16.mxu0 0
  %462 = vmatpush1.bf16.msra.mxu0 0
  %463 = vmatprep.subr.bf16.mxu0 0
  %464 = vmatpush1.bf16.msra.mxu0 0
  %465 = vmatprep.subr.bf16.mxu0 0
  %466 = vmatpush1.bf16.msra.mxu0 0
  %467 = vmatprep.subr.bf16.mxu0 0
  %468 = vmatpush1.bf16.msra.mxu0 0
  %469 = vmatprep.subr.bf16.mxu0 0
  %470 = vmatpush1.bf16.msra.mxu0 0
  %471 = vmatprep.subr.bf16.mxu0 0
  %472 = vmatpush1.bf16.msra.mxu0 %v85
  %473 = vmatprep.subr.bf16.mxu0 0
  %474 = vmatpush1.bf16.msra.mxu0 %v84
  %475 = vmatprep.subr.bf16.mxu0 0
  %476 = vmatpush2.bf16.msra.mxu0 0
  %477 = vmatprep.subr.bf16.mxu0 0
  %478 = vmatpush2.bf16.msra.mxu0 0
  %479 = vmatprep.subr.bf16.mxu0 0
  %480 = vmatpush2.bf16.msra.mxu0 0
  %481 = vmatprep.subr.bf16.mxu0 0
  %482 = vmatpush2.bf16.msra.mxu0 0
  %483 = vmatprep.subr.bf16.mxu0 0
  %484 = vmatpush2.bf16.msra.mxu0 0
  %485 = vmatprep.subr.bf16.mxu0 0
  %486 = vmatpush2.bf16.msra.mxu0 0
  %487 = vmatprep.subr.bf16.mxu0 0
  %488 = vmatpush2.bf16.msra.mxu0 0
  %489 = vmatprep.subr.bf16.mxu0 0
  %490 = vmatpush2.bf16.msra.mxu0 0
  %491 = vmatprep.mubr.bf16.mxu0 0
  %492 = vmatmul.mubr.bf16.gmra.mxu0 %v457
  %v493 = vpop.f32.mrf.mxu0
  %v494 = vadd.f32 0.0, %v493
  %v495 = vpop.f32.mrf.mxu0
  %v496 = vpop.f32.mrf.mxu0
  %v497 = vpop.f32.mrf.mxu0
  %498 = vdwg.mxu0
  %v499 = vadd.f32 %v453, %v494
  %v500 = vld [vmem:[#allocation3] sm:$0xff]
  %v501 = vxor.u32 %v499, 2147483648
  %v502 = vmul.f32 %v501, 1.442695
  %v503 = vpow.pop %v502
  %v504 = vadd.f32 %v503, 1.0
  %v505 = vrcp.pop %v504
  %v506 = vmul.f32 1.0, %v505
  %v507 = vtanh.pop %v499
  %509 = vrot.lane.b32.xlu0 %v500, 32
  %v510 = vpop.permute.xlu0 %509
  %v512 = vmul.f32 %v506, %v510
  %514 = vrot.lane.b32.xlu0 %v507, 64
  %v515 = vpop.permute.xlu0 %514
  %v517 = vmul.f32 %v506, %v515
  %519 = vrot.lane.b32.xlu0 %v517, 32
  %v520 = vpop.permute.xlu0 %519
  %v522 = vadd.f32 %v512, %v520
  %v523 = vtanh.pop %v522
  %525 = vrot.lane.b32.xlu0 %v523, 64
  %v526 = vpop.permute.xlu0 %525
  %v528 = vmul.f32 %v506, %v526
  %530 = vrot.lane.b32.xlu0 %v528, 32
  %v531 = vpop.permute.xlu0 %530
  %533 = vst.msk [vmem:[#allocation2] sm:$0xff] %vm88, %v531
  %535 = vrot.lane.b32.xlu0 %v522, 96
  %v536 = vpop.permute.xlu0 %535
  %538 = vst.msk [vmem:[#allocation3] sm:$0xff] %vm88, %v536
  %s539 = scalar_lea.vmem %s4, 16
  %540 = vst.msk [vmem:[%s539] sm:$0xff] %vm88, %v531
  %s541 = scalar_lea.vmem %s44, 40
  %v542 = vld [vmem:[%s541] sm:$0xff]
  %v543 = vld [vmem:[#allocation4] sm:$0xff]
  %v544 = vpack.c.bf16 %v543, %v543
  %v546 = vsel %vm88, %v544, 0
  %548 = vmatprep.subr.bf16.mxu0 0
  %549 = vmatpush1.bf16.msra.mxu0 0
  %550 = vmatprep.subr.bf16.mxu0 0
  %551 = vmatpush1.bf16.msra.mxu0 0
  %552 = vmatprep.subr.bf16.mxu0 0
  %553 = vmatpush1.bf16.msra.mxu0 0
  %554 = vmatprep.subr.bf16.mxu0 0
  %555 = vmatpush1.bf16.msra.mxu0 0
  %556 = vmatprep.subr.bf16.mxu0 0
  %557 = vmatpush1.bf16.msra.mxu0 0
  %558 = vmatprep.subr.bf16.mxu0 0
  %559 = vmatpush1.bf16.msra.mxu0 0
  %560 = vmatprep.subr.bf16.mxu0 0
  %561 = vmatpush1.bf16.msra.mxu0 %v186
  %562 = vmatprep.subr.bf16.mxu0 0
  %563 = vmatpush1.bf16.msra.mxu0 %v185
  %564 = vmatprep.subr.bf16.mxu0 0
  %565 = vmatpush2.bf16.msra.mxu0 0
  %566 = vmatprep.subr.bf16.mxu0 0
  %567 = vmatpush2.bf16.msra.mxu0 0
  %568 = vmatprep.subr.bf16.mxu0 0
  %569 = vmatpush2.bf16.msra.mxu0 0
  %570 = vmatprep.subr.bf16.mxu0 0
  %571 = vmatpush2.bf16.msra.mxu0 0
  %572 = vmatprep.subr.bf16.mxu0 0
  %573 = vmatpush2.bf16.msra.mxu0 0
  %574 = vmatprep.subr.bf16.mxu0 0
  %575 = vmatpush2.bf16.msra.mxu0 0
  %576 = vmatprep.subr.bf16.mxu0 0
  %577 = vmatpush2.bf16.msra.mxu0 0
  %578 = vmatprep.subr.bf16.mxu0 0
  %579 = vmatpush2.bf16.msra.mxu0 0
  %580 = vmatprep.mubr.bf16.mxu0 0
  %581 = vmatmul.mubr.bf16.gmra.mxu0 %v546
  %v582 = vpop.f32.mrf.mxu0
  %v583 = vadd.f32 0.0, %v582
  %v584 = vpop.f32.mrf.mxu0
  %v585 = vpop.f32.mrf.mxu0
  %v586 = vpop.f32.mrf.mxu0
  %587 = vdwg.mxu0
  %v588 = vadd.f32 %v542, %v583
  %v589 = vld [vmem:[#allocation5] sm:$0xff]
  %v590 = vxor.u32 %v588, 2147483648
  %v591 = vmul.f32 %v590, 1.442695
  %v592 = vpow.pop %v591
  %v593 = vadd.f32 %v592, 1.0
  %v594 = vrcp.pop %v593
  %v595 = vmul.f32 1.0, %v594
  %v596 = vtanh.pop %v588
  %598 = vrot.lane.b32.xlu0 %v589, 32
  %v599 = vpop.permute.xlu0 %598
  %v601 = vmul.f32 %v595, %v599
  %603 = vrot.lane.b32.xlu0 %v596, 64
  %v604 = vpop.permute.xlu0 %603
  %v606 = vmul.f32 %v595, %v604
  %608 = vrot.lane.b32.xlu0 %v606, 32
  %v609 = vpop.permute.xlu0 %608
  %v611 = vadd.f32 %v601, %v609
  %v612 = vtanh.pop %v611
  %614 = vrot.lane.b32.xlu0 %v612, 64
  %v615 = vpop.permute.xlu0 %614
  %v617 = vmul.f32 %v595, %v615
  %619 = vrot.lane.b32.xlu0 %v617, 32
  %v620 = vpop.permute.xlu0 %619
  %622 = vst.msk [vmem:[#allocation4] sm:$0xff] %vm88, %v620
  %624 = vrot.lane.b32.xlu0 %v611, 96
  %v625 = vpop.permute.xlu0 %624
  %627 = vst.msk [vmem:[#allocation5] sm:$0xff] %vm88, %v625
  %s628 = scalar_lea.vmem %s52, 40
  %629 = vst.msk [vmem:[%s628] sm:$0xff] %vm88, %v620
  %s630 = scalar_lea.vmem %s0, 24
  %v631 = vld [vmem:[%s630] sm:$0xff]
  %v632 = vld [vmem:[#allocation2] sm:$0xff]
  %v633 = vpack.c.bf16 %v632, %v632
  %v635 = vsel %vm88, %v633, 0
  %637 = vmatprep.subr.bf16.mxu0 0
  %638 = vmatpush1.bf16.msra.mxu0 0
  %639 = vmatprep.subr.bf16.mxu0 0
  %640 = vmatpush1.bf16.msra.mxu0 0
  %641 = vmatprep.subr.bf16.mxu0 0
  %642 = vmatpush1.bf16.msra.mxu0 0
  %643 = vmatprep.subr.bf16.mxu0 0
  %644 = vmatpush1.bf16.msra.mxu0 0
  %645 = vmatprep.subr.bf16.mxu0 0
  %646 = vmatpush1.bf16.msra.mxu0 0
  %647 = vmatprep.subr.bf16.mxu0 0
  %648 = vmatpush1.bf16.msra.mxu0 0
  %649 = vmatprep.subr.bf16.mxu0 0
  %650 = vmatpush1.bf16.msra.mxu0 %v85
  %651 = vmatprep.subr.bf16.mxu0 0
  %652 = vmatpush1.bf16.msra.mxu0 %v84
  %653 = vmatprep.subr.bf16.mxu0 0
  %654 = vmatpush2.bf16.msra.mxu0 0
  %655 = vmatprep.subr.bf16.mxu0 0
  %656 = vmatpush2.bf16.msra.mxu0 0
  %657 = vmatprep.subr.bf16.mxu0 0
  %658 = vmatpush2.bf16.msra.mxu0 0
  %659 = vmatprep.subr.bf16.mxu0 0
  %660 = vmatpush2.bf16.msra.mxu0 0
  %661 = vmatprep.subr.bf16.mxu0 0
  %662 = vmatpush2.bf16.msra.mxu0 0
  %663 = vmatprep.subr.bf16.mxu0 0
  %664 = vmatpush2.bf16.msra.mxu0 0
  %665 = vmatprep.subr.bf16.mxu0 0
  %666 = vmatpush2.bf16.msra.mxu0 0
  %667 = vmatprep.subr.bf16.mxu0 0
  %668 = vmatpush2.bf16.msra.mxu0 0
  %669 = vmatprep.mubr.bf16.mxu0 0
  %670 = vmatmul.mubr.bf16.gmra.mxu0 %v635
  %v671 = vpop.f32.mrf.mxu0
  %v672 = vadd.f32 0.0, %v671
  %v673 = vpop.f32.mrf.mxu0
  %v674 = vpop.f32.mrf.mxu0
  %v675 = vpop.f32.mrf.mxu0
  %676 = vdwg.mxu0
  %v677 = vadd.f32 %v631, %v672
  %v678 = vld [vmem:[#allocation3] sm:$0xff]
  %v679 = vxor.u32 %v677, 2147483648
  %v680 = vmul.f32 %v679, 1.442695
  %v681 = vpow.pop %v680
  %v682 = vadd.f32 %v681, 1.0
  %v683 = vrcp.pop %v682
  %v684 = vmul.f32 1.0, %v683
  %v685 = vtanh.pop %v677
  %687 = vrot.lane.b32.xlu0 %v678, 32
  %v688 = vpop.permute.xlu0 %687
  %v690 = vmul.f32 %v684, %v688
  %692 = vrot.lane.b32.xlu0 %v685, 64
  %v693 = vpop.permute.xlu0 %692
  %v695 = vmul.f32 %v684, %v693
  %697 = vrot.lane.b32.xlu0 %v695, 32
  %v698 = vpop.permute.xlu0 %697
  %v700 = vadd.f32 %v690, %v698
  %v701 = vtanh.pop %v700
  %703 = vrot.lane.b32.xlu0 %v701, 64
  %v704 = vpop.permute.xlu0 %703
  %v706 = vmul.f32 %v684, %v704
  %708 = vrot.lane.b32.xlu0 %v706, 32
  %v709 = vpop.permute.xlu0 %708
  %711 = vst.msk [vmem:[#allocation2] sm:$0xff] %vm88, %v709
  %713 = vrot.lane.b32.xlu0 %v700, 96
  %v714 = vpop.permute.xlu0 %713
  %716 = vst.msk [vmem:[#allocation3] sm:$0xff] %vm88, %v714
  %s717 = scalar_lea.vmem %s4, 24
  %718 = vst.msk [vmem:[%s717] sm:$0xff] %vm88, %v709
  %s719 = scalar_lea.vmem %s44, 32
  %v720 = vld [vmem:[%s719] sm:$0xff]
  %v721 = vld [vmem:[#allocation4] sm:$0xff]
  %v722 = vpack.c.bf16 %v721, %v721
  %v724 = vsel %vm88, %v722, 0
  %726 = vmatprep.subr.bf16.mxu0 0
  %727 = vmatpush1.bf16.msra.mxu0 0
  %728 = vmatprep.subr.bf16.mxu0 0
  %729 = vmatpush1.bf16.msra.mxu0 0
  %730 = vmatprep.subr.bf16.mxu0 0
  %731 = vmatpush1.bf16.msra.mxu0 0
  %732 = vmatprep.subr.bf16.mxu0 0
  %733 = vmatpush1.bf16.msra.mxu0 0
  %734 = vmatprep.subr.bf16.mxu0 0
  %735 = vmatpush1.bf16.msra.mxu0 0
  %736 = vmatprep.subr.bf16.mxu0 0
  %737 = vmatpush1.bf16.msra.mxu0 0
  %738 = vmatprep.subr.bf16.mxu0 0
  %739 = vmatpush1.bf16.msra.mxu0 %v186
  %740 = vmatprep.subr.bf16.mxu0 0
  %741 = vmatpush1.bf16.msra.mxu0 %v185
  %742 = vmatprep.subr.bf16.mxu0 0
  %743 = vmatpush2.bf16.msra.mxu0 0
  %744 = vmatprep.subr.bf16.mxu0 0
  %745 = vmatpush2.bf16.msra.mxu0 0
  %746 = vmatprep.subr.bf16.mxu0 0
  %747 = vmatpush2.bf16.msra.mxu0 0
  %748 = vmatprep.subr.bf16.mxu0 0
  %749 = vmatpush2.bf16.msra.mxu0 0
  %750 = vmatprep.subr.bf16.mxu0 0
  %751 = vmatpush2.bf16.msra.mxu0 0
  %752 = vmatprep.subr.bf16.mxu0 0
  %753 = vmatpush2.bf16.msra.mxu0 0
  %754 = vmatprep.subr.bf16.mxu0 0
  %755 = vmatpush2.bf16.msra.mxu0 0
  %756 = vmatprep.subr.bf16.mxu0 0
  %757 = vmatpush2.bf16.msra.mxu0 0
  %758 = vmatprep.mubr.bf16.mxu0 0
  %759 = vmatmul.mubr.bf16.gmra.mxu0 %v724
  %v760 = vpop.f32.mrf.mxu0
  %v761 = vadd.f32 0.0, %v760
  %v762 = vpop.f32.mrf.mxu0
  %v763 = vpop.f32.mrf.mxu0
  %v764 = vpop.f32.mrf.mxu0
  %765 = vdwg.mxu0
  %v766 = vadd.f32 %v720, %v761
  %v767 = vld [vmem:[#allocation5] sm:$0xff]
  %v768 = vxor.u32 %v766, 2147483648
  %v769 = vmul.f32 %v768, 1.442695
  %v770 = vpow.pop %v769
  %v771 = vadd.f32 %v770, 1.0
  %v772 = vrcp.pop %v771
  %v773 = vmul.f32 1.0, %v772
  %v774 = vtanh.pop %v766
  %776 = vrot.lane.b32.xlu0 %v767, 32
  %v777 = vpop.permute.xlu0 %776
  %v779 = vmul.f32 %v773, %v777
  %781 = vrot.lane.b32.xlu0 %v774, 64
  %v782 = vpop.permute.xlu0 %781
  %v784 = vmul.f32 %v773, %v782
  %786 = vrot.lane.b32.xlu0 %v784, 32
  %v787 = vpop.permute.xlu0 %786
  %v789 = vadd.f32 %v779, %v787
  %v790 = vtanh.pop %v789
  %792 = vrot.lane.b32.xlu0 %v790, 64
  %v793 = vpop.permute.xlu0 %792
  %v795 = vmul.f32 %v773, %v793
  %797 = vrot.lane.b32.xlu0 %v795, 32
  %v798 = vpop.permute.xlu0 %797
  %800 = vst.msk [vmem:[#allocation4] sm:$0xff] %vm88, %v798
  %802 = vrot.lane.b32.xlu0 %v789, 96
  %v803 = vpop.permute.xlu0 %802
  %805 = vst.msk [vmem:[#allocation5] sm:$0xff] %vm88, %v803
  %s806 = scalar_lea.vmem %s52, 32
  %807 = vst.msk [vmem:[%s806] sm:$0xff] %vm88, %v798
  %s808 = scalar_lea.vmem %s0, 32
  %v809 = vld [vmem:[%s808] sm:$0xff]
  %v810 = vld [vmem:[#allocation2] sm:$0xff]
  %v811 = vpack.c.bf16 %v810, %v810
  %v813 = vsel %vm88, %v811, 0
  %815 = vmatprep.subr.bf16.mxu0 0
  %816 = vmatpush1.bf16.msra.mxu0 0
  %817 = vmatprep.subr.bf16.mxu0 0
  %818 = vmatpush1.bf16.msra.mxu0 0
  %819 = vmatprep.subr.bf16.mxu0 0
  %820 = vmatpush1.bf16.msra.mxu0 0
  %821 = vmatprep.subr.bf16.mxu0 0
  %822 = vmatpush1.bf16.msra.mxu0 0
  %823 = vmatprep.subr.bf16.mxu0 0
  %824 = vmatpush1.bf16.msra.mxu0 0
  %825 = vmatprep.subr.bf16.mxu0 0
  %826 = vmatpush1.bf16.msra.mxu0 0
  %827 = vmatprep.subr.bf16.mxu0 0
  %828 = vmatpush1.bf16.msra.mxu0 %v85
  %829 = vmatprep.subr.bf16.mxu0 0
  %830 = vmatpush1.bf16.msra.mxu0 %v84
  %831 = vmatprep.subr.bf16.mxu0 0
  %832 = vmatpush2.bf16.msra.mxu0 0
  %833 = vmatprep.subr.bf16.mxu0 0
  %834 = vmatpush2.bf16.msra.mxu0 0
  %835 = vmatprep.subr.bf16.mxu0 0
  %836 = vmatpush2.bf16.msra.mxu0 0
  %837 = vmatprep.subr.bf16.mxu0 0
  %838 = vmatpush2.bf16.msra.mxu0 0
  %839 = vmatprep.subr.bf16.mxu0 0
  %840 = vmatpush2.bf16.msra.mxu0 0
  %841 = vmatprep.subr.bf16.mxu0 0
  %842 = vmatpush2.bf16.msra.mxu0 0
  %843 = vmatprep.subr.bf16.mxu0 0
  %844 = vmatpush2.bf16.msra.mxu0 0
  %845 = vmatprep.subr.bf16.mxu0 0
  %846 = vmatpush2.bf16.msra.mxu0 0
  %847 = vmatprep.mubr.bf16.mxu0 0
  %848 = vmatmul.mubr.bf16.gmra.mxu0 %v813
  %v849 = vpop.f32.mrf.mxu0
  %v850 = vadd.f32 0.0, %v849
  %v851 = vpop.f32.mrf.mxu0
  %v852 = vpop.f32.mrf.mxu0
  %v853 = vpop.f32.mrf.mxu0
  %854 = vdwg.mxu0
  %v855 = vadd.f32 %v809, %v850
  %v856 = vld [vmem:[#allocation3] sm:$0xff]
  %v857 = vxor.u32 %v855, 2147483648
  %v858 = vmul.f32 %v857, 1.442695
  %v859 = vpow.pop %v858
  %v860 = vadd.f32 %v859, 1.0
  %v861 = vrcp.pop %v860
  %v862 = vmul.f32 1.0, %v861
  %v863 = vtanh.pop %v855
  %865 = vrot.lane.b32.xlu0 %v856, 32
  %v866 = vpop.permute.xlu0 %865
  %v868 = vmul.f32 %v862, %v866
  %870 = vrot.lane.b32.xlu0 %v863, 64
  %v871 = vpop.permute.xlu0 %870
  %v873 = vmul.f32 %v862, %v871
  %875 = vrot.lane.b32.xlu0 %v873, 32
  %v876 = vpop.permute.xlu0 %875
  %v878 = vadd.f32 %v868, %v876
  %v879 = vtanh.pop %v878
  %881 = vrot.lane.b32.xlu0 %v879, 64
  %v882 = vpop.permute.xlu0 %881
  %v884 = vmul.f32 %v862, %v882
  %886 = vrot.lane.b32.xlu0 %v884, 32
  %v887 = vpop.permute.xlu0 %886
  %889 = vst.msk [vmem:[#allocation2] sm:$0xff] %vm88, %v887
  %891 = vrot.lane.b32.xlu0 %v878, 96
  %v892 = vpop.permute.xlu0 %891
  %894 = vst.msk [vmem:[#allocation3] sm:$0xff] %vm88, %v892
  %s895 = scalar_lea.vmem %s4, 32
  %896 = vst.msk [vmem:[%s895] sm:$0xff] %vm88, %v887
  %s897 = scalar_lea.vmem %s44, 24
  %v898 = vld [vmem:[%s897] sm:$0xff]
  %v899 = vld [vmem:[#allocation4] sm:$0xff]
  %v900 = vpack.c.bf16 %v899, %v899
  %v902 = vsel %vm88, %v900, 0
  %904 = vmatprep.subr.bf16.mxu0 0
  %905 = vmatpush1.bf16.msra.mxu0 0
  %906 = vmatprep.subr.bf16.mxu0 0
  %907 = vmatpush1.bf16.msra.mxu0 0
  %908 = vmatprep.subr.bf16.mxu0 0
  %909 = vmatpush1.bf16.msra.mxu0 0
  %910 = vmatprep.subr.bf16.mxu0 0
  %911 = vmatpush1.bf16.msra.mxu0 0
  %912 = vmatprep.subr.bf16.mxu0 0
  %913 = vmatpush1.bf16.msra.mxu0 0
  %914 = vmatprep.subr.bf16.mxu0 0
  %915 = vmatpush1.bf16.msra.mxu0 0
  %916 = vmatprep.subr.bf16.mxu0 0
  %917 = vmatpush1.bf16.msra.mxu0 %v186
  %918 = vmatprep.subr.bf16.mxu0 0
  %919 = vmatpush1.bf16.msra.mxu0 %v185
  %920 = vmatprep.subr.bf16.mxu0 0
  %921 = vmatpush2.bf16.msra.mxu0 0
  %922 = vmatprep.subr.bf16.mxu0 0
  %923 = vmatpush2.bf16.msra.mxu0 0
  %924 = vmatprep.subr.bf16.mxu0 0
  %925 = vmatpush2.bf16.msra.mxu0 0
  %926 = vmatprep.subr.bf16.mxu0 0
  %927 = vmatpush2.bf16.msra.mxu0 0
  %928 = vmatprep.subr.bf16.mxu0 0
  %929 = vmatpush2.bf16.msra.mxu0 0
  %930 = vmatprep.subr.bf16.mxu0 0
  %931 = vmatpush2.bf16.msra.mxu0 0
  %932 = vmatprep.subr.bf16.mxu0 0
  %933 = vmatpush2.bf16.msra.mxu0 0
  %934 = vmatprep.subr.bf16.mxu0 0
  %935 = vmatpush2.bf16.msra.mxu0 0
  %936 = vmatprep.mubr.bf16.mxu0 0
  %937 = vmatmul.mubr.bf16.gmra.mxu0 %v902
  %v938 = vpop.f32.mrf.mxu0
  %v939 = vadd.f32 0.0, %v938
  %v940 = vpop.f32.mrf.mxu0
  %v941 = vpop.f32.mrf.mxu0
  %v942 = vpop.f32.mrf.mxu0
  %943 = vdwg.mxu0
  %v944 = vadd.f32 %v898, %v939
  %v945 = vld [vmem:[#allocation5] sm:$0xff]
  %v946 = vxor.u32 %v944, 2147483648
  %v947 = vmul.f32 %v946, 1.442695
  %v948 = vpow.pop %v947
  %v949 = vadd.f32 %v948, 1.0
  %v950 = vrcp.pop %v949
  %v951 = vmul.f32 1.0, %v950
  %v952 = vtanh.pop %v944
  %954 = vrot.lane.b32.xlu0 %v945, 32
  %v955 = vpop.permute.xlu0 %954
  %v957 = vmul.f32 %v951, %v955
  %959 = vrot.lane.b32.xlu0 %v952, 64
  %v960 = vpop.permute.xlu0 %959
  %v962 = vmul.f32 %v951, %v960
  %964 = vrot.lane.b32.xlu0 %v962, 32
  %v965 = vpop.permute.xlu0 %964
  %v967 = vadd.f32 %v957, %v965
  %v968 = vtanh.pop %v967
  %970 = vrot.lane.b32.xlu0 %v968, 64
  %v971 = vpop.permute.xlu0 %970
  %v973 = vmul.f32 %v951, %v971
  %975 = vrot.lane.b32.xlu0 %v973, 32
  %v976 = vpop.permute.xlu0 %975
  %978 = vst.msk [vmem:[#allocation4] sm:$0xff] %vm88, %v976
  %980 = vrot.lane.b32.xlu0 %v967, 96
  %v981 = vpop.permute.xlu0 %980
  %983 = vst.msk [vmem:[#allocation5] sm:$0xff] %vm88, %v981
  %s984 = scalar_lea.vmem %s52, 24
  %985 = vst.msk [vmem:[%s984] sm:$0xff] %vm88, %v976
  %s986 = scalar_lea.vmem %s0, 40
  %v987 = vld [vmem:[%s986] sm:$0xff]
  %v988 = vld [vmem:[#allocation2] sm:$0xff]
  %v989 = vpack.c.bf16 %v988, %v988
  %v991 = vsel %vm88, %v989, 0
  %993 = vmatprep.subr.bf16.mxu0 0
  %994 = vmatpush1.bf16.msra.mxu0 0
  %995 = vmatprep.subr.bf16.mxu0 0
  %996 = vmatpush1.bf16.msra.mxu0 0
  %997 = vmatprep.subr.bf16.mxu0 0
  %998 = vmatpush1.bf16.msra.mxu0 0
  %999 = vmatprep.subr.bf16.mxu0 0
  %1000 = vmatpush1.bf16.msra.mxu0 0
  %1001 = vmatprep.subr.bf16.mxu0 0
  %1002 = vmatpush1.bf16.msra.mxu0 0
  %1003 = vmatprep.subr.bf16.mxu0 0
  %1004 = vmatpush1.bf16.msra.mxu0 0
  %1005 = vmatprep.subr.bf16.mxu0 0
  %1006 = vmatpush1.bf16.msra.mxu0 %v85
  %1007 = vmatprep.subr.bf16.mxu0 0
  %1008 = vmatpush1.bf16.msra.mxu0 %v84
  %1009 = vmatprep.subr.bf16.mxu0 0
  %1010 = vmatpush2.bf16.msra.mxu0 0
  %1011 = vmatprep.subr.bf16.mxu0 0
  %1012 = vmatpush2.bf16.msra.mxu0 0
  %1013 = vmatprep.subr.bf16.mxu0 0
  %1014 = vmatpush2.bf16.msra.mxu0 0
  %1015 = vmatprep.subr.bf16.mxu0 0
  %1016 = vmatpush2.bf16.msra.mxu0 0
  %1017 = vmatprep.subr.bf16.mxu0 0
  %1018 = vmatpush2.bf16.msra.mxu0 0
  %1019 = vmatprep.subr.bf16.mxu0 0
  %1020 = vmatpush2.bf16.msra.mxu0 0
  %1021 = vmatprep.subr.bf16.mxu0 0
  %1022 = vmatpush2.bf16.msra.mxu0 0
  %1023 = vmatprep.subr.bf16.mxu0 0
  %1024 = vmatpush2.bf16.msra.mxu0 0
  %1025 = vmatprep.mubr.bf16.mxu0 0
  %1026 = vmatmul.mubr.bf16.gmra.mxu0 %v991
  %v1027 = vpop.f32.mrf.mxu0
  %v1028 = vadd.f32 0.0, %v1027
  %v1029 = vpop.f32.mrf.mxu0
  %v1030 = vpop.f32.mrf.mxu0
  %v1031 = vpop.f32.mrf.mxu0
  %1032 = vdwg.mxu0
  %v1033 = vadd.f32 %v987, %v1028
  %v1034 = vld [vmem:[#allocation3] sm:$0xff]
  %v1035 = vxor.u32 %v1033, 2147483648
  %v1036 = vmul.f32 %v1035, 1.442695
  %v1037 = vpow.pop %v1036
  %v1038 = vadd.f32 %v1037, 1.0
  %v1039 = vrcp.pop %v1038
  %v1040 = vmul.f32 1.0, %v1039
  %v1041 = vtanh.pop %v1033
  %1043 = vrot.lane.b32.xlu0 %v1034, 32
  %v1044 = vpop.permute.xlu0 %1043
  %v1046 = vmul.f32 %v1040, %v1044
  %1048 = vrot.lane.b32.xlu0 %v1041, 64
  %v1049 = vpop.permute.xlu0 %1048
  %v1051 = vmul.f32 %v1040, %v1049
  %1053 = vrot.lane.b32.xlu0 %v1051, 32
  %v1054 = vpop.permute.xlu0 %1053
  %v1056 = vadd.f32 %v1046, %v1054
  %v1057 = vtanh.pop %v1056
  %1059 = vrot.lane.b32.xlu0 %v1057, 64
  %v1060 = vpop.permute.xlu0 %1059
  %v1062 = vmul.f32 %v1040, %v1060
  %1064 = vrot.lane.b32.xlu0 %v1062, 32
  %v1065 = vpop.permute.xlu0 %1064
  %1067 = vst.msk [vmem:[#allocation2] sm:$0xff] %vm88, %v1065
  %1069 = vrot.lane.b32.xlu0 %v1056, 96
  %v1070 = vpop.permute.xlu0 %1069
  %1072 = vst.msk [vmem:[#allocation3] sm:$0xff] %vm88, %v1070
  %s1073 = scalar_lea.vmem %s4, 40
  %1074 = vst.msk [vmem:[%s1073] sm:$0xff] %vm88, %v1065
  %s1075 = scalar_lea.vmem %s44, 16
  %v1076 = vld [vmem:[%s1075] sm:$0xff]
  %v1077 = vld [vmem:[#allocation4] sm:$0xff]
  %v1078 = vpack.c.bf16 %v1077, %v1077
  %v1080 = vsel %vm88, %v1078, 0
  %1082 = vmatprep.subr.bf16.mxu0 0
  %1083 = vmatpush1.bf16.msra.mxu0 0
  %1084 = vmatprep.subr.bf16.mxu0 0
  %1085 = vmatpush1.bf16.msra.mxu0 0
  %1086 = vmatprep.subr.bf16.mxu0 0
  %1087 = vmatpush1.bf16.msra.mxu0 0
  %1088 = vmatprep.subr.bf16.mxu0 0
  %1089 = vmatpush1.bf16.msra.mxu0 0
  %1090 = vmatprep.subr.bf16.mxu0 0
  %1091 = vmatpush1.bf16.msra.mxu0 0
  %1092 = vmatprep.subr.bf16.mxu0 0
  %1093 = vmatpush1.bf16.msra.mxu0 0
  %1094 = vmatprep.subr.bf16.mxu0 0
  %1095 = vmatpush1.bf16.msra.mxu0 %v186
  %1096 = vmatprep.subr.bf16.mxu0 0
  %1097 = vmatpush1.bf16.msra.mxu0 %v185
  %1098 = vmatprep.subr.bf16.mxu0 0
  %1099 = vmatpush2.bf16.msra.mxu0 0
  %1100 = vmatprep.subr.bf16.mxu0 0
  %1101 = vmatpush2.bf16.msra.mxu0 0
  %1102 = vmatprep.subr.bf16.mxu0 0
  %1103 = vmatpush2.bf16.msra.mxu0 0
  %1104 = vmatprep.subr.bf16.mxu0 0
  %1105 = vmatpush2.bf16.msra.mxu0 0
  %1106 = vmatprep.subr.bf16.mxu0 0
  %1107 = vmatpush2.bf16.msra.mxu0 0
  %1108 = vmatprep.subr.bf16.mxu0 0
  %1109 = vmatpush2.bf16.msra.mxu0 0
  %1110 = vmatprep.subr.bf16.mxu0 0
  %1111 = vmatpush2.bf16.msra.mxu0 0
  %1112 = vmatprep.subr.bf16.mxu0 0
  %1113 = vmatpush2.bf16.msra.mxu0 0
  %1114 = vmatprep.mubr.bf16.mxu0 0
  %1115 = vmatmul.mubr.bf16.gmra.mxu0 %v1080
  %v1116 = vpop.f32.mrf.mxu0
  %v1117 = vadd.f32 0.0, %v1116
  %v1118 = vpop.f32.mrf.mxu0
  %v1119 = vpop.f32.mrf.mxu0
  %v1120 = vpop.f32.mrf.mxu0
  %1121 = vdwg.mxu0
  %v1122 = vadd.f32 %v1076, %v1117
  %v1123 = vld [vmem:[#allocation5] sm:$0xff]
  %v1124 = vxor.u32 %v1122, 2147483648
  %v1125 = vmul.f32 %v1124, 1.442695
  %v1126 = vpow.pop %v1125
  %v1127 = vadd.f32 %v1126, 1.0
  %v1128 = vrcp.pop %v1127
  %v1129 = vmul.f32 1.0, %v1128
  %v1130 = vtanh.pop %v1122
  %1132 = vrot.lane.b32.xlu0 %v1123, 32
  %v1133 = vpop.permute.xlu0 %1132
  %v1135 = vmul.f32 %v1129, %v1133
  %1137 = vrot.lane.b32.xlu0 %v1130, 64
  %v1138 = vpop.permute.xlu0 %1137
  %v1140 = vmul.f32 %v1129, %v1138
  %1142 = vrot.lane.b32.xlu0 %v1140, 32
  %v1143 = vpop.permute.xlu0 %1142
  %v1145 = vadd.f32 %v1135, %v1143
  %v1146 = vtanh.pop %v1145
  %1148 = vrot.lane.b32.xlu0 %v1146, 64
  %v1149 = vpop.permute.xlu0 %1148
  %v1151 = vmul.f32 %v1129, %v1149
  %1153 = vrot.lane.b32.xlu0 %v1151, 32
  %v1154 = vpop.permute.xlu0 %1153
  %1156 = vst.msk [vmem:[#allocation4] sm:$0xff] %vm88, %v1154
  %1158 = vrot.lane.b32.xlu0 %v1145, 96
  %v1159 = vpop.permute.xlu0 %1158
  %1161 = vst.msk [vmem:[#allocation5] sm:$0xff] %vm88, %v1159
  %s1162 = scalar_lea.vmem %s52, 16
  %1163 = vst.msk [vmem:[%s1162] sm:$0xff] %vm88, %v1154
  %s1164 = scalar_lea.vmem %s0, 48
  %v1165 = vld [vmem:[%s1164] sm:$0xff]
  %v1166 = vld [vmem:[#allocation2] sm:$0xff]
  %v1167 = vpack.c.bf16 %v1166, %v1166
  %v1169 = vsel %vm88, %v1167, 0
  %1171 = vmatprep.subr.bf16.mxu0 0
  %1172 = vmatpush1.bf16.msra.mxu0 0
  %1173 = vmatprep.subr.bf16.mxu0 0
  %1174 = vmatpush1.bf16.msra.mxu0 0
  %1175 = vmatprep.subr.bf16.mxu0 0
  %1176 = vmatpush1.bf16.msra.mxu0 0
  %1177 = vmatprep.subr.bf16.mxu0 0
  %1178 = vmatpush1.bf16.msra.mxu0 0
  %1179 = vmatprep.subr.bf16.mxu0 0
  %1180 = vmatpush1.bf16.msra.mxu0 0
  %1181 = vmatprep.subr.bf16.mxu0 0
  %1182 = vmatpush1.bf16.msra.mxu0 0
  %1183 = vmatprep.subr.bf16.mxu0 0
  %1184 = vmatpush1.bf16.msra.mxu0 %v85
  %1185 = vmatprep.subr.bf16.mxu0 0
  %1186 = vmatpush1.bf16.msra.mxu0 %v84
  %1187 = vmatprep.subr.bf16.mxu0 0
  %1188 = vmatpush2.bf16.msra.mxu0 0
  %1189 = vmatprep.subr.bf16.mxu0 0
  %1190 = vmatpush2.bf16.msra.mxu0 0
  %1191 = vmatprep.subr.bf16.mxu0 0
  %1192 = vmatpush2.bf16.msra.mxu0 0
  %1193 = vmatprep.subr.bf16.mxu0 0
  %1194 = vmatpush2.bf16.msra.mxu0 0
  %1195 = vmatprep.subr.bf16.mxu0 0
  %1196 = vmatpush2.bf16.msra.mxu0 0
  %1197 = vmatprep.subr.bf16.mxu0 0
  %1198 = vmatpush2.bf16.msra.mxu0 0
  %1199 = vmatprep.subr.bf16.mxu0 0
  %1200 = vmatpush2.bf16.msra.mxu0 0
  %1201 = vmatprep.subr.bf16.mxu0 0
  %1202 = vmatpush2.bf16.msra.mxu0 0
  %1203 = vmatprep.mubr.bf16.mxu0 0
  %1204 = vmatmul.mubr.bf16.gmra.mxu0 %v1169
  %v1205 = vpop.f32.mrf.mxu0
  %v1206 = vadd.f32 0.0, %v1205
  %v1207 = vpop.f32.mrf.mxu0
  %v1208 = vpop.f32.mrf.mxu0
  %v1209 = vpop.f32.mrf.mxu0
  %1210 = vdwg.mxu0
  %v1211 = vadd.f32 %v1165, %v1206
  %v1212 = vld [vmem:[#allocation3] sm:$0xff]
  %v1213 = vxor.u32 %v1211, 2147483648
  %v1214 = vmul.f32 %v1213, 1.442695
  %v1215 = vpow.pop %v1214
  %v1216 = vadd.f32 %v1215, 1.0
  %v1217 = vrcp.pop %v1216
  %v1218 = vmul.f32 1.0, %v1217
  %v1219 = vtanh.pop %v1211
  %1221 = vrot.lane.b32.xlu0 %v1212, 32
  %v1222 = vpop.permute.xlu0 %1221
  %v1224 = vmul.f32 %v1218, %v1222
  %1226 = vrot.lane.b32.xlu0 %v1219, 64
  %v1227 = vpop.permute.xlu0 %1226
  %v1229 = vmul.f32 %v1218, %v1227
  %1231 = vrot.lane.b32.xlu0 %v1229, 32
  %v1232 = vpop.permute.xlu0 %1231
  %v1234 = vadd.f32 %v1224, %v1232
  %v1235 = vtanh.pop %v1234
  %1237 = vrot.lane.b32.xlu0 %v1235, 64
  %v1238 = vpop.permute.xlu0 %1237
  %v1240 = vmul.f32 %v1218, %v1238
  %1242 = vrot.lane.b32.xlu0 %v1240, 32
  %v1243 = vpop.permute.xlu0 %1242
  %1245 = vst.msk [vmem:[#allocation2] sm:$0xff] %vm88, %v1243
  %1247 = vrot.lane.b32.xlu0 %v1234, 96
  %v1248 = vpop.permute.xlu0 %1247
  %1250 = vst.msk [vmem:[#allocation3] sm:$0xff] %vm88, %v1248
  %s1251 = scalar_lea.vmem %s4, 48
  %1252 = vst.msk [vmem:[%s1251] sm:$0xff] %vm88, %v1243
  %s1253 = scalar_lea.vmem %s44, 8
  %v1254 = vld [vmem:[%s1253] sm:$0xff]
  %v1255 = vld [vmem:[#allocation4] sm:$0xff]
  %v1256 = vpack.c.bf16 %v1255, %v1255
  %v1258 = vsel %vm88, %v1256, 0
  %1260 = vmatprep.subr.bf16.mxu0 0
  %1261 = vmatpush1.bf16.msra.mxu0 0
  %1262 = vmatprep.subr.bf16.mxu0 0
  %1263 = vmatpush1.bf16.msra.mxu0 0
  %1264 = vmatprep.subr.bf16.mxu0 0
  %1265 = vmatpush1.bf16.msra.mxu0 0
  %1266 = vmatprep.subr.bf16.mxu0 0
  %1267 = vmatpush1.bf16.msra.mxu0 0
  %1268 = vmatprep.subr.bf16.mxu0 0
  %1269 = vmatpush1.bf16.msra.mxu0 0
  %1270 = vmatprep.subr.bf16.mxu0 0
  %1271 = vmatpush1.bf16.msra.mxu0 0
  %1272 = vmatprep.subr.bf16.mxu0 0
  %1273 = vmatpush1.bf16.msra.mxu0 %v186
  %1274 = vmatprep.subr.bf16.mxu0 0
  %1275 = vmatpush1.bf16.msra.mxu0 %v185
  %1276 = vmatprep.subr.bf16.mxu0 0
  %1277 = vmatpush2.bf16.msra.mxu0 0
  %1278 = vmatprep.subr.bf16.mxu0 0
  %1279 = vmatpush2.bf16.msra.mxu0 0
  %1280 = vmatprep.subr.bf16.mxu0 0
  %1281 = vmatpush2.bf16.msra.mxu0 0
  %1282 = vmatprep.subr.bf16.mxu0 0
  %1283 = vmatpush2.bf16.msra.mxu0 0
  %1284 = vmatprep.subr.bf16.mxu0 0
  %1285 = vmatpush2.bf16.msra.mxu0 0
  %1286 = vmatprep.subr.bf16.mxu0 0
  %1287 = vmatpush2.bf16.msra.mxu0 0
  %1288 = vmatprep.subr.bf16.mxu0 0
  %1289 = vmatpush2.bf16.msra.mxu0 0
  %1290 = vmatprep.subr.bf16.mxu0 0
  %1291 = vmatpush2.bf16.msra.mxu0 0
  %1292 = vmatprep.mubr.bf16.mxu0 0
  %1293 = vmatmul.mubr.bf16.gmra.mxu0 %v1258
  %v1294 = vpop.f32.mrf.mxu0
  %v1295 = vadd.f32 0.0, %v1294
  %v1296 = vpop.f32.mrf.mxu0
  %v1297 = vpop.f32.mrf.mxu0
  %v1298 = vpop.f32.mrf.mxu0
  %1299 = vdwg.mxu0
  %v1300 = vadd.f32 %v1254, %v1295
  %v1301 = vld [vmem:[#allocation5] sm:$0xff]
  %v1302 = vxor.u32 %v1300, 2147483648
  %v1303 = vmul.f32 %v1302, 1.442695
  %v1304 = vpow.pop %v1303
  %v1305 = vadd.f32 %v1304, 1.0
  %v1306 = vrcp.pop %v1305
  %v1307 = vmul.f32 1.0, %v1306
  %v1308 = vtanh.pop %v1300
  %1310 = vrot.lane.b32.xlu0 %v1301, 32
  %v1311 = vpop.permute.xlu0 %1310
  %v1313 = vmul.f32 %v1307, %v1311
  %1315 = vrot.lane.b32.xlu0 %v1308, 64
  %v1316 = vpop.permute.xlu0 %1315
  %v1318 = vmul.f32 %v1307, %v1316
  %1320 = vrot.lane.b32.xlu0 %v1318, 32
  %v1321 = vpop.permute.xlu0 %1320
  %v1323 = vadd.f32 %v1313, %v1321
  %v1324 = vtanh.pop %v1323
  %1326 = vrot.lane.b32.xlu0 %v1324, 64
  %v1327 = vpop.permute.xlu0 %1326
  %v1329 = vmul.f32 %v1307, %v1327
  %1331 = vrot.lane.b32.xlu0 %v1329, 32
  %v1332 = vpop.permute.xlu0 %1331
  %1334 = vst.msk [vmem:[#allocation4] sm:$0xff] %vm88, %v1332
  %1336 = vrot.lane.b32.xlu0 %v1323, 96
  %v1337 = vpop.permute.xlu0 %1336
  %1339 = vst.msk [vmem:[#allocation5] sm:$0xff] %vm88, %v1337
  %s1340 = scalar_lea.vmem %s52, 8
  %1341 = vst.msk [vmem:[%s1340] sm:$0xff] %vm88, %v1332
  %s1342 = scalar_lea.vmem %s0, 56
  %v1343 = vld [vmem:[%s1342] sm:$0xff]
  %v1344 = vld [vmem:[#allocation2] sm:$0xff]
  %v1345 = vpack.c.bf16 %v1344, %v1344
  %v1347 = vsel %vm88, %v1345, 0
  %1349 = vmatprep.subr.bf16.mxu0 0
  %1350 = vmatpush1.bf16.msra.mxu0 0
  %1351 = vmatprep.subr.bf16.mxu0 0
  %1352 = vmatpush1.bf16.msra.mxu0 0
  %1353 = vmatprep.subr.bf16.mxu0 0
  %1354 = vmatpush1.bf16.msra.mxu0 0
  %1355 = vmatprep.subr.bf16.mxu0 0
  %1356 = vmatpush1.bf16.msra.mxu0 0
  %1357 = vmatprep.subr.bf16.mxu0 0
  %1358 = vmatpush1.bf16.msra.mxu0 0
  %1359 = vmatprep.subr.bf16.mxu0 0
  %1360 = vmatpush1.bf16.msra.mxu0 0
  %1361 = vmatprep.subr.bf16.mxu0 0
  %1362 = vmatpush1.bf16.msra.mxu0 %v85
  %1363 = vmatprep.subr.bf16.mxu0 0
  %1364 = vmatpush1.bf16.msra.mxu0 %v84
  %1365 = vmatprep.subr.bf16.mxu0 0
  %1366 = vmatpush2.bf16.msra.mxu0 0
  %1367 = vmatprep.subr.bf16.mxu0 0
  %1368 = vmatpush2.bf16.msra.mxu0 0
  %1369 = vmatprep.subr.bf16.mxu0 0
  %1370 = vmatpush2.bf16.msra.mxu0 0
  %1371 = vmatprep.subr.bf16.mxu0 0
  %1372 = vmatpush2.bf16.msra.mxu0 0
  %1373 = vmatprep.subr.bf16.mxu0 0
  %1374 = vmatpush2.bf16.msra.mxu0 0
  %1375 = vmatprep.subr.bf16.mxu0 0
  %1376 = vmatpush2.bf16.msra.mxu0 0
  %1377 = vmatprep.subr.bf16.mxu0 0
  %1378 = vmatpush2.bf16.msra.mxu0 0
  %1379 = vmatprep.subr.bf16.mxu0 0
  %1380 = vmatpush2.bf16.msra.mxu0 0
  %1381 = vmatprep.mubr.bf16.mxu0 0
  %1382 = vmatmul.mubr.bf16.gmra.mxu0 %v1347
  %v1383 = vpop.f32.mrf.mxu0
  %v1384 = vadd.f32 0.0, %v1383
  %v1385 = vpop.f32.mrf.mxu0
  %v1386 = vpop.f32.mrf.mxu0
  %v1387 = vpop.f32.mrf.mxu0
  %1388 = vdwg.mxu0
  %v1389 = vadd.f32 %v1343, %v1384
  %v1390 = vld [vmem:[#allocation3] sm:$0xff]
  %v1391 = vxor.u32 %v1389, 2147483648
  %v1392 = vmul.f32 %v1391, 1.442695
  %v1393 = vpow.pop %v1392
  %v1394 = vadd.f32 %v1393, 1.0
  %v1395 = vrcp.pop %v1394
  %v1396 = vmul.f32 1.0, %v1395
  %v1397 = vtanh.pop %v1389
  %1399 = vrot.lane.b32.xlu0 %v1390, 32
  %v1400 = vpop.permute.xlu0 %1399
  %v1402 = vmul.f32 %v1396, %v1400
  %1404 = vrot.lane.b32.xlu0 %v1397, 64
  %v1405 = vpop.permute.xlu0 %1404
  %v1407 = vmul.f32 %v1396, %v1405
  %1409 = vrot.lane.b32.xlu0 %v1407, 32
  %v1410 = vpop.permute.xlu0 %1409
  %v1412 = vadd.f32 %v1402, %v1410
  %v1413 = vtanh.pop %v1412
  %1415 = vrot.lane.b32.xlu0 %v1413, 64
  %v1416 = vpop.permute.xlu0 %1415
  %v1418 = vmul.f32 %v1396, %v1416
  %1420 = vrot.lane.b32.xlu0 %v1418, 32
  %v1421 = vpop.permute.xlu0 %1420
  %1423 = vst.msk [vmem:[#allocation2] sm:$0xff] %vm88, %v1421
  %1425 = vrot.lane.b32.xlu0 %v1412, 96
  %v1426 = vpop.permute.xlu0 %1425
  %1428 = vst.msk [vmem:[#allocation3] sm:$0xff] %vm88, %v1426
  %s1429 = scalar_lea.vmem %s4, 56
  %1430 = vst.msk [vmem:[%s1429] sm:$0xff] %vm88, %v1421
  %v1431 = vld [vmem:[%s44] sm:$0xff]
  %v1432 = vld [vmem:[#allocation4] sm:$0xff]
  %v1433 = vpack.c.bf16 %v1432, %v1432
  %v1435 = vsel %vm88, %v1433, 0
  %1437 = vmatprep.subr.bf16.mxu0 0
  %1438 = vmatpush1.bf16.msra.mxu0 0
  %1439 = vmatprep.subr.bf16.mxu0 0
  %1440 = vmatpush1.bf16.msra.mxu0 0
  %1441 = vmatprep.subr.bf16.mxu0 0
  %1442 = vmatpush1.bf16.msra.mxu0 0
  %1443 = vmatprep.subr.bf16.mxu0 0
  %1444 = vmatpush1.bf16.msra.mxu0 0
  %1445 = vmatprep.subr.bf16.mxu0 0
  %1446 = vmatpush1.bf16.msra.mxu0 0
  %1447 = vmatprep.subr.bf16.mxu0 0
  %1448 = vmatpush1.bf16.msra.mxu0 0
  %1449 = vmatprep.subr.bf16.mxu0 0
  %1450 = vmatpush1.bf16.msra.mxu0 %v186
  %1451 = vmatprep.subr.bf16.mxu0 0
  %1452 = vmatpush1.bf16.msra.mxu0 %v185
  %1453 = vmatprep.subr.bf16.mxu0 0
  %1454 = vmatpush2.bf16.msra.mxu0 0
  %1455 = vmatprep.subr.bf16.mxu0 0
  %1456 = vmatpush2.bf16.msra.mxu0 0
  %1457 = vmatprep.subr.bf16.mxu0 0
  %1458 = vmatpush2.bf16.msra.mxu0 0
  %1459 = vmatprep.subr.bf16.mxu0 0
  %1460 = vmatpush2.bf16.msra.mxu0 0
  %1461 = vmatprep.subr.bf16.mxu0 0
  %1462 = vmatpush2.bf16.msra.mxu0 0
  %1463 = vmatprep.subr.bf16.mxu0 0
  %1464 = vmatpush2.bf16.msra.mxu0 0
  %1465 = vmatprep.subr.bf16.mxu0 0
  %1466 = vmatpush2.bf16.msra.mxu0 0
  %1467 = vmatprep.subr.bf16.mxu0 0
  %1468 = vmatpush2.bf16.msra.mxu0 0
  %1469 = vmatprep.mubr.bf16.mxu0 0
  %1470 = vmatmul.mubr.bf16.gmra.mxu0 %v1435
  %v1471 = vpop.f32.mrf.mxu0
  %v1472 = vadd.f32 0.0, %v1471
  %v1473 = vpop.f32.mrf.mxu0
  %v1474 = vpop.f32.mrf.mxu0
  %v1475 = vpop.f32.mrf.mxu0
  %1476 = vdwg.mxu0
  %v1477 = vadd.f32 %v1431, %v1472
  %v1478 = vld [vmem:[#allocation5] sm:$0xff]
  %v1479 = vxor.u32 %v1477, 2147483648
  %v1480 = vmul.f32 %v1479, 1.442695
  %v1481 = vpow.pop %v1480
  %v1482 = vadd.f32 %v1481, 1.0
  %v1483 = vrcp.pop %v1482
  %v1484 = vmul.f32 1.0, %v1483
  %v1485 = vtanh.pop %v1477
  %1487 = vrot.lane.b32.xlu0 %v1478, 32
  %v1488 = vpop.permute.xlu0 %1487
  %v1490 = vmul.f32 %v1484, %v1488
  %1492 = vrot.lane.b32.xlu0 %v1485, 64
  %v1493 = vpop.permute.xlu0 %1492
  %v1495 = vmul.f32 %v1484, %v1493
  %1497 = vrot.lane.b32.xlu0 %v1495, 32
  %v1498 = vpop.permute.xlu0 %1497
  %v1500 = vadd.f32 %v1490, %v1498
  %v1501 = vtanh.pop %v1500
  %1503 = vrot.lane.b32.xlu0 %v1501, 64
  %v1504 = vpop.permute.xlu0 %1503
  %v1506 = vmul.f32 %v1484, %v1504
  %1508 = vrot.lane.b32.xlu0 %v1506, 32
  %v1509 = vpop.permute.xlu0 %1508
  %1511 = vst.msk [vmem:[#allocation4] sm:$0xff] %vm88, %v1509
  %1513 = vrot.lane.b32.xlu0 %v1500, 96
  %v1514 = vpop.permute.xlu0 %1513
  %1516 = vst.msk [vmem:[#allocation5] sm:$0xff] %vm88, %v1514
  %1517 = vst.msk [vmem:[%s52] sm:$0xff] %vm88, %v1509
  %s1518 = ssub.s32 0, 0
  %s1519 = smul.u32 8, %s1518
  %p1520 = scmp.lt.s32.totalorder %s1519, 7
  %s1521 = scalar_select %p1520, %s1519, 7
  %s1522 = smul.addr %s1521, 8
  %s1523 = scalar_lea.vmem %s5, %s1522
  // Predicated region
  $region22: #{lstm_forward.6} parent=0 // pred_check
    _
  $region23: #{lstm_forward.6} parent=0 // pred_check_branch
    %1525 = sbr.rel (0) target = $region25
  $region24: #{lstm_forward.6} parent=0 // pred_region
    _
  $region25: #{lstm_forward.6} parent=0 // pred_fallthru
    _
  // Predicated region
  $region26: #{lstm_forward.6} parent=0 // pred_check
    _
  $region27: #{lstm_forward.6} parent=0 // pred_check_branch
    %1527 = sbr.rel (0) target = $region29
  $region28: #{lstm_forward.6} parent=0 // pred_region
    %s1528 = ssub.s32 0, 0
    %s1529 = smul.u32 8, %s1528
  $region29: #{lstm_forward.6} parent=0 // pred_fallthru
    _
  // Predicated region
  $region30: #{lstm_forward.6} parent=0 // pred_check
    _
  $region31: #{lstm_forward.6} parent=0 // pred_check_branch
    %1531 = sbr.rel (0) target = $region33
  $region32: #{lstm_forward.6} parent=0 // pred_region
    _
  $region33: #{lstm_forward.6} parent=0 // pred_fallthru
    _
  // Predicated region
  $region34: #{lstm_forward.6} parent=0 // pred_check
    _
  $region35: #{lstm_forward.6} parent=0 // pred_check_branch
    %1533 = sbr.rel (0) target = $region37
  $region36: #{lstm_forward.6} parent=0 // pred_region
    %s1534 = ssub.s32 0, 0
    %s1535 = smul.u32 8, %s1534
    %p1536 = scmp.lt.s32.totalorder %s1535, 7
    %s1537 = scalar_select %p1536, %s1535, 7
    %s1538 = smul.addr %s1537, 8
    %s1539 = scalar_lea.vmem %s5, %s1538
  $region37: #{lstm_forward.6} parent=0 // pred_fallthru
    _

</llo_original>
